<compile_context>
chip_gen: v5e
topology: v5e:2x2
jax: 0.10.0
libtpu: 0.0.40
codegen_flags: <defaults>
</compile_context>

<pallas_src>
import functools

import numpy as np
import jax
import jax.numpy as jnp
from jax.experimental import pallas as pl
from jax.experimental.pallas import tpu as pltpu


def _upsample_conv_kernel(w_ref, b_ref, x_ref, ru_ref, cu_ref, o_ref, *,
                          win, th_in):
    """One (batch, output-row-tile) step of nearest-x2 upsample + conv3x3.

    w_ref : [C*3*3*C] f32 SMEM, layout ((co*3 + ky)*3 + kx)*C + ci
    b_ref : [C]       f32 SMEM
    x_ref : [1, C, H, W]           per-batch-resident input (VMEM)
    ru_ref: [1, 3, TH2, win] bf16  row operator (upsample + ky shift + pad +
                                   tile-row select), window-relative indices
    cu_ref: [3, W, W2]       bf16  column operator (upsample + kx shift + pad)
    o_ref : [1, C, TH2, W2]        output tile (NCHW)
    """
    _, C, H, W = x_ref.shape
    _, _, TH2, W2 = o_ref.shape

    # Input-row window actually consumed by this output tile (kills the
    # O(n_row_tiles) recompute of the column stage / channel mix).
    r = pl.program_id(1)
    start = jnp.maximum(jnp.minimum(r * th_in - 1, H - win), 0)

    # Only arrays held across the co loop: the C windowed input planes.
    xwin = [x_ref[0, ci, pl.ds(start, win), :].astype(jnp.float32)
            for ci in range(C)]

    for co in range(C):   # per-iteration temporaries die at the end of body
        acc = None
        for ky in range(3):
            colout = None
            for kx in range(3):
                # Channel mix at ORIGINAL width W (VPU scalar-broadcast FMAs;
                # weights are SMEM scalars via scalar prefetch).
                base = ((co * 3 + ky) * 3 + kx) * C
                mixed = w_ref[base] * xwin[0]
                for ci in range(1, C):
                    mixed = mixed + w_ref[base + ci] * xwin[ci]
                # Column stage (MXU, bf16 x bf16 -> f32 accumulate): nearest
                # upsample along W + kx shift + zero pad as one 0/1 matmul.
                part = jnp.dot(mixed.astype(jnp.bfloat16), cu_ref[kx],
                               preferred_element_type=jnp.float32)
                colout = part if colout is None else colout + part
            # Row stage (MXU): nearest upsample along H + ky shift + pad and
            # selection of exactly this tile's output rows.
            rows = jnp.dot(ru_ref[0, ky], colout.astype(jnp.bfloat16),
                           preferred_element_type=jnp.float32)
            acc = rows if acc is None else acc + rows
        o_ref[0, co] = (acc + b_ref[co]).astype(o_ref.dtype)
    # TODO(synk): fuse the per-tap dots into one (3*win,3W)@(3W,W2) and one
    # (TH2,3*win)@(3*win,W2) per channel once in-kernel unaligned concatenate
    # is worth the lowering risk, and switch to a roll/interleave-based true
    # upsample for very large H, W where the O(H*W*(H+W)) operator matmuls
    # become MXU-bound.


def _build_row_operator(H, tile_h2, win, n_tiles):
    """RU[r, ky, y, i] = 1 iff output row r*tile_h2+y, tap ky reads
    window-relative input row i of tile r's input window (0 where the tap
    hits the zero padding)."""
    H2 = 2 * H
    th_in = tile_h2 // 2
    ru = np.zeros((n_tiles, 3, tile_h2, win), dtype=np.float32)
    for r in range(n_tiles):
        start = min(max(r * th_in - 1, 0), H - win)
        for ky in range(3):
            for y in range(tile_h2):
                u = r * tile_h2 + y + ky - 1          # padded upsampled row
                if 0 <= u < H2:
                    ru[r, ky, y, u // 2 - start] = 1.0
    return jnp.asarray(ru, dtype=jnp.bfloat16)        # 0/1: exact in bf16


def _build_col_operator(W):
    """CU[kx, j, X] = 1 iff output col X, tap kx reads input col j."""
    W2 = 2 * W
    cu = np.zeros((3, W, W2), dtype=np.float32)
    for kx in range(3):
        for X in range(W2):
            u = X + kx - 1                            # padded upsampled col
            if 0 <= u < W2:
                cu[kx, u // 2, X] = 1.0
    return jnp.asarray(cu, dtype=jnp.bfloat16)


def _footprint_bytes(C, H, W, tile_h2, dtype_bytes):
    """Rough VMEM need: double-buffered pipeline blocks + kernel temporaries."""
    H2, W2 = 2 * H, 2 * W
    win = H if tile_h2 == H2 else tile_h2 // 2 + 2
    blocks = (C * H * W * dtype_bytes             # per-batch input block
              + 3 * tile_h2 * win * 2             # RU tile (bf16)
              + 3 * W * W2 * 2                    # CU (bf16)
              + C * tile_h2 * W2 * dtype_bytes)   # output tile
    temps = (C * win * W * 4                      # xwin planes (f32)
             + 3 * win * W2 * 4                   # column-stage partials
             + 2 * tile_h2 * W2 * 4)              # row-stage accumulator
    return 2 * blocks + temps                     # 2x: double buffering


def _choose_tile_h2(C, H, W, dtype_bytes, budget):
    """Largest legal output-row tile whose blocks fit the VMEM budget
    (prefer no tiling at all: no per-step grid overhead)."""
    H2 = 2 * H
    cands = [H2] + sorted(
        (d for d in range(8, H2, 8) if H2 % d == 0 and d + 4 <= H2),
        reverse=True)
    for t in cands:
        if _footprint_bytes(C, H, W, t, dtype_bytes) <= budget:
            return t
    # TODO(synk): nothing fits -- would also need to tile x over H (halo) and
    # CU over W2; fall back to the smallest legal row tile.
    return cands[-1]


def upsample_forward(x_nchw, w_oihw, bias, *, tile_h2=None):
    """UpSample.forward: conv3x3_same(nearest_upsample_x2(x)), OIHW weights."""
    B, C, H, W = x_nchw.shape
    H2, W2 = 2 * H, 2 * W
    dtype_bytes = jnp.dtype(x_nchw.dtype).itemsize

    # VMEM capacity (v7x-safe 64 MiB fallback if the query is unavailable).
    try:
        vmem_cap = int(getattr(pltpu.get_tpu_info(), "vmem_capacity_bytes",
                               64 << 20))
    except Exception:
        vmem_cap = 64 << 20

    if tile_h2 is None:
        tile_h2 = _choose_tile_h2(C, H, W, dtype_bytes, int(0.7 * vmem_cap))
    assert H2 % tile_h2 == 0, (H2, tile_h2)
    assert tile_h2 == H2 or (tile_h2 % 8 == 0 and tile_h2 + 4 <= H2), tile_h2
    n_row_tiles = H2 // tile_h2
    win = H if n_row_tiles == 1 else tile_h2 // 2 + 2
    th_in = tile_h2 // 2

    # Constant 0/1 operators folding nearest-upsample, the 3x3 tap shifts and
    # the "same" zero padding (bf16, exact, resident in VMEM).
    ru = _build_row_operator(H, tile_h2, win, n_row_tiles)  # [T,3,tile_h2,win]
    cu = _build_col_operator(W)                             # [3, W, W2]

    # Conv parameters as flat 32-bit scalars (scalar-prefetched into SMEM).
    w_flat = jnp.transpose(w_oihw, (0, 2, 3, 1)).reshape(-1).astype(jnp.float32)
    b_flat = bias.astype(jnp.float32)

    footprint = _footprint_bytes(C, H, W, tile_h2, dtype_bytes)
    macs = (9 * C * C * win * W              # channel mix (VPU FMAs)
            + 9 * C * win * W * W2           # column-operator matmuls
            + 3 * C * tile_h2 * win * W2)    # row-operator matmuls
    cost = pl.CostEstimate(
        flops=2 * B * n_row_tiles * macs,
        transcendentals=0,
        bytes_accessed=int(B * C * (H * W + H2 * W2) * dtype_bytes
                           + B * n_row_tiles
                           * (3 * tile_h2 * win + 3 * W * W2) * 2))

    kernel = functools.partial(_upsample_conv_kernel, win=win, th_in=th_in)
    out = pl.pallas_call(
        kernel,
        out_shape=jax.ShapeDtypeStruct((B, C, H2, W2), x_nchw.dtype),
        grid_spec=pltpu.PrefetchScalarGridSpec(
            num_scalar_prefetch=2,
            grid=(B, n_row_tiles),
            in_specs=[
                # Per-batch resident input; only the needed row window is read
                # in-kernel (pl.ds), so row tiles do no redundant compute.
                pl.BlockSpec((1, C, H, W),
                             lambda b, r, wref, bref: (b, 0, 0, 0)),
                pl.BlockSpec((1, 3, tile_h2, win),
                             lambda b, r, wref, bref: (r, 0, 0, 0)),
                pl.BlockSpec((3, W, W2),
                             lambda b, r, wref, bref: (0, 0, 0)),
            ],
            out_specs=pl.BlockSpec((1, C, tile_h2, W2),
                                   lambda b, r, wref, bref: (b, 0, r, 0)),
        ),
        compiler_params=pltpu.CompilerParams(
            # Disjoint output blocks, no carried accumulator: both axes can be
            # split across v7x's two TensorCores.
            dimension_semantics=("parallel", "parallel"),
            vmem_limit_bytes=int(min(vmem_cap, max(2 * footprint, 32 << 20))),
        ),
        cost_estimate=cost,
    )(w_flat, b_flat, x_nchw, ru, cu)
    # TODO(synk): for W2 < 128, present a lane-dense ((H2*W2)//128, 128) output
    # view so the stores are unmasked full-lane vst.
    return out


if __name__ == "__main__":
    key = jax.random.PRNGKey(0)
    k_x, k_w, k_b = jax.random.split(key, 3)

    B, C, H, W = 2, 4, 16, 16
    x = jax.random.normal(k_x, (B, C, H, W), dtype=jnp.float32)

    # Same shapes / init style as nn.Conv2d(C, C, kernel_size=3, padding=1).
    fan_in = C * 3 * 3
    bound = 1.0 / (fan_in ** 0.5)
    w_oihw = jax.random.uniform(k_w, (C, C, 3, 3), jnp.float32, -bound, bound)
    bias = jax.random.uniform(k_b, (C,), jnp.float32, -bound, bound)

    # Pure-JAX reference with exact PyTorch semantics (f32 end to end).
    x_up = jnp.repeat(jnp.repeat(x, 2, axis=2), 2, axis=3)
    ref = jax.lax.conv_general_dilated(
        x_up, w_oihw, window_strides=(1, 1), padding=((1, 1), (1, 1)),
        dimension_numbers=("NCHW", "OIHW", "NCHW"),
    ) + bias[None, :, None, None]

    # (1) auto tiling: small image -> single row tile, no per-step overhead.
    out_auto = jax.block_until_ready(jax.jit(upsample_forward)(x, w_oihw, bias))
    # (2) forced row tiling: exercises the windowed-input (halo) path.
    out_tiled = jax.block_until_ready(
        jax.jit(functools.partial(upsample_forward, tile_h2=16))(x, w_oihw, bias))

    # bf16 MXU operands with f32 accumulation: expect ~1e-2-level rounding on
    # the data path (the 0/1 operators themselves are exact in bf16).
    for out in (out_auto, out_tiled):
        assert out.shape == (B, C, 2 * H, 2 * W), out.shape
        max_err = float(jnp.max(jnp.abs(out - ref)))
        assert jnp.allclose(out, ref, atol=3e-2, rtol=3e-2), max_err
    print("KERNEL_OK")
</pallas_src>

<mosaic_0001>
module attributes {stable_mosaic.version = 11 : i64} {
  func.func @_upsample_conv_kernel(%arg0: i32, %arg1: i32, %arg2: memref<144xf32, #tpu.memory_space<smem>>, %arg3: memref<4xf32, #tpu.memory_space<smem>>, %arg4: memref<1x4x16x16xf32, #tpu.memory_space<vmem>>, %arg5: memref<1x3x32x16xbf16, #tpu.memory_space<vmem>>, %arg6: memref<3x16x32xbf16, #tpu.memory_space<vmem>>, %arg7: memref<1x4x32x32xf32, #tpu.memory_space<vmem>>) attributes {dimension_semantics = [#tpu.dimension_semantics<parallel>, #tpu.dimension_semantics<parallel>], iteration_bounds = array<i64: 2, 1>, scalar_prefetch = 2 : i64, scratch_operands = 0 : i64, tpu.core_type = #tpu.core_type<tc>, window_params = [{transform_indices = @transform_0, window_bounds = array<i64: 1, 4, 16, 16>}, {transform_indices = @transform_1, window_bounds = array<i64: 1, 3, 32, 16>}, {pipeline_mode = #tpu.pipeline_mode<synchronous>, transform_indices = @transform_2, window_bounds = array<i64: 3, 16, 32>}, {transform_indices = @transform_3, window_bounds = array<i64: 1, 4, 32, 32>}]} {
    %c16_i32 = arith.constant 16 : i32
    %0 = arith.muli %arg1, %c16_i32 : i32
    %c1_i32 = arith.constant 1 : i32
    %1 = arith.subi %0, %c1_i32 : i32
    %c0_i32 = arith.constant 0 : i32
    %2 = arith.minsi %1, %c0_i32 : i32
    %c0_i32_0 = arith.constant 0 : i32
    %3 = arith.maxsi %2, %c0_i32_0 : i32
    %c0 = arith.constant 0 : index
    %c0_1 = arith.constant 0 : index
    %4 = arith.index_cast %3 : i32 to index
    %c0_2 = arith.constant 0 : index
    %5 = vector.load %arg4[%c0, %c0_1, %4, %c0_2] : memref<1x4x16x16xf32, #tpu.memory_space<vmem>>, vector<1x1x16x16xf32>
    %6 = vector.shape_cast %5 : vector<1x1x16x16xf32> to vector<16x16xf32>
    %c0_3 = arith.constant 0 : index
    %c1 = arith.constant 1 : index
    %7 = arith.index_cast %3 : i32 to index
    %c0_4 = arith.constant 0 : index
    %8 = vector.load %arg4[%c0_3, %c1, %7, %c0_4] : memref<1x4x16x16xf32, #tpu.memory_space<vmem>>, vector<1x1x16x16xf32>
    %9 = vector.shape_cast %8 : vector<1x1x16x16xf32> to vector<16x16xf32>
    %c0_5 = arith.constant 0 : index
    %c2 = arith.constant 2 : index
    %10 = arith.index_cast %3 : i32 to index
    %c0_6 = arith.constant 0 : index
    %11 = vector.load %arg4[%c0_5, %c2, %10, %c0_6] : memref<1x4x16x16xf32, #tpu.memory_space<vmem>>, vector<1x1x16x16xf32>
    %12 = vector.shape_cast %11 : vector<1x1x16x16xf32> to vector<16x16xf32>
    %c0_7 = arith.constant 0 : index
    %c3 = arith.constant 3 : index
    %13 = arith.index_cast %3 : i32 to index
    %c0_8 = arith.constant 0 : index
    %14 = vector.load %arg4[%c0_7, %c3, %13, %c0_8] : memref<1x4x16x16xf32, #tpu.memory_space<vmem>>, vector<1x1x16x16xf32>
    %15 = vector.shape_cast %14 : vector<1x1x16x16xf32> to vector<16x16xf32>
    %c0_9 = arith.constant 0 : index
    %16 = memref.load %arg2[%c0_9] : memref<144xf32, #tpu.memory_space<smem>>
    %17 = vector.broadcast %16 : f32 to vector<16x16xf32>
    %18 = arith.mulf %17, %6 : vector<16x16xf32>
    %c1_10 = arith.constant 1 : index
    %19 = memref.load %arg2[%c1_10] : memref<144xf32, #tpu.memory_space<smem>>
    %20 = vector.broadcast %19 : f32 to vector<16x16xf32>
    %21 = arith.mulf %20, %9 : vector<16x16xf32>
    %22 = arith.addf %18, %21 : vector<16x16xf32>
    %c2_11 = arith.constant 2 : index
    %23 = memref.load %arg2[%c2_11] : memref<144xf32, #tpu.memory_space<smem>>
    %24 = vector.broadcast %23 : f32 to vector<16x16xf32>
    %25 = arith.mulf %24, %12 : vector<16x16xf32>
    %26 = arith.addf %22, %25 : vector<16x16xf32>
    %c3_12 = arith.constant 3 : index
    %27 = memref.load %arg2[%c3_12] : memref<144xf32, #tpu.memory_space<smem>>
    %28 = vector.broadcast %27 : f32 to vector<16x16xf32>
    %29 = arith.mulf %28, %15 : vector<16x16xf32>
    %30 = arith.addf %26, %29 : vector<16x16xf32>
    %31 = arith.truncf %30 : vector<16x16xf32> to vector<16x16xbf16>
    %c0_13 = arith.constant 0 : index
    %c0_14 = arith.constant 0 : index
    %c0_15 = arith.constant 0 : index
    %32 = vector.load %arg6[%c0_13, %c0_14, %c0_15] : memref<3x16x32xbf16, #tpu.memory_space<vmem>>, vector<1x16x32xbf16>
    %33 = vector.shape_cast %32 : vector<1x16x32xbf16> to vector<16x32xbf16>
    %cst = arith.constant dense<0.000000e+00> : vector<16x32xf32>
    %34 = tpu.matmul %31, %33, %cst {dimension_numbers = #tpu.dot_dimension_numbers<[1], [0], [0], [1], [0, 0, 1, 1], [], []>} : vector<16x16xbf16>, vector<16x32xbf16>, vector<16x32xf32> -> vector<16x32xf32>
    %c4 = arith.constant 4 : index
    %35 = memref.load %arg2[%c4] : memref<144xf32, #tpu.memory_space<smem>>
    %36 = vector.broadcast %35 : f32 to vector<16x16xf32>
    %37 = arith.mulf %36, %6 : vector<16x16xf32>
    %c5 = arith.constant 5 : index
    %38 = memref.load %arg2[%c5] : memref<144xf32, #tpu.memory_space<smem>>
    %39 = vector.broadcast %38 : f32 to vector<16x16xf32>
    %40 = arith.mulf %39, %9 : vector<16x16xf32>
    %41 = arith.addf %37, %40 : vector<16x16xf32>
    %c6 = arith.constant 6 : index
    %42 = memref.load %arg2[%c6] : memref<144xf32, #tpu.memory_space<smem>>
    %43 = vector.broadcast %42 : f32 to vector<16x16xf32>
    %44 = arith.mulf %43, %12 : vector<16x16xf32>
    %45 = arith.addf %41, %44 : vector<16x16xf32>
    %c7 = arith.constant 7 : index
    %46 = memref.load %arg2[%c7] : memref<144xf32, #tpu.memory_space<smem>>
    %47 = vector.broadcast %46 : f32 to vector<16x16xf32>
    %48 = arith.mulf %47, %15 : vector<16x16xf32>
    %49 = arith.addf %45, %48 : vector<16x16xf32>
    %50 = arith.truncf %49 : vector<16x16xf32> to vector<16x16xbf16>
    %c1_16 = arith.constant 1 : index
    %c0_17 = arith.constant 0 : index
    %c0_18 = arith.constant 0 : index
    %51 = vector.load %arg6[%c1_16, %c0_17, %c0_18] : memref<3x16x32xbf16, #tpu.memory_space<vmem>>, vector<1x16x32xbf16>
    %52 = vector.shape_cast %51 : vector<1x16x32xbf16> to vector<16x32xbf16>
    %cst_19 = arith.constant dense<0.000000e+00> : vector<16x32xf32>
    %53 = tpu.matmul %50, %52, %cst_19 {dimension_numbers = #tpu.dot_dimension_numbers<[1], [0], [0], [1], [0, 0, 1, 1], [], []>} : vector<16x16xbf16>, vector<16x32xbf16>, vector<16x32xf32> -> vector<16x32xf32>
    %54 = arith.addf %34, %53 : vector<16x32xf32>
    %c8 = arith.constant 8 : index
    %55 = memref.load %arg2[%c8] : memref<144xf32, #tpu.memory_space<smem>>
    %56 = vector.broadcast %55 : f32 to vector<16x16xf32>
    %57 = arith.mulf %56, %6 : vector<16x16xf32>
    %c9 = arith.constant 9 : index
    %58 = memref.load %arg2[%c9] : memref<144xf32, #tpu.memory_space<smem>>
    %59 = vector.broadcast %58 : f32 to vector<16x16xf32>
    %60 = arith.mulf %59, %9 : vector<16x16xf32>
    %61 = arith.addf %57, %60 : vector<16x16xf32>
    %c10 = arith.constant 10 : index
    %62 = memref.load %arg2[%c10] : memref<144xf32, #tpu.memory_space<smem>>
    %63 = vector.broadcast %62 : f32 to vector<16x16xf32>
    %64 = arith.mulf %63, %12 : vector<16x16xf32>
    %65 = arith.addf %61, %64 : vector<16x16xf32>
    %c11 = arith.constant 11 : index
    %66 = memref.load %arg2[%c11] : memref<144xf32, #tpu.memory_space<smem>>
    %67 = vector.broadcast %66 : f32 to vector<16x16xf32>
    %68 = arith.mulf %67, %15 : vector<16x16xf32>
    %69 = arith.addf %65, %68 : vector<16x16xf32>
    %70 = arith.truncf %69 : vector<16x16xf32> to vector<16x16xbf16>
    %c2_20 = arith.constant 2 : index
    %c0_21 = arith.constant 0 : index
    %c0_22 = arith.constant 0 : index
    %71 = vector.load %arg6[%c2_20, %c0_21, %c0_22] : memref<3x16x32xbf16, #tpu.memory_space<vmem>>, vector<1x16x32xbf16>
    %72 = vector.shape_cast %71 : vector<1x16x32xbf16> to vector<16x32xbf16>
    %cst_23 = arith.constant dense<0.000000e+00> : vector<16x32xf32>
    %73 = tpu.matmul %70, %72, %cst_23 {dimension_numbers = #tpu.dot_dimension_numbers<[1], [0], [0], [1], [0, 0, 1, 1], [], []>} : vector<16x16xbf16>, vector<16x32xbf16>, vector<16x32xf32> -> vector<16x32xf32>
    %74 = arith.addf %54, %73 : vector<16x32xf32>
    %c0_24 = arith.constant 0 : index
    %c0_25 = arith.constant 0 : index
    %c0_26 = arith.constant 0 : index
    %c0_27 = arith.constant 0 : index
    %75 = vector.load %arg5[%c0_24, %c0_25, %c0_26, %c0_27] : memref<1x3x32x16xbf16, #tpu.memory_space<vmem>>, vector<1x1x32x16xbf16>
    %76 = vector.shape_cast %75 : vector<1x1x32x16xbf16> to vector<32x16xbf16>
    %77 = arith.truncf %74 : vector<16x32xf32> to vector<16x32xbf16>
    %cst_28 = arith.constant dense<0.000000e+00> : vector<32x32xf32>
    %78 = tpu.matmul %76, %77, %cst_28 {dimension_numbers = #tpu.dot_dimension_numbers<[1], [0], [0], [1], [0, 0, 1, 1], [], []>} : vector<32x16xbf16>, vector<16x32xbf16>, vector<32x32xf32> -> vector<32x32xf32>
    %c12 = arith.constant 12 : index
    %79 = memref.load %arg2[%c12] : memref<144xf32, #tpu.memory_space<smem>>
    %80 = vector.broadcast %79 : f32 to vector<16x16xf32>
    %81 = arith.mulf %80, %6 : vector<16x16xf32>
    %c13 = arith.constant 13 : index
    %82 = memref.load %arg2[%c13] : memref<144xf32, #tpu.memory_space<smem>>
    %83 = vector.broadcast %82 : f32 to vector<16x16xf32>
    %84 = arith.mulf %83, %9 : vector<16x16xf32>
    %85 = arith.addf %81, %84 : vector<16x16xf32>
    %c14 = arith.constant 14 : index
    %86 = memref.load %arg2[%c14] : memref<144xf32, #tpu.memory_space<smem>>
    %87 = vector.broadcast %86 : f32 to vector<16x16xf32>
    %88 = arith.mulf %87, %12 : vector<16x16xf32>
    %89 = arith.addf %85, %88 : vector<16x16xf32>
    %c15 = arith.constant 15 : index
    %90 = memref.load %arg2[%c15] : memref<144xf32, #tpu.memory_space<smem>>
    %91 = vector.broadcast %90 : f32 to vector<16x16xf32>
    %92 = arith.mulf %91, %15 : vector<16x16xf32>
    %93 = arith.addf %89, %92 : vector<16x16xf32>
    %94 = arith.truncf %93 : vector<16x16xf32> to vector<16x16xbf16>
    %c0_29 = arith.constant 0 : index
    %c0_30 = arith.constant 0 : index
    %c0_31 = arith.constant 0 : index
    %95 = vector.load %arg6[%c0_29, %c0_30, %c0_31] : memref<3x16x32xbf16, #tpu.memory_space<vmem>>, vector<1x16x32xbf16>
    %96 = vector.shape_cast %95 : vector<1x16x32xbf16> to vector<16x32xbf16>
    %cst_32 = arith.constant dense<0.000000e+00> : vector<16x32xf32>
    %97 = tpu.matmul %94, %96, %cst_32 {dimension_numbers = #tpu.dot_dimension_numbers<[1], [0], [0], [1], [0, 0, 1, 1], [], []>} : vector<16x16xbf16>, vector<16x32xbf16>, vector<16x32xf32> -> vector<16x32xf32>
    %c16 = arith.constant 16 : index
    %98 = memref.load %arg2[%c16] : memref<144xf32, #tpu.memory_space<smem>>
    %99 = vector.broadcast %98 : f32 to vector<16x16xf32>
    %100 = arith.mulf %99, %6 : vector<16x16xf32>
    %c17 = arith.constant 17 : index
    %101 = memref.load %arg2[%c17] : memref<144xf32, #tpu.memory_space<smem>>
    %102 = vector.broadcast %101 : f32 to vector<16x16xf32>
    %103 = arith.mulf %102, %9 : vector<16x16xf32>
    %104 = arith.addf %100, %103 : vector<16x16xf32>
    %c18 = arith.constant 18 : index
    %105 = memref.load %arg2[%c18] : memref<144xf32, #tpu.memory_space<smem>>
    %106 = vector.broadcast %105 : f32 to vector<16x16xf32>
    %107 = arith.mulf %106, %12 : vector<16x16xf32>
    %108 = arith.addf %104, %107 : vector<16x16xf32>
    %c19 = arith.constant 19 : index
    %109 = memref.load %arg2[%c19] : memref<144xf32, #tpu.memory_space<smem>>
    %110 = vector.broadcast %109 : f32 to vector<16x16xf32>
    %111 = arith.mulf %110, %15 : vector<16x16xf32>
    %112 = arith.addf %108, %111 : vector<16x16xf32>
    %113 = arith.truncf %112 : vector<16x16xf32> to vector<16x16xbf16>
    %c1_33 = arith.constant 1 : index
    %c0_34 = arith.constant 0 : index
    %c0_35 = arith.constant 0 : index
    %114 = vector.load %arg6[%c1_33, %c0_34, %c0_35] : memref<3x16x32xbf16, #tpu.memory_space<vmem>>, vector<1x16x32xbf16>
    %115 = vector.shape_cast %114 : vector<1x16x32xbf16> to vector<16x32xbf16>
    %cst_36 = arith.constant dense<0.000000e+00> : vector<16x32xf32>
    %116 = tpu.matmul %113, %115, %cst_36 {dimension_numbers = #tpu.dot_dimension_numbers<[1], [0], [0], [1], [0, 0, 1, 1], [], []>} : vector<16x16xbf16>, vector<16x32xbf16>, vector<16x32xf32> -> vector<16x32xf32>
    %117 = arith.addf %97, %116 : vector<16x32xf32>
    %c20 = arith.constant 20 : index
    %118 = memref.load %arg2[%c20] : memref<144xf32, #tpu.memory_space<smem>>
    %119 = vector.broadcast %118 : f32 to vector<16x16xf32>
    %120 = arith.mulf %119, %6 : vector<16x16xf32>
    %c21 = arith.constant 21 : index
    %121 = memref.load %arg2[%c21] : memref<144xf32, #tpu.memory_space<smem>>
    %122 = vector.broadcast %121 : f32 to vector<16x16xf32>
    %123 = arith.mulf %122, %9 : vector<16x16xf32>
    %124 = arith.addf %120, %123 : vector<16x16xf32>
    %c22 = arith.constant 22 : index
    %125 = memref.load %arg2[%c22] : memref<144xf32, #tpu.memory_space<smem>>
    %126 = vector.broadcast %125 : f32 to vector<16x16xf32>
    %127 = arith.mulf %126, %12 : vector<16x16xf32>
    %128 = arith.addf %124, %127 : vector<16x16xf32>
    %c23 = arith.constant 23 : index
    %129 = memref.load %arg2[%c23] : memref<144xf32, #tpu.memory_space<smem>>
    %130 = vector.broadcast %129 : f32 to vector<16x16xf32>
    %131 = arith.mulf %130, %15 : vector<16x16xf32>
    %132 = arith.addf %128, %131 : vector<16x16xf32>
    %133 = arith.truncf %132 : vector<16x16xf32> to vector<16x16xbf16>
    %c2_37 = arith.constant 2 : index
    %c0_38 = arith.constant 0 : index
    %c0_39 = arith.constant 0 : index
    %134 = vector.load %arg6[%c2_37, %c0_38, %c0_39] : memref<3x16x32xbf16, #tpu.memory_space<vmem>>, vector<1x16x32xbf16>
    %135 = vector.shape_cast %134 : vector<1x16x32xbf16> to vector<16x32xbf16>
    %cst_40 = arith.constant dense<0.000000e+00> : vector<16x32xf32>
    %136 = tpu.matmul %133, %135, %cst_40 {dimension_numbers = #tpu.dot_dimension_numbers<[1], [0], [0], [1], [0, 0, 1, 1], [], []>} : vector<16x16xbf16>, vector<16x32xbf16>, vector<16x32xf32> -> vector<16x32xf32>
    %137 = arith.addf %117, %136 : vector<16x32xf32>
    %c0_41 = arith.constant 0 : index
    %c1_42 = arith.constant 1 : index
    %c0_43 = arith.constant 0 : index
    %c0_44 = arith.constant 0 : index
    %138 = vector.load %arg5[%c0_41, %c1_42, %c0_43, %c0_44] : memref<1x3x32x16xbf16, #tpu.memory_space<vmem>>, vector<1x1x32x16xbf16>
    %139 = vector.shape_cast %138 : vector<1x1x32x16xbf16> to vector<32x16xbf16>
    %140 = arith.truncf %137 : vector<16x32xf32> to vector<16x32xbf16>
    %cst_45 = arith.constant dense<0.000000e+00> : vector<32x32xf32>
    %141 = tpu.matmul %139, %140, %cst_45 {dimension_numbers = #tpu.dot_dimension_numbers<[1], [0], [0], [1], [0, 0, 1, 1], [], []>} : vector<32x16xbf16>, vector<16x32xbf16>, vector<32x32xf32> -> vector<32x32xf32>
    %142 = arith.addf %78, %141 : vector<32x32xf32>
    %c24 = arith.constant 24 : index
    %143 = memref.load %arg2[%c24] : memref<144xf32, #tpu.memory_space<smem>>
    %144 = vector.broadcast %143 : f32 to vector<16x16xf32>
    %145 = arith.mulf %144, %6 : vector<16x16xf32>
    %c25 = arith.constant 25 : index
    %146 = memref.load %arg2[%c25] : memref<144xf32, #tpu.memory_space<smem>>
    %147 = vector.broadcast %146 : f32 to vector<16x16xf32>
    %148 = arith.mulf %147, %9 : vector<16x16xf32>
    %149 = arith.addf %145, %148 : vector<16x16xf32>
    %c26 = arith.constant 26 : index
    %150 = memref.load %arg2[%c26] : memref<144xf32, #tpu.memory_space<smem>>
    %151 = vector.broadcast %150 : f32 to vector<16x16xf32>
    %152 = arith.mulf %151, %12 : vector<16x16xf32>
    %153 = arith.addf %149, %152 : vector<16x16xf32>
    %c27 = arith.constant 27 : index
    %154 = memref.load %arg2[%c27] : memref<144xf32, #tpu.memory_space<smem>>
    %155 = vector.broadcast %154 : f32 to vector<16x16xf32>
    %156 = arith.mulf %155, %15 : vector<16x16xf32>
    %157 = arith.addf %153, %156 : vector<16x16xf32>
    %158 = arith.truncf %157 : vector<16x16xf32> to vector<16x16xbf16>
    %c0_46 = arith.constant 0 : index
    %c0_47 = arith.constant 0 : index
    %c0_48 = arith.constant 0 : index
    %159 = vector.load %arg6[%c0_46, %c0_47, %c0_48] : memref<3x16x32xbf16, #tpu.memory_space<vmem>>, vector<1x16x32xbf16>
    %160 = vector.shape_cast %159 : vector<1x16x32xbf16> to vector<16x32xbf16>
    %cst_49 = arith.constant dense<0.000000e+00> : vector<16x32xf32>
    %161 = tpu.matmul %158, %160, %cst_49 {dimension_numbers = #tpu.dot_dimension_numbers<[1], [0], [0], [1], [0, 0, 1, 1], [], []>} : vector<16x16xbf16>, vector<16x32xbf16>, vector<16x32xf32> -> vector<16x32xf32>
    %c28 = arith.constant 28 : index
    %162 = memref.load %arg2[%c28] : memref<144xf32, #tpu.memory_space<smem>>
    %163 = vector.broadcast %162 : f32 to vector<16x16xf32>
    %164 = arith.mulf %163, %6 : vector<16x16xf32>
    %c29 = arith.constant 29 : index
    %165 = memref.load %arg2[%c29] : memref<144xf32, #tpu.memory_space<smem>>
    %166 = vector.broadcast %165 : f32 to vector<16x16xf32>
    %167 = arith.mulf %166, %9 : vector<16x16xf32>
    %168 = arith.addf %164, %167 : vector<16x16xf32>
    %c30 = arith.constant 30 : index
    %169 = memref.load %arg2[%c30] : memref<144xf32, #tpu.memory_space<smem>>
    %170 = vector.broadcast %169 : f32 to vector<16x16xf32>
    %171 = arith.mulf %170, %12 : vector<16x16xf32>
    %172 = arith.addf %168, %171 : vector<16x16xf32>
    %c31 = arith.constant 31 : index
    %173 = memref.load %arg2[%c31] : memref<144xf32, #tpu.memory_space<smem>>
    %174 = vector.broadcast %173 : f32 to vector<16x16xf32>
    %175 = arith.mulf %174, %15 : vector<16x16xf32>
    %176 = arith.addf %172, %175 : vector<16x16xf32>
    %177 = arith.truncf %176 : vector<16x16xf32> to vector<16x16xbf16>
    %c1_50 = arith.constant 1 : index
    %c0_51 = arith.constant 0 : index
    %c0_52 = arith.constant 0 : index
    %178 = vector.load %arg6[%c1_50, %c0_51, %c0_52] : memref<3x16x32xbf16, #tpu.memory_space<vmem>>, vector<1x16x32xbf16>
    %179 = vector.shape_cast %178 : vector<1x16x32xbf16> to vector<16x32xbf16>
    %cst_53 = arith.constant dense<0.000000e+00> : vector<16x32xf32>
    %180 = tpu.matmul %177, %179, %cst_53 {dimension_numbers = #tpu.dot_dimension_numbers<[1], [0], [0], [1], [0, 0, 1, 1], [], []>} : vector<16x16xbf16>, vector<16x32xbf16>, vector<16x32xf32> -> vector<16x32xf32>
    %181 = arith.addf %161, %180 : vector<16x32xf32>
    %c32 = arith.constant 32 : index
    %182 = memref.load %arg2[%c32] : memref<144xf32, #tpu.memory_space<smem>>
    %183 = vector.broadcast %182 : f32 to vector<16x16xf32>
    %184 = arith.mulf %183, %6 : vector<16x16xf32>
    %c33 = arith.constant 33 : index
    %185 = memref.load %arg2[%c33] : memref<144xf32, #tpu.memory_space<smem>>
    %186 = vector.broadcast %185 : f32 to vector<16x16xf32>
    %187 = arith.mulf %186, %9 : vector<16x16xf32>
    %188 = arith.addf %184, %187 : vector<16x16xf32>
    %c34 = arith.constant 34 : index
    %189 = memref.load %arg2[%c34] : memref<144xf32, #tpu.memory_space<smem>>
    %190 = vector.broadcast %189 : f32 to vector<16x16xf32>
    %191 = arith.mulf %190, %12 : vector<16x16xf32>
    %192 = arith.addf %188, %191 : vector<16x16xf32>
    %c35 = arith.constant 35 : index
    %193 = memref.load %arg2[%c35] : memref<144xf32, #tpu.memory_space<smem>>
    %194 = vector.broadcast %193 : f32 to vector<16x16xf32>
    %195 = arith.mulf %194, %15 : vector<16x16xf32>
    %196 = arith.addf %192, %195 : vector<16x16xf32>
    %197 = arith.truncf %196 : vector<16x16xf32> to vector<16x16xbf16>
    %c2_54 = arith.constant 2 : index
    %c0_55 = arith.constant 0 : index
    %c0_56 = arith.constant 0 : index
    %198 = vector.load %arg6[%c2_54, %c0_55, %c0_56] : memref<3x16x32xbf16, #tpu.memory_space<vmem>>, vector<1x16x32xbf16>
    %199 = vector.shape_cast %198 : vector<1x16x32xbf16> to vector<16x32xbf16>
    %cst_57 = arith.constant dense<0.000000e+00> : vector<16x32xf32>
    %200 = tpu.matmul %197, %199, %cst_57 {dimension_numbers = #tpu.dot_dimension_numbers<[1], [0], [0], [1], [0, 0, 1, 1], [], []>} : vector<16x16xbf16>, vector<16x32xbf16>, vector<16x32xf32> -> vector<16x32xf32>
    %201 = arith.addf %181, %200 : vector<16x32xf32>
    %c0_58 = arith.constant 0 : index
    %c2_59 = arith.constant 2 : index
    %c0_60 = arith.constant 0 : index
    %c0_61 = arith.constant 0 : index
    %202 = vector.load %arg5[%c0_58, %c2_59, %c0_60, %c0_61] : memref<1x3x32x16xbf16, #tpu.memory_space<vmem>>, vector<1x1x32x16xbf16>
    %203 = vector.shape_cast %202 : vector<1x1x32x16xbf16> to vector<32x16xbf16>
    %204 = arith.truncf %201 : vector<16x32xf32> to vector<16x32xbf16>
    %cst_62 = arith.constant dense<0.000000e+00> : vector<32x32xf32>
    %205 = tpu.matmul %203, %204, %cst_62 {dimension_numbers = #tpu.dot_dimension_numbers<[1], [0], [0], [1], [0, 0, 1, 1], [], []>} : vector<32x16xbf16>, vector<16x32xbf16>, vector<32x32xf32> -> vector<32x32xf32>
    %206 = arith.addf %142, %205 : vector<32x32xf32>
    %c0_63 = arith.constant 0 : index
    %207 = memref.load %arg3[%c0_63] : memref<4xf32, #tpu.memory_space<smem>>
    %208 = vector.broadcast %207 : f32 to vector<32x32xf32>
    %209 = arith.addf %206, %208 : vector<32x32xf32>
    %c0_64 = arith.constant 0 : index
    %c0_65 = arith.constant 0 : index
    %c0_66 = arith.constant 0 : index
    %c0_67 = arith.constant 0 : index
    %210 = vector.load %arg7[%c0_64, %c0_65, %c0_66, %c0_67] : memref<1x4x32x32xf32, #tpu.memory_space<vmem>>, vector<1x1x32x32xf32>
    %211 = vector.shape_cast %210 : vector<1x1x32x32xf32> to vector<32x32xf32>
    %212 = vector.shape_cast %209 : vector<32x32xf32> to vector<1x1x32x32xf32>
    tpu.vector_store %arg7[%c0_64, %c0_65, %c0_66, %c0_67], %212 {strides = array<i32>} : memref<1x4x32x32xf32, #tpu.memory_space<vmem>>, vector<1x1x32x32xf32>,
    %c36 = arith.constant 36 : index
    %213 = memref.load %arg2[%c36] : memref<144xf32, #tpu.memory_space<smem>>
    %214 = vector.broadcast %213 : f32 to vector<16x16xf32>
    %215 = arith.mulf %214, %6 : vector<16x16xf32>
    %c37 = arith.constant 37 : index
    %216 = memref.load %arg2[%c37] : memref<144xf32, #tpu.memory_space<smem>>
    %217 = vector.broadcast %216 : f32 to vector<16x16xf32>
    %218 = arith.mulf %217, %9 : vector<16x16xf32>
    %219 = arith.addf %215, %218 : vector<16x16xf32>
    %c38 = arith.constant 38 : index
    %220 = memref.load %arg2[%c38] : memref<144xf32, #tpu.memory_space<smem>>
    %221 = vector.broadcast %220 : f32 to vector<16x16xf32>
    %222 = arith.mulf %221, %12 : vector<16x16xf32>
    %223 = arith.addf %219, %222 : vector<16x16xf32>
    %c39 = arith.constant 39 : index
    %224 = memref.load %arg2[%c39] : memref<144xf32, #tpu.memory_space<smem>>
    %225 = vector.broadcast %224 : f32 to vector<16x16xf32>
    %226 = arith.mulf %225, %15 : vector<16x16xf32>
    %227 = arith.addf %223, %226 : vector<16x16xf32>
    %228 = arith.truncf %227 : vector<16x16xf32> to vector<16x16xbf16>
    %c0_68 = arith.constant 0 : index
    %c0_69 = arith.constant 0 : index
    %c0_70 = arith.constant 0 : index
    %229 = vector.load %arg6[%c0_68, %c0_69, %c0_70] : memref<3x16x32xbf16, #tpu.memory_space<vmem>>, vector<1x16x32xbf16>
    %230 = vector.shape_cast %229 : vector<1x16x32xbf16> to vector<16x32xbf16>
    %cst_71 = arith.constant dense<0.000000e+00> : vector<16x32xf32>
    %231 = tpu.matmul %228, %230, %cst_71 {dimension_numbers = #tpu.dot_dimension_numbers<[1], [0], [0], [1], [0, 0, 1, 1], [], []>} : vector<16x16xbf16>, vector<16x32xbf16>, vector<16x32xf32> -> vector<16x32xf32>
    %c40 = arith.constant 40 : index
    %232 = memref.load %arg2[%c40] : memref<144xf32, #tpu.memory_space<smem>>
    %233 = vector.broadcast %232 : f32 to vector<16x16xf32>
    %234 = arith.mulf %233, %6 : vector<16x16xf32>
    %c41 = arith.constant 41 : index
    %235 = memref.load %arg2[%c41] : memref<144xf32, #tpu.memory_space<smem>>
    %236 = vector.broadcast %235 : f32 to vector<16x16xf32>
    %237 = arith.mulf %236, %9 : vector<16x16xf32>
    %238 = arith.addf %234, %237 : vector<16x16xf32>
    %c42 = arith.constant 42 : index
    %239 = memref.load %arg2[%c42] : memref<144xf32, #tpu.memory_space<smem>>
    %240 = vector.broadcast %239 : f32 to vector<16x16xf32>
    %241 = arith.mulf %240, %12 : vector<16x16xf32>
    %242 = arith.addf %238, %241 : vector<16x16xf32>
    %c43 = arith.constant 43 : index
    %243 = memref.load %arg2[%c43] : memref<144xf32, #tpu.memory_space<smem>>
    %244 = vector.broadcast %243 : f32 to vector<16x16xf32>
    %245 = arith.mulf %244, %15 : vector<16x16xf32>
    %246 = arith.addf %242, %245 : vector<16x16xf32>
    %247 = arith.truncf %246 : vector<16x16xf32> to vector<16x16xbf16>
    %c1_72 = arith.constant 1 : index
    %c0_73 = arith.constant 0 : index
    %c0_74 = arith.constant 0 : index
    %248 = vector.load %arg6[%c1_72, %c0_73, %c0_74] : memref<3x16x32xbf16, #tpu.memory_space<vmem>>, vector<1x16x32xbf16>
    %249 = vector.shape_cast %248 : vector<1x16x32xbf16> to vector<16x32xbf16>
    %cst_75 = arith.constant dense<0.000000e+00> : vector<16x32xf32>
    %250 = tpu.matmul %247, %249, %cst_75 {dimension_numbers = #tpu.dot_dimension_numbers<[1], [0], [0], [1], [0, 0, 1, 1], [], []>} : vector<16x16xbf16>, vector<16x32xbf16>, vector<16x32xf32> -> vector<16x32xf32>
    %251 = arith.addf %231, %250 : vector<16x32xf32>
    %c44 = arith.constant 44 : index
    %252 = memref.load %arg2[%c44] : memref<144xf32, #tpu.memory_space<smem>>
    %253 = vector.broadcast %252 : f32 to vector<16x16xf32>
    %254 = arith.mulf %253, %6 : vector<16x16xf32>
    %c45 = arith.constant 45 : index
    %255 = memref.load %arg2[%c45] : memref<144xf32, #tpu.memory_space<smem>>
    %256 = vector.broadcast %255 : f32 to vector<16x16xf32>
    %257 = arith.mulf %256, %9 : vector<16x16xf32>
    %258 = arith.addf %254, %257 : vector<16x16xf32>
    %c46 = arith.constant 46 : index
    %259 = memref.load %arg2[%c46] : memref<144xf32, #tpu.memory_space<smem>>
    %260 = vector.broadcast %259 : f32 to vector<16x16xf32>
    %261 = arith.mulf %260, %12 : vector<16x16xf32>
    %262 = arith.addf %258, %261 : vector<16x16xf32>
    %c47 = arith.constant 47 : index
    %263 = memref.load %arg2[%c47] : memref<144xf32, #tpu.memory_space<smem>>
    %264 = vector.broadcast %263 : f32 to vector<16x16xf32>
    %265 = arith.mulf %264, %15 : vector<16x16xf32>
    %266 = arith.addf %262, %265 : vector<16x16xf32>
    %267 = arith.truncf %266 : vector<16x16xf32> to vector<16x16xbf16>
    %c2_76 = arith.constant 2 : index
    %c0_77 = arith.constant 0 : index
    %c0_78 = arith.constant 0 : index
    %268 = vector.load %arg6[%c2_76, %c0_77, %c0_78] : memref<3x16x32xbf16, #tpu.memory_space<vmem>>, vector<1x16x32xbf16>
    %269 = vector.shape_cast %268 : vector<1x16x32xbf16> to vector<16x32xbf16>
    %cst_79 = arith.constant dense<0.000000e+00> : vector<16x32xf32>
    %270 = tpu.matmul %267, %269, %cst_79 {dimension_numbers = #tpu.dot_dimension_numbers<[1], [0], [0], [1], [0, 0, 1, 1], [], []>} : vector<16x16xbf16>, vector<16x32xbf16>, vector<16x32xf32> -> vector<16x32xf32>
    %271 = arith.addf %251, %270 : vector<16x32xf32>
    %c0_80 = arith.constant 0 : index
    %c0_81 = arith.constant 0 : index
    %c0_82 = arith.constant 0 : index
    %c0_83 = arith.constant 0 : index
    %272 = vector.load %arg5[%c0_80, %c0_81, %c0_82, %c0_83] : memref<1x3x32x16xbf16, #tpu.memory_space<vmem>>, vector<1x1x32x16xbf16>
    %273 = vector.shape_cast %272 : vector<1x1x32x16xbf16> to vector<32x16xbf16>
    %274 = arith.truncf %271 : vector<16x32xf32> to vector<16x32xbf16>
    %cst_84 = arith.constant dense<0.000000e+00> : vector<32x32xf32>
    %275 = tpu.matmul %273, %274, %cst_84 {dimension_numbers = #tpu.dot_dimension_numbers<[1], [0], [0], [1], [0, 0, 1, 1], [], []>} : vector<32x16xbf16>, vector<16x32xbf16>, vector<32x32xf32> -> vector<32x32xf32>
    %c48 = arith.constant 48 : index
    %276 = memref.load %arg2[%c48] : memref<144xf32, #tpu.memory_space<smem>>
    %277 = vector.broadcast %276 : f32 to vector<16x16xf32>
    %278 = arith.mulf %277, %6 : vector<16x16xf32>
    %c49 = arith.constant 49 : index
    %279 = memref.load %arg2[%c49] : memref<144xf32, #tpu.memory_space<smem>>
    %280 = vector.broadcast %279 : f32 to vector<16x16xf32>
    %281 = arith.mulf %280, %9 : vector<16x16xf32>
    %282 = arith.addf %278, %281 : vector<16x16xf32>
    %c50 = arith.constant 50 : index
    %283 = memref.load %arg2[%c50] : memref<144xf32, #tpu.memory_space<smem>>
    %284 = vector.broadcast %283 : f32 to vector<16x16xf32>
    %285 = arith.mulf %284, %12 : vector<16x16xf32>
    %286 = arith.addf %282, %285 : vector<16x16xf32>
    %c51 = arith.constant 51 : index
    %287 = memref.load %arg2[%c51] : memref<144xf32, #tpu.memory_space<smem>>
    %288 = vector.broadcast %287 : f32 to vector<16x16xf32>
    %289 = arith.mulf %288, %15 : vector<16x16xf32>
    %290 = arith.addf %286, %289 : vector<16x16xf32>
    %291 = arith.truncf %290 : vector<16x16xf32> to vector<16x16xbf16>
    %c0_85 = arith.constant 0 : index
    %c0_86 = arith.constant 0 : index
    %c0_87 = arith.constant 0 : index
    %292 = vector.load %arg6[%c0_85, %c0_86, %c0_87] : memref<3x16x32xbf16, #tpu.memory_space<vmem>>, vector<1x16x32xbf16>
    %293 = vector.shape_cast %292 : vector<1x16x32xbf16> to vector<16x32xbf16>
    %cst_88 = arith.constant dense<0.000000e+00> : vector<16x32xf32>
    %294 = tpu.matmul %291, %293, %cst_88 {dimension_numbers = #tpu.dot_dimension_numbers<[1], [0], [0], [1], [0, 0, 1, 1], [], []>} : vector<16x16xbf16>, vector<16x32xbf16>, vector<16x32xf32> -> vector<16x32xf32>
    %c52 = arith.constant 52 : index
    %295 = memref.load %arg2[%c52] : memref<144xf32, #tpu.memory_space<smem>>
    %296 = vector.broadcast %295 : f32 to vector<16x16xf32>
    %297 = arith.mulf %296, %6 : vector<16x16xf32>
    %c53 = arith.constant 53 : index
    %298 = memref.load %arg2[%c53] : memref<144xf32, #tpu.memory_space<smem>>
    %299 = vector.broadcast %298 : f32 to vector<16x16xf32>
    %300 = arith.mulf %299, %9 : vector<16x16xf32>
    %301 = arith.addf %297, %300 : vector<16x16xf32>
    %c54 = arith.constant 54 : index
    %302 = memref.load %arg2[%c54] : memref<144xf32, #tpu.memory_space<smem>>
    %303 = vector.broadcast %302 : f32 to vector<16x16xf32>
    %304 = arith.mulf %303, %12 : vector<16x16xf32>
    %305 = arith.addf %301, %304 : vector<16x16xf32>
    %c55 = arith.constant 55 : index
    %306 = memref.load %arg2[%c55] : memref<144xf32, #tpu.memory_space<smem>>
    %307 = vector.broadcast %306 : f32 to vector<16x16xf32>
    %308 = arith.mulf %307, %15 : vector<16x16xf32>
    %309 = arith.addf %305, %308 : vector<16x16xf32>
    %310 = arith.truncf %309 : vector<16x16xf32> to vector<16x16xbf16>
    %c1_89 = arith.constant 1 : index
    %c0_90 = arith.constant 0 : index
    %c0_91 = arith.constant 0 : index
    %311 = vector.load %arg6[%c1_89, %c0_90, %c0_91] : memref<3x16x32xbf16, #tpu.memory_space<vmem>>, vector<1x16x32xbf16>
    %312 = vector.shape_cast %311 : vector<1x16x32xbf16> to vector<16x32xbf16>
    %cst_92 = arith.constant dense<0.000000e+00> : vector<16x32xf32>
    %313 = tpu.matmul %310, %312, %cst_92 {dimension_numbers = #tpu.dot_dimension_numbers<[1], [0], [0], [1], [0, 0, 1, 1], [], []>} : vector<16x16xbf16>, vector<16x32xbf16>, vector<16x32xf32> -> vector<16x32xf32>
    %314 = arith.addf %294, %313 : vector<16x32xf32>
    %c56 = arith.constant 56 : index
    %315 = memref.load %arg2[%c56] : memref<144xf32, #tpu.memory_space<smem>>
    %316 = vector.broadcast %315 : f32 to vector<16x16xf32>
    %317 = arith.mulf %316, %6 : vector<16x16xf32>
    %c57 = arith.constant 57 : index
    %318 = memref.load %arg2[%c57] : memref<144xf32, #tpu.memory_space<smem>>
    %319 = vector.broadcast %318 : f32 to vector<16x16xf32>
    %320 = arith.mulf %319, %9 : vector<16x16xf32>
    %321 = arith.addf %317, %320 : vector<16x16xf32>
    %c58 = arith.constant 58 : index
    %322 = memref.load %arg2[%c58] : memref<144xf32, #tpu.memory_space<smem>>
    %323 = vector.broadcast %322 : f32 to vector<16x16xf32>
    %324 = arith.mulf %323, %12 : vector<16x16xf32>
    %325 = arith.addf %321, %324 : vector<16x16xf32>
    %c59 = arith.constant 59 : index
    %326 = memref.load %arg2[%c59] : memref<144xf32, #tpu.memory_space<smem>>
    %327 = vector.broadcast %326 : f32 to vector<16x16xf32>
    %328 = arith.mulf %327, %15 : vector<16x16xf32>
    %329 = arith.addf %325, %328 : vector<16x16xf32>
    %330 = arith.truncf %329 : vector<16x16xf32> to vector<16x16xbf16>
    %c2_93 = arith.constant 2 : index
    %c0_94 = arith.constant 0 : index
    %c0_95 = arith.constant 0 : index
    %331 = vector.load %arg6[%c2_93, %c0_94, %c0_95] : memref<3x16x32xbf16, #tpu.memory_space<vmem>>, vector<1x16x32xbf16>
    %332 = vector.shape_cast %331 : vector<1x16x32xbf16> to vector<16x32xbf16>
    %cst_96 = arith.constant dense<0.000000e+00> : vector<16x32xf32>
    %333 = tpu.matmul %330, %332, %cst_96 {dimension_numbers = #tpu.dot_dimension_numbers<[1], [0], [0], [1], [0, 0, 1, 1], [], []>} : vector<16x16xbf16>, vector<16x32xbf16>, vector<16x32xf32> -> vector<16x32xf32>
    %334 = arith.addf %314, %333 : vector<16x32xf32>
    %c0_97 = arith.constant 0 : index
    %c1_98 = arith.constant 1 : index
    %c0_99 = arith.constant 0 : index
    %c0_100 = arith.constant 0 : index
    %335 = vector.load %arg5[%c0_97, %c1_98, %c0_99, %c0_100] : memref<1x3x32x16xbf16, #tpu.memory_space<vmem>>, vector<1x1x32x16xbf16>
    %336 = vector.shape_cast %335 : vector<1x1x32x16xbf16> to vector<32x16xbf16>
    %337 = arith.truncf %334 : vector<16x32xf32> to vector<16x32xbf16>
    %cst_101 = arith.constant dense<0.000000e+00> : vector<32x32xf32>
    %338 = tpu.matmul %336, %337, %cst_101 {dimension_numbers = #tpu.dot_dimension_numbers<[1], [0], [0], [1], [0, 0, 1, 1], [], []>} : vector<32x16xbf16>, vector<16x32xbf16>, vector<32x32xf32> -> vector<32x32xf32>
    %339 = arith.addf %275, %338 : vector<32x32xf32>
    %c60 = arith.constant 60 : index
    %340 = memref.load %arg2[%c60] : memref<144xf32, #tpu.memory_space<smem>>
    %341 = vector.broadcast %340 : f32 to vector<16x16xf32>
    %342 = arith.mulf %341, %6 : vector<16x16xf32>
    %c61 = arith.constant 61 : index
    %343 = memref.load %arg2[%c61] : memref<144xf32, #tpu.memory_space<smem>>
    %344 = vector.broadcast %343 : f32 to vector<16x16xf32>
    %345 = arith.mulf %344, %9 : vector<16x16xf32>
    %346 = arith.addf %342, %345 : vector<16x16xf32>
    %c62 = arith.constant 62 : index
    %347 = memref.load %arg2[%c62] : memref<144xf32, #tpu.memory_space<smem>>
    %348 = vector.broadcast %347 : f32 to vector<16x16xf32>
    %349 = arith.mulf %348, %12 : vector<16x16xf32>
    %350 = arith.addf %346, %349 : vector<16x16xf32>
    %c63 = arith.constant 63 : index
    %351 = memref.load %arg2[%c63] : memref<144xf32, #tpu.memory_space<smem>>
    %352 = vector.broadcast %351 : f32 to vector<16x16xf32>
    %353 = arith.mulf %352, %15 : vector<16x16xf32>
    %354 = arith.addf %350, %353 : vector<16x16xf32>
    %355 = arith.truncf %354 : vector<16x16xf32> to vector<16x16xbf16>
    %c0_102 = arith.constant 0 : index
    %c0_103 = arith.constant 0 : index
    %c0_104 = arith.constant 0 : index
    %356 = vector.load %arg6[%c0_102, %c0_103, %c0_104] : memref<3x16x32xbf16, #tpu.memory_space<vmem>>, vector<1x16x32xbf16>
    %357 = vector.shape_cast %356 : vector<1x16x32xbf16> to vector<16x32xbf16>
    %cst_105 = arith.constant dense<0.000000e+00> : vector<16x32xf32>
    %358 = tpu.matmul %355, %357, %cst_105 {dimension_numbers = #tpu.dot_dimension_numbers<[1], [0], [0], [1], [0, 0, 1, 1], [], []>} : vector<16x16xbf16>, vector<16x32xbf16>, vector<16x32xf32> -> vector<16x32xf32>
    %c64 = arith.constant 64 : index
    %359 = memref.load %arg2[%c64] : memref<144xf32, #tpu.memory_space<smem>>
    %360 = vector.broadcast %359 : f32 to vector<16x16xf32>
    %361 = arith.mulf %360, %6 : vector<16x16xf32>
    %c65 = arith.constant 65 : index
    %362 = memref.load %arg2[%c65] : memref<144xf32, #tpu.memory_space<smem>>
    %363 = vector.broadcast %362 : f32 to vector<16x16xf32>
    %364 = arith.mulf %363, %9 : vector<16x16xf32>
    %365 = arith.addf %361, %364 : vector<16x16xf32>
    %c66 = arith.constant 66 : index
    %366 = memref.load %arg2[%c66] : memref<144xf32, #tpu.memory_space<smem>>
    %367 = vector.broadcast %366 : f32 to vector<16x16xf32>
    %368 = arith.mulf %367, %12 : vector<16x16xf32>
    %369 = arith.addf %365, %368 : vector<16x16xf32>
    %c67 = arith.constant 67 : index
    %370 = memref.load %arg2[%c67] : memref<144xf32, #tpu.memory_space<smem>>
    %371 = vector.broadcast %370 : f32 to vector<16x16xf32>
    %372 = arith.mulf %371, %15 : vector<16x16xf32>
    %373 = arith.addf %369, %372 : vector<16x16xf32>
    %374 = arith.truncf %373 : vector<16x16xf32> to vector<16x16xbf16>
    %c1_106 = arith.constant 1 : index
    %c0_107 = arith.constant 0 : index
    %c0_108 = arith.constant 0 : index
    %375 = vector.load %arg6[%c1_106, %c0_107, %c0_108] : memref<3x16x32xbf16, #tpu.memory_space<vmem>>, vector<1x16x32xbf16>
    %376 = vector.shape_cast %375 : vector<1x16x32xbf16> to vector<16x32xbf16>
    %cst_109 = arith.constant dense<0.000000e+00> : vector<16x32xf32>
    %377 = tpu.matmul %374, %376, %cst_109 {dimension_numbers = #tpu.dot_dimension_numbers<[1], [0], [0], [1], [0, 0, 1, 1], [], []>} : vector<16x16xbf16>, vector<16x32xbf16>, vector<16x32xf32> -> vector<16x32xf32>
    %378 = arith.addf %358, %377 : vector<16x32xf32>
    %c68 = arith.constant 68 : index
    %379 = memref.load %arg2[%c68] : memref<144xf32, #tpu.memory_space<smem>>
    %380 = vector.broadcast %379 : f32 to vector<16x16xf32>
    %381 = arith.mulf %380, %6 : vector<16x16xf32>
    %c69 = arith.constant 69 : index
    %382 = memref.load %arg2[%c69] : memref<144xf32, #tpu.memory_space<smem>>
    %383 = vector.broadcast %382 : f32 to vector<16x16xf32>
    %384 = arith.mulf %383, %9 : vector<16x16xf32>
    %385 = arith.addf %381, %384 : vector<16x16xf32>
    %c70 = arith.constant 70 : index
    %386 = memref.load %arg2[%c70] : memref<144xf32, #tpu.memory_space<smem>>
    %387 = vector.broadcast %386 : f32 to vector<16x16xf32>
    %388 = arith.mulf %387, %12 : vector<16x16xf32>
    %389 = arith.addf %385, %388 : vector<16x16xf32>
    %c71 = arith.constant 71 : index
    %390 = memref.load %arg2[%c71] : memref<144xf32, #tpu.memory_space<smem>>
    %391 = vector.broadcast %390 : f32 to vector<16x16xf32>
    %392 = arith.mulf %391, %15 : vector<16x16xf32>
    %393 = arith.addf %389, %392 : vector<16x16xf32>
    %394 = arith.truncf %393 : vector<16x16xf32> to vector<16x16xbf16>
    %c2_110 = arith.constant 2 : index
    %c0_111 = arith.constant 0 : index
    %c0_112 = arith.constant 0 : index
    %395 = vector.load %arg6[%c2_110, %c0_111, %c0_112] : memref<3x16x32xbf16, #tpu.memory_space<vmem>>, vector<1x16x32xbf16>
    %396 = vector.shape_cast %395 : vector<1x16x32xbf16> to vector<16x32xbf16>
    %cst_113 = arith.constant dense<0.000000e+00> : vector<16x32xf32>
    %397 = tpu.matmul %394, %396, %cst_113 {dimension_numbers = #tpu.dot_dimension_numbers<[1], [0], [0], [1], [0, 0, 1, 1], [], []>} : vector<16x16xbf16>, vector<16x32xbf16>, vector<16x32xf32> -> vector<16x32xf32>
    %398 = arith.addf %378, %397 : vector<16x32xf32>
    %c0_114 = arith.constant 0 : index
    %c2_115 = arith.constant 2 : index
    %c0_116 = arith.constant 0 : index
    %c0_117 = arith.constant 0 : index
    %399 = vector.load %arg5[%c0_114, %c2_115, %c0_116, %c0_117] : memref<1x3x32x16xbf16, #tpu.memory_space<vmem>>, vector<1x1x32x16xbf16>
    %400 = vector.shape_cast %399 : vector<1x1x32x16xbf16> to vector<32x16xbf16>
    %401 = arith.truncf %398 : vector<16x32xf32> to vector<16x32xbf16>
    %cst_118 = arith.constant dense<0.000000e+00> : vector<32x32xf32>
    %402 = tpu.matmul %400, %401, %cst_118 {dimension_numbers = #tpu.dot_dimension_numbers<[1], [0], [0], [1], [0, 0, 1, 1], [], []>} : vector<32x16xbf16>, vector<16x32xbf16>, vector<32x32xf32> -> vector<32x32xf32>
    %403 = arith.addf %339, %402 : vector<32x32xf32>
    %c1_119 = arith.constant 1 : index
    %404 = memref.load %arg3[%c1_119] : memref<4xf32, #tpu.memory_space<smem>>
    %405 = vector.broadcast %404 : f32 to vector<32x32xf32>
    %406 = arith.addf %403, %405 : vector<32x32xf32>
    %c0_120 = arith.constant 0 : index
    %c1_121 = arith.constant 1 : index
    %c0_122 = arith.constant 0 : index
    %c0_123 = arith.constant 0 : index
    %407 = vector.load %arg7[%c0_120, %c1_121, %c0_122, %c0_123] : memref<1x4x32x32xf32, #tpu.memory_space<vmem>>, vector<1x1x32x32xf32>
    %408 = vector.shape_cast %407 : vector<1x1x32x32xf32> to vector<32x32xf32>
    %409 = vector.shape_cast %406 : vector<32x32xf32> to vector<1x1x32x32xf32>
    tpu.vector_store %arg7[%c0_120, %c1_121, %c0_122, %c0_123], %409 {strides = array<i32>} : memref<1x4x32x32xf32, #tpu.memory_space<vmem>>, vector<1x1x32x32xf32>,
    %c72 = arith.constant 72 : index
    %410 = memref.load %arg2[%c72] : memref<144xf32, #tpu.memory_space<smem>>
    %411 = vector.broadcast %410 : f32 to vector<16x16xf32>
    %412 = arith.mulf %411, %6 : vector<16x16xf32>
    %c73 = arith.constant 73 : index
    %413 = memref.load %arg2[%c73] : memref<144xf32, #tpu.memory_space<smem>>
    %414 = vector.broadcast %413 : f32 to vector<16x16xf32>
    %415 = arith.mulf %414, %9 : vector<16x16xf32>
    %416 = arith.addf %412, %415 : vector<16x16xf32>
    %c74 = arith.constant 74 : index
    %417 = memref.load %arg2[%c74] : memref<144xf32, #tpu.memory_space<smem>>
    %418 = vector.broadcast %417 : f32 to vector<16x16xf32>
    %419 = arith.mulf %418, %12 : vector<16x16xf32>
    %420 = arith.addf %416, %419 : vector<16x16xf32>
    %c75 = arith.constant 75 : index
    %421 = memref.load %arg2[%c75] : memref<144xf32, #tpu.memory_space<smem>>
    %422 = vector.broadcast %421 : f32 to vector<16x16xf32>
    %423 = arith.mulf %422, %15 : vector<16x16xf32>
    %424 = arith.addf %420, %423 : vector<16x16xf32>
    %425 = arith.truncf %424 : vector<16x16xf32> to vector<16x16xbf16>
    %c0_124 = arith.constant 0 : index
    %c0_125 = arith.constant 0 : index
    %c0_126 = arith.constant 0 : index
    %426 = vector.load %arg6[%c0_124, %c0_125, %c0_126] : memref<3x16x32xbf16, #tpu.memory_space<vmem>>, vector<1x16x32xbf16>
    %427 = vector.shape_cast %426 : vector<1x16x32xbf16> to vector<16x32xbf16>
    %cst_127 = arith.constant dense<0.000000e+00> : vector<16x32xf32>
    %428 = tpu.matmul %425, %427, %cst_127 {dimension_numbers = #tpu.dot_dimension_numbers<[1], [0], [0], [1], [0, 0, 1, 1], [], []>} : vector<16x16xbf16>, vector<16x32xbf16>, vector<16x32xf32> -> vector<16x32xf32>
    %c76 = arith.constant 76 : index
    %429 = memref.load %arg2[%c76] : memref<144xf32, #tpu.memory_space<smem>>
    %430 = vector.broadcast %429 : f32 to vector<16x16xf32>
    %431 = arith.mulf %430, %6 : vector<16x16xf32>
    %c77 = arith.constant 77 : index
    %432 = memref.load %arg2[%c77] : memref<144xf32, #tpu.memory_space<smem>>
    %433 = vector.broadcast %432 : f32 to vector<16x16xf32>
    %434 = arith.mulf %433, %9 : vector<16x16xf32>
    %435 = arith.addf %431, %434 : vector<16x16xf32>
    %c78 = arith.constant 78 : index
    %436 = memref.load %arg2[%c78] : memref<144xf32, #tpu.memory_space<smem>>
    %437 = vector.broadcast %436 : f32 to vector<16x16xf32>
    %438 = arith.mulf %437, %12 : vector<16x16xf32>
    %439 = arith.addf %435, %438 : vector<16x16xf32>
    %c79 = arith.constant 79 : index
    %440 = memref.load %arg2[%c79] : memref<144xf32, #tpu.memory_space<smem>>
    %441 = vector.broadcast %440 : f32 to vector<16x16xf32>
    %442 = arith.mulf %441, %15 : vector<16x16xf32>
    %443 = arith.addf %439, %442 : vector<16x16xf32>
    %444 = arith.truncf %443 : vector<16x16xf32> to vector<16x16xbf16>
    %c1_128 = arith.constant 1 : index
    %c0_129 = arith.constant 0 : index
    %c0_130 = arith.constant 0 : index
    %445 = vector.load %arg6[%c1_128, %c0_129, %c0_130] : memref<3x16x32xbf16, #tpu.memory_space<vmem>>, vector<1x16x32xbf16>
    %446 = vector.shape_cast %445 : vector<1x16x32xbf16> to vector<16x32xbf16>
    %cst_131 = arith.constant dense<0.000000e+00> : vector<16x32xf32>
    %447 = tpu.matmul %444, %446, %cst_131 {dimension_numbers = #tpu.dot_dimension_numbers<[1], [0], [0], [1], [0, 0, 1, 1], [], []>} : vector<16x16xbf16>, vector<16x32xbf16>, vector<16x32xf32> -> vector<16x32xf32>
    %448 = arith.addf %428, %447 : vector<16x32xf32>
    %c80 = arith.constant 80 : index
    %449 = memref.load %arg2[%c80] : memref<144xf32, #tpu.memory_space<smem>>
    %450 = vector.broadcast %449 : f32 to vector<16x16xf32>
    %451 = arith.mulf %450, %6 : vector<16x16xf32>
    %c81 = arith.constant 81 : index
    %452 = memref.load %arg2[%c81] : memref<144xf32, #tpu.memory_space<smem>>
    %453 = vector.broadcast %452 : f32 to vector<16x16xf32>
    %454 = arith.mulf %453, %9 : vector<16x16xf32>
    %455 = arith.addf %451, %454 : vector<16x16xf32>
    %c82 = arith.constant 82 : index
    %456 = memref.load %arg2[%c82] : memref<144xf32, #tpu.memory_space<smem>>
    %457 = vector.broadcast %456 : f32 to vector<16x16xf32>
    %458 = arith.mulf %457, %12 : vector<16x16xf32>
    %459 = arith.addf %455, %458 : vector<16x16xf32>
    %c83 = arith.constant 83 : index
    %460 = memref.load %arg2[%c83] : memref<144xf32, #tpu.memory_space<smem>>
    %461 = vector.broadcast %460 : f32 to vector<16x16xf32>
    %462 = arith.mulf %461, %15 : vector<16x16xf32>
    %463 = arith.addf %459, %462 : vector<16x16xf32>
    %464 = arith.truncf %463 : vector<16x16xf32> to vector<16x16xbf16>
    %c2_132 = arith.constant 2 : index
    %c0_133 = arith.constant 0 : index
    %c0_134 = arith.constant 0 : index
    %465 = vector.load %arg6[%c2_132, %c0_133, %c0_134] : memref<3x16x32xbf16, #tpu.memory_space<vmem>>, vector<1x16x32xbf16>
    %466 = vector.shape_cast %465 : vector<1x16x32xbf16> to vector<16x32xbf16>
    %cst_135 = arith.constant dense<0.000000e+00> : vector<16x32xf32>
    %467 = tpu.matmul %464, %466, %cst_135 {dimension_numbers = #tpu.dot_dimension_numbers<[1], [0], [0], [1], [0, 0, 1, 1], [], []>} : vector<16x16xbf16>, vector<16x32xbf16>, vector<16x32xf32> -> vector<16x32xf32>
    %468 = arith.addf %448, %467 : vector<16x32xf32>
    %c0_136 = arith.constant 0 : index
    %c0_137 = arith.constant 0 : index
    %c0_138 = arith.constant 0 : index
    %c0_139 = arith.constant 0 : index
    %469 = vector.load %arg5[%c0_136, %c0_137, %c0_138, %c0_139] : memref<1x3x32x16xbf16, #tpu.memory_space<vmem>>, vector<1x1x32x16xbf16>
    %470 = vector.shape_cast %469 : vector<1x1x32x16xbf16> to vector<32x16xbf16>
    %471 = arith.truncf %468 : vector<16x32xf32> to vector<16x32xbf16>
    %cst_140 = arith.constant dense<0.000000e+00> : vector<32x32xf32>
    %472 = tpu.matmul %470, %471, %cst_140 {dimension_numbers = #tpu.dot_dimension_numbers<[1], [0], [0], [1], [0, 0, 1, 1], [], []>} : vector<32x16xbf16>, vector<16x32xbf16>, vector<32x32xf32> -> vector<32x32xf32>
    %c84 = arith.constant 84 : index
    %473 = memref.load %arg2[%c84] : memref<144xf32, #tpu.memory_space<smem>>
    %474 = vector.broadcast %473 : f32 to vector<16x16xf32>
    %475 = arith.mulf %474, %6 : vector<16x16xf32>
    %c85 = arith.constant 85 : index
    %476 = memref.load %arg2[%c85] : memref<144xf32, #tpu.memory_space<smem>>
    %477 = vector.broadcast %476 : f32 to vector<16x16xf32>
    %478 = arith.mulf %477, %9 : vector<16x16xf32>
    %479 = arith.addf %475, %478 : vector<16x16xf32>
    %c86 = arith.constant 86 : index
    %480 = memref.load %arg2[%c86] : memref<144xf32, #tpu.memory_space<smem>>
    %481 = vector.broadcast %480 : f32 to vector<16x16xf32>
    %482 = arith.mulf %481, %12 : vector<16x16xf32>
    %483 = arith.addf %479, %482 : vector<16x16xf32>
    %c87 = arith.constant 87 : index
    %484 = memref.load %arg2[%c87] : memref<144xf32, #tpu.memory_space<smem>>
    %485 = vector.broadcast %484 : f32 to vector<16x16xf32>
    %486 = arith.mulf %485, %15 : vector<16x16xf32>
    %487 = arith.addf %483, %486 : vector<16x16xf32>
    %488 = arith.truncf %487 : vector<16x16xf32> to vector<16x16xbf16>
    %c0_141 = arith.constant 0 : index
    %c0_142 = arith.constant 0 : index
    %c0_143 = arith.constant 0 : index
    %489 = vector.load %arg6[%c0_141, %c0_142, %c0_143] : memref<3x16x32xbf16, #tpu.memory_space<vmem>>, vector<1x16x32xbf16>
    %490 = vector.shape_cast %489 : vector<1x16x32xbf16> to vector<16x32xbf16>
    %cst_144 = arith.constant dense<0.000000e+00> : vector<16x32xf32>
    %491 = tpu.matmul %488, %490, %cst_144 {dimension_numbers = #tpu.dot_dimension_numbers<[1], [0], [0], [1], [0, 0, 1, 1], [], []>} : vector<16x16xbf16>, vector<16x32xbf16>, vector<16x32xf32> -> vector<16x32xf32>
    %c88 = arith.constant 88 : index
    %492 = memref.load %arg2[%c88] : memref<144xf32, #tpu.memory_space<smem>>
    %493 = vector.broadcast %492 : f32 to vector<16x16xf32>
    %494 = arith.mulf %493, %6 : vector<16x16xf32>
    %c89 = arith.constant 89 : index
    %495 = memref.load %arg2[%c89] : memref<144xf32, #tpu.memory_space<smem>>
    %496 = vector.broadcast %495 : f32 to vector<16x16xf32>
    %497 = arith.mulf %496, %9 : vector<16x16xf32>
    %498 = arith.addf %494, %497 : vector<16x16xf32>
    %c90 = arith.constant 90 : index
    %499 = memref.load %arg2[%c90] : memref<144xf32, #tpu.memory_space<smem>>
    %500 = vector.broadcast %499 : f32 to vector<16x16xf32>
    %501 = arith.mulf %500, %12 : vector<16x16xf32>
    %502 = arith.addf %498, %501 : vector<16x16xf32>
    %c91 = arith.constant 91 : index
    %503 = memref.load %arg2[%c91] : memref<144xf32, #tpu.memory_space<smem>>
    %504 = vector.broadcast %503 : f32 to vector<16x16xf32>
    %505 = arith.mulf %504, %15 : vector<16x16xf32>
    %506 = arith.addf %502, %505 : vector<16x16xf32>
    %507 = arith.truncf %506 : vector<16x16xf32> to vector<16x16xbf16>
    %c1_145 = arith.constant 1 : index
    %c0_146 = arith.constant 0 : index
    %c0_147 = arith.constant 0 : index
    %508 = vector.load %arg6[%c1_145, %c0_146, %c0_147] : memref<3x16x32xbf16, #tpu.memory_space<vmem>>, vector<1x16x32xbf16>
    %509 = vector.shape_cast %508 : vector<1x16x32xbf16> to vector<16x32xbf16>
    %cst_148 = arith.constant dense<0.000000e+00> : vector<16x32xf32>
    %510 = tpu.matmul %507, %509, %cst_148 {dimension_numbers = #tpu.dot_dimension_numbers<[1], [0], [0], [1], [0, 0, 1, 1], [], []>} : vector<16x16xbf16>, vector<16x32xbf16>, vector<16x32xf32> -> vector<16x32xf32>
    %511 = arith.addf %491, %510 : vector<16x32xf32>
    %c92 = arith.constant 92 : index
    %512 = memref.load %arg2[%c92] : memref<144xf32, #tpu.memory_space<smem>>
    %513 = vector.broadcast %512 : f32 to vector<16x16xf32>
    %514 = arith.mulf %513, %6 : vector<16x16xf32>
    %c93 = arith.constant 93 : index
    %515 = memref.load %arg2[%c93] : memref<144xf32, #tpu.memory_space<smem>>
    %516 = vector.broadcast %515 : f32 to vector<16x16xf32>
    %517 = arith.mulf %516, %9 : vector<16x16xf32>
    %518 = arith.addf %514, %517 : vector<16x16xf32>
    %c94 = arith.constant 94 : index
    %519 = memref.load %arg2[%c94] : memref<144xf32, #tpu.memory_space<smem>>
    %520 = vector.broadcast %519 : f32 to vector<16x16xf32>
    %521 = arith.mulf %520, %12 : vector<16x16xf32>
    %522 = arith.addf %518, %521 : vector<16x16xf32>
    %c95 = arith.constant 95 : index
    %523 = memref.load %arg2[%c95] : memref<144xf32, #tpu.memory_space<smem>>
    %524 = vector.broadcast %523 : f32 to vector<16x16xf32>
    %525 = arith.mulf %524, %15 : vector<16x16xf32>
    %526 = arith.addf %522, %525 : vector<16x16xf32>
    %527 = arith.truncf %526 : vector<16x16xf32> to vector<16x16xbf16>
    %c2_149 = arith.constant 2 : index
    %c0_150 = arith.constant 0 : index
    %c0_151 = arith.constant 0 : index
    %528 = vector.load %arg6[%c2_149, %c0_150, %c0_151] : memref<3x16x32xbf16, #tpu.memory_space<vmem>>, vector<1x16x32xbf16>
    %529 = vector.shape_cast %528 : vector<1x16x32xbf16> to vector<16x32xbf16>
    %cst_152 = arith.constant dense<0.000000e+00> : vector<16x32xf32>
    %530 = tpu.matmul %527, %529, %cst_152 {dimension_numbers = #tpu.dot_dimension_numbers<[1], [0], [0], [1], [0, 0, 1, 1], [], []>} : vector<16x16xbf16>, vector<16x32xbf16>, vector<16x32xf32> -> vector<16x32xf32>
    %531 = arith.addf %511, %530 : vector<16x32xf32>
    %c0_153 = arith.constant 0 : index
    %c1_154 = arith.constant 1 : index
    %c0_155 = arith.constant 0 : index
    %c0_156 = arith.constant 0 : index
    %532 = vector.load %arg5[%c0_153, %c1_154, %c0_155, %c0_156] : memref<1x3x32x16xbf16, #tpu.memory_space<vmem>>, vector<1x1x32x16xbf16>
    %533 = vector.shape_cast %532 : vector<1x1x32x16xbf16> to vector<32x16xbf16>
    %534 = arith.truncf %531 : vector<16x32xf32> to vector<16x32xbf16>
    %cst_157 = arith.constant dense<0.000000e+00> : vector<32x32xf32>
    %535 = tpu.matmul %533, %534, %cst_157 {dimension_numbers = #tpu.dot_dimension_numbers<[1], [0], [0], [1], [0, 0, 1, 1], [], []>} : vector<32x16xbf16>, vector<16x32xbf16>, vector<32x32xf32> -> vector<32x32xf32>
    %536 = arith.addf %472, %535 : vector<32x32xf32>
    %c96 = arith.constant 96 : index
    %537 = memref.load %arg2[%c96] : memref<144xf32, #tpu.memory_space<smem>>
    %538 = vector.broadcast %537 : f32 to vector<16x16xf32>
    %539 = arith.mulf %538, %6 : vector<16x16xf32>
    %c97 = arith.constant 97 : index
    %540 = memref.load %arg2[%c97] : memref<144xf32, #tpu.memory_space<smem>>
    %541 = vector.broadcast %540 : f32 to vector<16x16xf32>
    %542 = arith.mulf %541, %9 : vector<16x16xf32>
    %543 = arith.addf %539, %542 : vector<16x16xf32>
    %c98 = arith.constant 98 : index
    %544 = memref.load %arg2[%c98] : memref<144xf32, #tpu.memory_space<smem>>
    %545 = vector.broadcast %544 : f32 to vector<16x16xf32>
    %546 = arith.mulf %545, %12 : vector<16x16xf32>
    %547 = arith.addf %543, %546 : vector<16x16xf32>
    %c99 = arith.constant 99 : index
    %548 = memref.load %arg2[%c99] : memref<144xf32, #tpu.memory_space<smem>>
    %549 = vector.broadcast %548 : f32 to vector<16x16xf32>
    %550 = arith.mulf %549, %15 : vector<16x16xf32>
    %551 = arith.addf %547, %550 : vector<16x16xf32>
    %552 = arith.truncf %551 : vector<16x16xf32> to vector<16x16xbf16>
    %c0_158 = arith.constant 0 : index
    %c0_159 = arith.constant 0 : index
    %c0_160 = arith.constant 0 : index
    %553 = vector.load %arg6[%c0_158, %c0_159, %c0_160] : memref<3x16x32xbf16, #tpu.memory_space<vmem>>, vector<1x16x32xbf16>
    %554 = vector.shape_cast %553 : vector<1x16x32xbf16> to vector<16x32xbf16>
    %cst_161 = arith.constant dense<0.000000e+00> : vector<16x32xf32>
    %555 = tpu.matmul %552, %554, %cst_161 {dimension_numbers = #tpu.dot_dimension_numbers<[1], [0], [0], [1], [0, 0, 1, 1], [], []>} : vector<16x16xbf16>, vector<16x32xbf16>, vector<16x32xf32> -> vector<16x32xf32>
    %c100 = arith.constant 100 : index
    %556 = memref.load %arg2[%c100] : memref<144xf32, #tpu.memory_space<smem>>
    %557 = vector.broadcast %556 : f32 to vector<16x16xf32>
    %558 = arith.mulf %557, %6 : vector<16x16xf32>
    %c101 = arith.constant 101 : index
    %559 = memref.load %arg2[%c101] : memref<144xf32, #tpu.memory_space<smem>>
    %560 = vector.broadcast %559 : f32 to vector<16x16xf32>
    %561 = arith.mulf %560, %9 : vector<16x16xf32>
    %562 = arith.addf %558, %561 : vector<16x16xf32>
    %c102 = arith.constant 102 : index
    %563 = memref.load %arg2[%c102] : memref<144xf32, #tpu.memory_space<smem>>
    %564 = vector.broadcast %563 : f32 to vector<16x16xf32>
    %565 = arith.mulf %564, %12 : vector<16x16xf32>
    %566 = arith.addf %562, %565 : vector<16x16xf32>
    %c103 = arith.constant 103 : index
    %567 = memref.load %arg2[%c103] : memref<144xf32, #tpu.memory_space<smem>>
    %568 = vector.broadcast %567 : f32 to vector<16x16xf32>
    %569 = arith.mulf %568, %15 : vector<16x16xf32>
    %570 = arith.addf %566, %569 : vector<16x16xf32>
    %571 = arith.truncf %570 : vector<16x16xf32> to vector<16x16xbf16>
    %c1_162 = arith.constant 1 : index
    %c0_163 = arith.constant 0 : index
    %c0_164 = arith.constant 0 : index
    %572 = vector.load %arg6[%c1_162, %c0_163, %c0_164] : memref<3x16x32xbf16, #tpu.memory_space<vmem>>, vector<1x16x32xbf16>
    %573 = vector.shape_cast %572 : vector<1x16x32xbf16> to vector<16x32xbf16>
    %cst_165 = arith.constant dense<0.000000e+00> : vector<16x32xf32>
    %574 = tpu.matmul %571, %573, %cst_165 {dimension_numbers = #tpu.dot_dimension_numbers<[1], [0], [0], [1], [0, 0, 1, 1], [], []>} : vector<16x16xbf16>, vector<16x32xbf16>, vector<16x32xf32> -> vector<16x32xf32>
    %575 = arith.addf %555, %574 : vector<16x32xf32>
    %c104 = arith.constant 104 : index
    %576 = memref.load %arg2[%c104] : memref<144xf32, #tpu.memory_space<smem>>
    %577 = vector.broadcast %576 : f32 to vector<16x16xf32>
    %578 = arith.mulf %577, %6 : vector<16x16xf32>
    %c105 = arith.constant 105 : index
    %579 = memref.load %arg2[%c105] : memref<144xf32, #tpu.memory_space<smem>>
    %580 = vector.broadcast %579 : f32 to vector<16x16xf32>
    %581 = arith.mulf %580, %9 : vector<16x16xf32>
    %582 = arith.addf %578, %581 : vector<16x16xf32>
    %c106 = arith.constant 106 : index
    %583 = memref.load %arg2[%c106] : memref<144xf32, #tpu.memory_space<smem>>
    %584 = vector.broadcast %583 : f32 to vector<16x16xf32>
    %585 = arith.mulf %584, %12 : vector<16x16xf32>
    %586 = arith.addf %582, %585 : vector<16x16xf32>
    %c107 = arith.constant 107 : index
    %587 = memref.load %arg2[%c107] : memref<144xf32, #tpu.memory_space<smem>>
    %588 = vector.broadcast %587 : f32 to vector<16x16xf32>
    %589 = arith.mulf %588, %15 : vector<16x16xf32>
    %590 = arith.addf %586, %589 : vector<16x16xf32>
    %591 = arith.truncf %590 : vector<16x16xf32> to vector<16x16xbf16>
    %c2_166 = arith.constant 2 : index
    %c0_167 = arith.constant 0 : index
    %c0_168 = arith.constant 0 : index
    %592 = vector.load %arg6[%c2_166, %c0_167, %c0_168] : memref<3x16x32xbf16, #tpu.memory_space<vmem>>, vector<1x16x32xbf16>
    %593 = vector.shape_cast %592 : vector<1x16x32xbf16> to vector<16x32xbf16>
    %cst_169 = arith.constant dense<0.000000e+00> : vector<16x32xf32>
    %594 = tpu.matmul %591, %593, %cst_169 {dimension_numbers = #tpu.dot_dimension_numbers<[1], [0], [0], [1], [0, 0, 1, 1], [], []>} : vector<16x16xbf16>, vector<16x32xbf16>, vector<16x32xf32> -> vector<16x32xf32>
    %595 = arith.addf %575, %594 : vector<16x32xf32>
    %c0_170 = arith.constant 0 : index
    %c2_171 = arith.constant 2 : index
    %c0_172 = arith.constant 0 : index
    %c0_173 = arith.constant 0 : index
    %596 = vector.load %arg5[%c0_170, %c2_171, %c0_172, %c0_173] : memref<1x3x32x16xbf16, #tpu.memory_space<vmem>>, vector<1x1x32x16xbf16>
    %597 = vector.shape_cast %596 : vector<1x1x32x16xbf16> to vector<32x16xbf16>
    %598 = arith.truncf %595 : vector<16x32xf32> to vector<16x32xbf16>
    %cst_174 = arith.constant dense<0.000000e+00> : vector<32x32xf32>
    %599 = tpu.matmul %597, %598, %cst_174 {dimension_numbers = #tpu.dot_dimension_numbers<[1], [0], [0], [1], [0, 0, 1, 1], [], []>} : vector<32x16xbf16>, vector<16x32xbf16>, vector<32x32xf32> -> vector<32x32xf32>
    %600 = arith.addf %536, %599 : vector<32x32xf32>
    %c2_175 = arith.constant 2 : index
    %601 = memref.load %arg3[%c2_175] : memref<4xf32, #tpu.memory_space<smem>>
    %602 = vector.broadcast %601 : f32 to vector<32x32xf32>
    %603 = arith.addf %600, %602 : vector<32x32xf32>
    %c0_176 = arith.constant 0 : index
    %c2_177 = arith.constant 2 : index
    %c0_178 = arith.constant 0 : index
    %c0_179 = arith.constant 0 : index
    %604 = vector.load %arg7[%c0_176, %c2_177, %c0_178, %c0_179] : memref<1x4x32x32xf32, #tpu.memory_space<vmem>>, vector<1x1x32x32xf32>
    %605 = vector.shape_cast %604 : vector<1x1x32x32xf32> to vector<32x32xf32>
    %606 = vector.shape_cast %603 : vector<32x32xf32> to vector<1x1x32x32xf32>
    tpu.vector_store %arg7[%c0_176, %c2_177, %c0_178, %c0_179], %606 {strides = array<i32>} : memref<1x4x32x32xf32, #tpu.memory_space<vmem>>, vector<1x1x32x32xf32>,
    %c108 = arith.constant 108 : index
    %607 = memref.load %arg2[%c108] : memref<144xf32, #tpu.memory_space<smem>>
    %608 = vector.broadcast %607 : f32 to vector<16x16xf32>
    %609 = arith.mulf %608, %6 : vector<16x16xf32>
    %c109 = arith.constant 109 : index
    %610 = memref.load %arg2[%c109] : memref<144xf32, #tpu.memory_space<smem>>
    %611 = vector.broadcast %610 : f32 to vector<16x16xf32>
    %612 = arith.mulf %611, %9 : vector<16x16xf32>
    %613 = arith.addf %609, %612 : vector<16x16xf32>
    %c110 = arith.constant 110 : index
    %614 = memref.load %arg2[%c110] : memref<144xf32, #tpu.memory_space<smem>>
    %615 = vector.broadcast %614 : f32 to vector<16x16xf32>
    %616 = arith.mulf %615, %12 : vector<16x16xf32>
    %617 = arith.addf %613, %616 : vector<16x16xf32>
    %c111 = arith.constant 111 : index
    %618 = memref.load %arg2[%c111] : memref<144xf32, #tpu.memory_space<smem>>
    %619 = vector.broadcast %618 : f32 to vector<16x16xf32>
    %620 = arith.mulf %619, %15 : vector<16x16xf32>
    %621 = arith.addf %617, %620 : vector<16x16xf32>
    %622 = arith.truncf %621 : vector<16x16xf32> to vector<16x16xbf16>
    %c0_180 = arith.constant 0 : index
    %c0_181 = arith.constant 0 : index
    %c0_182 = arith.constant 0 : index
    %623 = vector.load %arg6[%c0_180, %c0_181, %c0_182] : memref<3x16x32xbf16, #tpu.memory_space<vmem>>, vector<1x16x32xbf16>
    %624 = vector.shape_cast %623 : vector<1x16x32xbf16> to vector<16x32xbf16>
    %cst_183 = arith.constant dense<0.000000e+00> : vector<16x32xf32>
    %625 = tpu.matmul %622, %624, %cst_183 {dimension_numbers = #tpu.dot_dimension_numbers<[1], [0], [0], [1], [0, 0, 1, 1], [], []>} : vector<16x16xbf16>, vector<16x32xbf16>, vector<16x32xf32> -> vector<16x32xf32>
    %c112 = arith.constant 112 : index
    %626 = memref.load %arg2[%c112] : memref<144xf32, #tpu.memory_space<smem>>
    %627 = vector.broadcast %626 : f32 to vector<16x16xf32>
    %628 = arith.mulf %627, %6 : vector<16x16xf32>
    %c113 = arith.constant 113 : index
    %629 = memref.load %arg2[%c113] : memref<144xf32, #tpu.memory_space<smem>>
    %630 = vector.broadcast %629 : f32 to vector<16x16xf32>
    %631 = arith.mulf %630, %9 : vector<16x16xf32>
    %632 = arith.addf %628, %631 : vector<16x16xf32>
    %c114 = arith.constant 114 : index
    %633 = memref.load %arg2[%c114] : memref<144xf32, #tpu.memory_space<smem>>
    %634 = vector.broadcast %633 : f32 to vector<16x16xf32>
    %635 = arith.mulf %634, %12 : vector<16x16xf32>
    %636 = arith.addf %632, %635 : vector<16x16xf32>
    %c115 = arith.constant 115 : index
    %637 = memref.load %arg2[%c115] : memref<144xf32, #tpu.memory_space<smem>>
    %638 = vector.broadcast %637 : f32 to vector<16x16xf32>
    %639 = arith.mulf %638, %15 : vector<16x16xf32>
    %640 = arith.addf %636, %639 : vector<16x16xf32>
    %641 = arith.truncf %640 : vector<16x16xf32> to vector<16x16xbf16>
    %c1_184 = arith.constant 1 : index
    %c0_185 = arith.constant 0 : index
    %c0_186 = arith.constant 0 : index
    %642 = vector.load %arg6[%c1_184, %c0_185, %c0_186] : memref<3x16x32xbf16, #tpu.memory_space<vmem>>, vector<1x16x32xbf16>
    %643 = vector.shape_cast %642 : vector<1x16x32xbf16> to vector<16x32xbf16>
    %cst_187 = arith.constant dense<0.000000e+00> : vector<16x32xf32>
    %644 = tpu.matmul %641, %643, %cst_187 {dimension_numbers = #tpu.dot_dimension_numbers<[1], [0], [0], [1], [0, 0, 1, 1], [], []>} : vector<16x16xbf16>, vector<16x32xbf16>, vector<16x32xf32> -> vector<16x32xf32>
    %645 = arith.addf %625, %644 : vector<16x32xf32>
    %c116 = arith.constant 116 : index
    %646 = memref.load %arg2[%c116] : memref<144xf32, #tpu.memory_space<smem>>
    %647 = vector.broadcast %646 : f32 to vector<16x16xf32>
    %648 = arith.mulf %647, %6 : vector<16x16xf32>
    %c117 = arith.constant 117 : index
    %649 = memref.load %arg2[%c117] : memref<144xf32, #tpu.memory_space<smem>>
    %650 = vector.broadcast %649 : f32 to vector<16x16xf32>
    %651 = arith.mulf %650, %9 : vector<16x16xf32>
    %652 = arith.addf %648, %651 : vector<16x16xf32>
    %c118 = arith.constant 118 : index
    %653 = memref.load %arg2[%c118] : memref<144xf32, #tpu.memory_space<smem>>
    %654 = vector.broadcast %653 : f32 to vector<16x16xf32>
    %655 = arith.mulf %654, %12 : vector<16x16xf32>
    %656 = arith.addf %652, %655 : vector<16x16xf32>
    %c119 = arith.constant 119 : index
    %657 = memref.load %arg2[%c119] : memref<144xf32, #tpu.memory_space<smem>>
    %658 = vector.broadcast %657 : f32 to vector<16x16xf32>
    %659 = arith.mulf %658, %15 : vector<16x16xf32>
    %660 = arith.addf %656, %659 : vector<16x16xf32>
    %661 = arith.truncf %660 : vector<16x16xf32> to vector<16x16xbf16>
    %c2_188 = arith.constant 2 : index
    %c0_189 = arith.constant 0 : index
    %c0_190 = arith.constant 0 : index
    %662 = vector.load %arg6[%c2_188, %c0_189, %c0_190] : memref<3x16x32xbf16, #tpu.memory_space<vmem>>, vector<1x16x32xbf16>
    %663 = vector.shape_cast %662 : vector<1x16x32xbf16> to vector<16x32xbf16>
    %cst_191 = arith.constant dense<0.000000e+00> : vector<16x32xf32>
    %664 = tpu.matmul %661, %663, %cst_191 {dimension_numbers = #tpu.dot_dimension_numbers<[1], [0], [0], [1], [0, 0, 1, 1], [], []>} : vector<16x16xbf16>, vector<16x32xbf16>, vector<16x32xf32> -> vector<16x32xf32>
    %665 = arith.addf %645, %664 : vector<16x32xf32>
    %c0_192 = arith.constant 0 : index
    %c0_193 = arith.constant 0 : index
    %c0_194 = arith.constant 0 : index
    %c0_195 = arith.constant 0 : index
    %666 = vector.load %arg5[%c0_192, %c0_193, %c0_194, %c0_195] : memref<1x3x32x16xbf16, #tpu.memory_space<vmem>>, vector<1x1x32x16xbf16>
    %667 = vector.shape_cast %666 : vector<1x1x32x16xbf16> to vector<32x16xbf16>
    %668 = arith.truncf %665 : vector<16x32xf32> to vector<16x32xbf16>
    %cst_196 = arith.constant dense<0.000000e+00> : vector<32x32xf32>
    %669 = tpu.matmul %667, %668, %cst_196 {dimension_numbers = #tpu.dot_dimension_numbers<[1], [0], [0], [1], [0, 0, 1, 1], [], []>} : vector<32x16xbf16>, vector<16x32xbf16>, vector<32x32xf32> -> vector<32x32xf32>
    %c120 = arith.constant 120 : index
    %670 = memref.load %arg2[%c120] : memref<144xf32, #tpu.memory_space<smem>>
    %671 = vector.broadcast %670 : f32 to vector<16x16xf32>
    %672 = arith.mulf %671, %6 : vector<16x16xf32>
    %c121 = arith.constant 121 : index
    %673 = memref.load %arg2[%c121] : memref<144xf32, #tpu.memory_space<smem>>
    %674 = vector.broadcast %673 : f32 to vector<16x16xf32>
    %675 = arith.mulf %674, %9 : vector<16x16xf32>
    %676 = arith.addf %672, %675 : vector<16x16xf32>
    %c122 = arith.constant 122 : index
    %677 = memref.load %arg2[%c122] : memref<144xf32, #tpu.memory_space<smem>>
    %678 = vector.broadcast %677 : f32 to vector<16x16xf32>
    %679 = arith.mulf %678, %12 : vector<16x16xf32>
    %680 = arith.addf %676, %679 : vector<16x16xf32>
    %c123 = arith.constant 123 : index
    %681 = memref.load %arg2[%c123] : memref<144xf32, #tpu.memory_space<smem>>
    %682 = vector.broadcast %681 : f32 to vector<16x16xf32>
    %683 = arith.mulf %682, %15 : vector<16x16xf32>
    %684 = arith.addf %680, %683 : vector<16x16xf32>
    %685 = arith.truncf %684 : vector<16x16xf32> to vector<16x16xbf16>
    %c0_197 = arith.constant 0 : index
    %c0_198 = arith.constant 0 : index
    %c0_199 = arith.constant 0 : index
    %686 = vector.load %arg6[%c0_197, %c0_198, %c0_199] : memref<3x16x32xbf16, #tpu.memory_space<vmem>>, vector<1x16x32xbf16>
    %687 = vector.shape_cast %686 : vector<1x16x32xbf16> to vector<16x32xbf16>
    %cst_200 = arith.constant dense<0.000000e+00> : vector<16x32xf32>
    %688 = tpu.matmul %685, %687, %cst_200 {dimension_numbers = #tpu.dot_dimension_numbers<[1], [0], [0], [1], [0, 0, 1, 1], [], []>} : vector<16x16xbf16>, vector<16x32xbf16>, vector<16x32xf32> -> vector<16x32xf32>
    %c124 = arith.constant 124 : index
    %689 = memref.load %arg2[%c124] : memref<144xf32, #tpu.memory_space<smem>>
    %690 = vector.broadcast %689 : f32 to vector<16x16xf32>
    %691 = arith.mulf %690, %6 : vector<16x16xf32>
    %c125 = arith.constant 125 : index
    %692 = memref.load %arg2[%c125] : memref<144xf32, #tpu.memory_space<smem>>
    %693 = vector.broadcast %692 : f32 to vector<16x16xf32>
    %694 = arith.mulf %693, %9 : vector<16x16xf32>
    %695 = arith.addf %691, %694 : vector<16x16xf32>
    %c126 = arith.constant 126 : index
    %696 = memref.load %arg2[%c126] : memref<144xf32, #tpu.memory_space<smem>>
    %697 = vector.broadcast %696 : f32 to vector<16x16xf32>
    %698 = arith.mulf %697, %12 : vector<16x16xf32>
    %699 = arith.addf %695, %698 : vector<16x16xf32>
    %c127 = arith.constant 127 : index
    %700 = memref.load %arg2[%c127] : memref<144xf32, #tpu.memory_space<smem>>
    %701 = vector.broadcast %700 : f32 to vector<16x16xf32>
    %702 = arith.mulf %701, %15 : vector<16x16xf32>
    %703 = arith.addf %699, %702 : vector<16x16xf32>
    %704 = arith.truncf %703 : vector<16x16xf32> to vector<16x16xbf16>
    %c1_201 = arith.constant 1 : index
    %c0_202 = arith.constant 0 : index
    %c0_203 = arith.constant 0 : index
    %705 = vector.load %arg6[%c1_201, %c0_202, %c0_203] : memref<3x16x32xbf16, #tpu.memory_space<vmem>>, vector<1x16x32xbf16>
    %706 = vector.shape_cast %705 : vector<1x16x32xbf16> to vector<16x32xbf16>
    %cst_204 = arith.constant dense<0.000000e+00> : vector<16x32xf32>
    %707 = tpu.matmul %704, %706, %cst_204 {dimension_numbers = #tpu.dot_dimension_numbers<[1], [0], [0], [1], [0, 0, 1, 1], [], []>} : vector<16x16xbf16>, vector<16x32xbf16>, vector<16x32xf32> -> vector<16x32xf32>
    %708 = arith.addf %688, %707 : vector<16x32xf32>
    %c128 = arith.constant 128 : index
    %709 = memref.load %arg2[%c128] : memref<144xf32, #tpu.memory_space<smem>>
    %710 = vector.broadcast %709 : f32 to vector<16x16xf32>
    %711 = arith.mulf %710, %6 : vector<16x16xf32>
    %c129 = arith.constant 129 : index
    %712 = memref.load %arg2[%c129] : memref<144xf32, #tpu.memory_space<smem>>
    %713 = vector.broadcast %712 : f32 to vector<16x16xf32>
    %714 = arith.mulf %713, %9 : vector<16x16xf32>
    %715 = arith.addf %711, %714 : vector<16x16xf32>
    %c130 = arith.constant 130 : index
    %716 = memref.load %arg2[%c130] : memref<144xf32, #tpu.memory_space<smem>>
    %717 = vector.broadcast %716 : f32 to vector<16x16xf32>
    %718 = arith.mulf %717, %12 : vector<16x16xf32>
    %719 = arith.addf %715, %718 : vector<16x16xf32>
    %c131 = arith.constant 131 : index
    %720 = memref.load %arg2[%c131] : memref<144xf32, #tpu.memory_space<smem>>
    %721 = vector.broadcast %720 : f32 to vector<16x16xf32>
    %722 = arith.mulf %721, %15 : vector<16x16xf32>
    %723 = arith.addf %719, %722 : vector<16x16xf32>
    %724 = arith.truncf %723 : vector<16x16xf32> to vector<16x16xbf16>
    %c2_205 = arith.constant 2 : index
    %c0_206 = arith.constant 0 : index
    %c0_207 = arith.constant 0 : index
    %725 = vector.load %arg6[%c2_205, %c0_206, %c0_207] : memref<3x16x32xbf16, #tpu.memory_space<vmem>>, vector<1x16x32xbf16>
    %726 = vector.shape_cast %725 : vector<1x16x32xbf16> to vector<16x32xbf16>
    %cst_208 = arith.constant dense<0.000000e+00> : vector<16x32xf32>
    %727 = tpu.matmul %724, %726, %cst_208 {dimension_numbers = #tpu.dot_dimension_numbers<[1], [0], [0], [1], [0, 0, 1, 1], [], []>} : vector<16x16xbf16>, vector<16x32xbf16>, vector<16x32xf32> -> vector<16x32xf32>
    %728 = arith.addf %708, %727 : vector<16x32xf32>
    %c0_209 = arith.constant 0 : index
    %c1_210 = arith.constant 1 : index
    %c0_211 = arith.constant 0 : index
    %c0_212 = arith.constant 0 : index
    %729 = vector.load %arg5[%c0_209, %c1_210, %c0_211, %c0_212] : memref<1x3x32x16xbf16, #tpu.memory_space<vmem>>, vector<1x1x32x16xbf16>
    %730 = vector.shape_cast %729 : vector<1x1x32x16xbf16> to vector<32x16xbf16>
    %731 = arith.truncf %728 : vector<16x32xf32> to vector<16x32xbf16>
    %cst_213 = arith.constant dense<0.000000e+00> : vector<32x32xf32>
    %732 = tpu.matmul %730, %731, %cst_213 {dimension_numbers = #tpu.dot_dimension_numbers<[1], [0], [0], [1], [0, 0, 1, 1], [], []>} : vector<32x16xbf16>, vector<16x32xbf16>, vector<32x32xf32> -> vector<32x32xf32>
    %733 = arith.addf %669, %732 : vector<32x32xf32>
    %c132 = arith.constant 132 : index
    %734 = memref.load %arg2[%c132] : memref<144xf32, #tpu.memory_space<smem>>
    %735 = vector.broadcast %734 : f32 to vector<16x16xf32>
    %736 = arith.mulf %735, %6 : vector<16x16xf32>
    %c133 = arith.constant 133 : index
    %737 = memref.load %arg2[%c133] : memref<144xf32, #tpu.memory_space<smem>>
    %738 = vector.broadcast %737 : f32 to vector<16x16xf32>
    %739 = arith.mulf %738, %9 : vector<16x16xf32>
    %740 = arith.addf %736, %739 : vector<16x16xf32>
    %c134 = arith.constant 134 : index
    %741 = memref.load %arg2[%c134] : memref<144xf32, #tpu.memory_space<smem>>
    %742 = vector.broadcast %741 : f32 to vector<16x16xf32>
    %743 = arith.mulf %742, %12 : vector<16x16xf32>
    %744 = arith.addf %740, %743 : vector<16x16xf32>
    %c135 = arith.constant 135 : index
    %745 = memref.load %arg2[%c135] : memref<144xf32, #tpu.memory_space<smem>>
    %746 = vector.broadcast %745 : f32 to vector<16x16xf32>
    %747 = arith.mulf %746, %15 : vector<16x16xf32>
    %748 = arith.addf %744, %747 : vector<16x16xf32>
    %749 = arith.truncf %748 : vector<16x16xf32> to vector<16x16xbf16>
    %c0_214 = arith.constant 0 : index
    %c0_215 = arith.constant 0 : index
    %c0_216 = arith.constant 0 : index
    %750 = vector.load %arg6[%c0_214, %c0_215, %c0_216] : memref<3x16x32xbf16, #tpu.memory_space<vmem>>, vector<1x16x32xbf16>
    %751 = vector.shape_cast %750 : vector<1x16x32xbf16> to vector<16x32xbf16>
    %cst_217 = arith.constant dense<0.000000e+00> : vector<16x32xf32>
    %752 = tpu.matmul %749, %751, %cst_217 {dimension_numbers = #tpu.dot_dimension_numbers<[1], [0], [0], [1], [0, 0, 1, 1], [], []>} : vector<16x16xbf16>, vector<16x32xbf16>, vector<16x32xf32> -> vector<16x32xf32>
    %c136 = arith.constant 136 : index
    %753 = memref.load %arg2[%c136] : memref<144xf32, #tpu.memory_space<smem>>
    %754 = vector.broadcast %753 : f32 to vector<16x16xf32>
    %755 = arith.mulf %754, %6 : vector<16x16xf32>
    %c137 = arith.constant 137 : index
    %756 = memref.load %arg2[%c137] : memref<144xf32, #tpu.memory_space<smem>>
    %757 = vector.broadcast %756 : f32 to vector<16x16xf32>
    %758 = arith.mulf %757, %9 : vector<16x16xf32>
    %759 = arith.addf %755, %758 : vector<16x16xf32>
    %c138 = arith.constant 138 : index
    %760 = memref.load %arg2[%c138] : memref<144xf32, #tpu.memory_space<smem>>
    %761 = vector.broadcast %760 : f32 to vector<16x16xf32>
    %762 = arith.mulf %761, %12 : vector<16x16xf32>
    %763 = arith.addf %759, %762 : vector<16x16xf32>
    %c139 = arith.constant 139 : index
    %764 = memref.load %arg2[%c139] : memref<144xf32, #tpu.memory_space<smem>>
    %765 = vector.broadcast %764 : f32 to vector<16x16xf32>
    %766 = arith.mulf %765, %15 : vector<16x16xf32>
    %767 = arith.addf %763, %766 : vector<16x16xf32>
    %768 = arith.truncf %767 : vector<16x16xf32> to vector<16x16xbf16>
    %c1_218 = arith.constant 1 : index
    %c0_219 = arith.constant 0 : index
    %c0_220 = arith.constant 0 : index
    %769 = vector.load %arg6[%c1_218, %c0_219, %c0_220] : memref<3x16x32xbf16, #tpu.memory_space<vmem>>, vector<1x16x32xbf16>
    %770 = vector.shape_cast %769 : vector<1x16x32xbf16> to vector<16x32xbf16>
    %cst_221 = arith.constant dense<0.000000e+00> : vector<16x32xf32>
    %771 = tpu.matmul %768, %770, %cst_221 {dimension_numbers = #tpu.dot_dimension_numbers<[1], [0], [0], [1], [0, 0, 1, 1], [], []>} : vector<16x16xbf16>, vector<16x32xbf16>, vector<16x32xf32> -> vector<16x32xf32>
    %772 = arith.addf %752, %771 : vector<16x32xf32>
    %c140 = arith.constant 140 : index
    %773 = memref.load %arg2[%c140] : memref<144xf32, #tpu.memory_space<smem>>
    %774 = vector.broadcast %773 : f32 to vector<16x16xf32>
    %775 = arith.mulf %774, %6 : vector<16x16xf32>
    %c141 = arith.constant 141 : index
    %776 = memref.load %arg2[%c141] : memref<144xf32, #tpu.memory_space<smem>>
    %777 = vector.broadcast %776 : f32 to vector<16x16xf32>
    %778 = arith.mulf %777, %9 : vector<16x16xf32>
    %779 = arith.addf %775, %778 : vector<16x16xf32>
    %c142 = arith.constant 142 : index
    %780 = memref.load %arg2[%c142] : memref<144xf32, #tpu.memory_space<smem>>
    %781 = vector.broadcast %780 : f32 to vector<16x16xf32>
    %782 = arith.mulf %781, %12 : vector<16x16xf32>
    %783 = arith.addf %779, %782 : vector<16x16xf32>
    %c143 = arith.constant 143 : index
    %784 = memref.load %arg2[%c143] : memref<144xf32, #tpu.memory_space<smem>>
    %785 = vector.broadcast %784 : f32 to vector<16x16xf32>
    %786 = arith.mulf %785, %15 : vector<16x16xf32>
    %787 = arith.addf %783, %786 : vector<16x16xf32>
    %788 = arith.truncf %787 : vector<16x16xf32> to vector<16x16xbf16>
    %c2_222 = arith.constant 2 : index
    %c0_223 = arith.constant 0 : index
    %c0_224 = arith.constant 0 : index
    %789 = vector.load %arg6[%c2_222, %c0_223, %c0_224] : memref<3x16x32xbf16, #tpu.memory_space<vmem>>, vector<1x16x32xbf16>
    %790 = vector.shape_cast %789 : vector<1x16x32xbf16> to vector<16x32xbf16>
    %cst_225 = arith.constant dense<0.000000e+00> : vector<16x32xf32>
    %791 = tpu.matmul %788, %790, %cst_225 {dimension_numbers = #tpu.dot_dimension_numbers<[1], [0], [0], [1], [0, 0, 1, 1], [], []>} : vector<16x16xbf16>, vector<16x32xbf16>, vector<16x32xf32> -> vector<16x32xf32>
    %792 = arith.addf %772, %791 : vector<16x32xf32>
    %c0_226 = arith.constant 0 : index
    %c2_227 = arith.constant 2 : index
    %c0_228 = arith.constant 0 : index
    %c0_229 = arith.constant 0 : index
    %793 = vector.load %arg5[%c0_226, %c2_227, %c0_228, %c0_229] : memref<1x3x32x16xbf16, #tpu.memory_space<vmem>>, vector<1x1x32x16xbf16>
    %794 = vector.shape_cast %793 : vector<1x1x32x16xbf16> to vector<32x16xbf16>
    %795 = arith.truncf %792 : vector<16x32xf32> to vector<16x32xbf16>
    %cst_230 = arith.constant dense<0.000000e+00> : vector<32x32xf32>
    %796 = tpu.matmul %794, %795, %cst_230 {dimension_numbers = #tpu.dot_dimension_numbers<[1], [0], [0], [1], [0, 0, 1, 1], [], []>} : vector<32x16xbf16>, vector<16x32xbf16>, vector<32x32xf32> -> vector<32x32xf32>
    %797 = arith.addf %733, %796 : vector<32x32xf32>
    %c3_231 = arith.constant 3 : index
    %798 = memref.load %arg3[%c3_231] : memref<4xf32, #tpu.memory_space<smem>>
    %799 = vector.broadcast %798 : f32 to vector<32x32xf32>
    %800 = arith.addf %797, %799 : vector<32x32xf32>
    %c0_232 = arith.constant 0 : index
    %c3_233 = arith.constant 3 : index
    %c0_234 = arith.constant 0 : index
    %c0_235 = arith.constant 0 : index
    %801 = vector.load %arg7[%c0_232, %c3_233, %c0_234, %c0_235] : memref<1x4x32x32xf32, #tpu.memory_space<vmem>>, vector<1x1x32x32xf32>
    %802 = vector.shape_cast %801 : vector<1x1x32x32xf32> to vector<32x32xf32>
    %803 = vector.shape_cast %800 : vector<32x32xf32> to vector<1x1x32x32xf32>
    tpu.vector_store %arg7[%c0_232, %c3_233, %c0_234, %c0_235], %803 {strides = array<i32>} : memref<1x4x32x32xf32, #tpu.memory_space<vmem>>, vector<1x1x32x32xf32>,
    return
  }
  func.func @transform_0(%arg0: i32, %arg1: i32, %arg2: memref<144xf32, #tpu.memory_space<smem>>, %arg3: memref<4xf32, #tpu.memory_space<smem>>) -> (i32, i32, i32, i32) {
    %c0_i32 = arith.constant 0 : i32
    %c0_i32_0 = arith.constant 0 : i32
    %c0_i32_1 = arith.constant 0 : i32
    %c0_i32_2 = arith.constant 0 : i32
    return %arg0, %c0_i32, %c0_i32_0, %c0_i32_1 : i32, i32, i32, i32
  }
  func.func @transform_1(%arg0: i32, %arg1: i32, %arg2: memref<144xf32, #tpu.memory_space<smem>>, %arg3: memref<4xf32, #tpu.memory_space<smem>>) -> (i32, i32, i32, i32) {
    %c0_i32 = arith.constant 0 : i32
    %c0_i32_0 = arith.constant 0 : i32
    %c0_i32_1 = arith.constant 0 : i32
    %c0_i32_2 = arith.constant 0 : i32
    return %arg1, %c0_i32, %c0_i32_0, %c0_i32_1 : i32, i32, i32, i32
  }
  func.func @transform_2(%arg0: i32, %arg1: i32, %arg2: memref<144xf32, #tpu.memory_space<smem>>, %arg3: memref<4xf32, #tpu.memory_space<smem>>) -> (i32, i32, i32) {
    %c0_i32 = arith.constant 0 : i32
    %c0_i32_0 = arith.constant 0 : i32
    %c0_i32_1 = arith.constant 0 : i32
    %c0_i32_2 = arith.constant 0 : i32
    return %c0_i32, %c0_i32_0, %c0_i32_1 : i32, i32, i32
  }
  func.func @transform_3(%arg0: i32, %arg1: i32, %arg2: memref<144xf32, #tpu.memory_space<smem>>, %arg3: memref<4xf32, #tpu.memory_space<smem>>) -> (i32, i32, i32, i32) {
    %c0_i32 = arith.constant 0 : i32
    %c0_i32_0 = arith.constant 0 : i32
    %c0_i32_1 = arith.constant 0 : i32
    return %arg0, %c0_i32, %arg1, %c0_i32_0 : i32, i32, i32, i32
  }
}

</mosaic_0001>

<llo_original>
// kernel: upsample_forward.1
$region0: #{upsample_forward.1}
  #allocation0 [shape = 'u32[]', space=smem, size = 0x4, offset = 0x4, fixed_abs, tag = 'smem constant byte address 0x4 - core index']
  #allocation1 [shape = 'u32[72,128]{1,0:T(1,128)}', space=vmem, size = 0x9000, scoped, tag = 'internal scratch']
  #allocation2 [shape = 's32[1]{0}', space=sflag, size = 0x4, scoped, tag = 'scoped memory for upsample_forward.1']
  #allocation3 [shape = 'u8[1024]{0}', space=smem, size = 0x400, scoped, tag = 'prefetched SMEM operand 0']
  #allocation4 [shape = 'u8[512]{0}', space=smem, size = 0x200, scoped, tag = 'prefetched SMEM operand 1']
  %s0 = inlined_call_operand.vmem [shape: f32[144], index: 0, kind: input, shape index: {}]
  %s1 = inlined_call_operand.vmem [shape: f32[4], index: 1, kind: input, shape index: {}]
  %s2 = inlined_call_operand.vmem [shape: f32[2,4,16,16], index: 2, kind: input, shape index: {}]
  %s3 = inlined_call_operand.hbm [shape: bf16[1,3,32,16], index: 3, kind: input, shape index: {}]
  %s4 = inlined_call_operand.hbm [shape: bf16[3,16,32], index: 4, kind: input, shape index: {}]
  %s5 = inlined_call_operand.hbm [shape: f32[2,4,32,32], index: 5, kind: output, shape index: {}]
  %s6 = sld [smem:[#allocation0]]
  $region53: #{upsample_forward.1} parent=0
    _
  %s8 = ssub.s32 1, %s6
  %s9 = scalar_select 0, %s8, %s6
  %s11 = sshll.u32 %s0, 4
  %s12 = int_to_ptr.vmem [resolvable:$true] %s11
  %14 = dma.vmem_to_smem %s12, 32, [#allocation3], [#allocation2]
  %s16 = sshll.u32 %s1, 4
  %s17 = int_to_ptr.vmem [resolvable:$true] %s16
  %19 = dma.vmem_to_smem %s17, 16, [#allocation4], [#allocation2]
  %21 = dma.done [#allocation2], 48
  %22 = sfence
  $region1: #{upsample_forward.1} parent=0
    #allocation5 [shape = 'u8[24576]{0}', space=vmem, size = 0x6000, scoped, tag = 'input window, operand 3, single buffered']
    #allocation6 [shape = 's32[2]{0}', space=sflag, size = 0x8, scoped, tag = 'scoped memory for upsample_forward.1']
    #allocation7 [shape = 's32[2]{0}', space=sflag, size = 0x8, scoped, tag = 'scoped memory for upsample_forward.1']
    #allocation8 [shape = 'u8[12288]{0}', space=vmem, size = 0x3000, scoped, tag = 'input window, operand 4, single buffered']
    #allocation9 [shape = 's32[1]{0}', space=sflag, size = 0x4, scoped, tag = 'scoped memory for upsample_forward.1']
    #allocation10 [shape = 'u8[131072]{0}', space=vmem, size = 0x20000, scoped, tag = 'output window, operand 0']
    %23 = vsyncpa [#allocation6], 0
    %24 = vsyncpa [#allocation9], 0
    %25 = vsyncpa [#allocation7], 0
    %s26 = scalar_lea.sflag [#allocation7], 1
    %27 = vsyncpa %s26, 0
    loop: start=0, step=1, limit=4
    $region2: #{upsample_forward.1} parent=1 // loop_pre_header
      _
    $region3: #{upsample_forward.1} parent=1 // loop_header
      %s29 = sphi 0, %s33
      %p30 = scmp.ge.s32.totalorder %s29, 4
      %s36 = sphi 0, %s48
      %s37 = sphi 0, %s44
      %s38 = sphi 0, %s36
      %s39 = sphi 0, %s37
      %s40 = sphi 0, %s38
      %s41 = sphi 0, %s39
      %s51 = sphi 0, %s53
      %s54 = sphi 0, %s51
      %s55 = sphi 0, %s54
      %s71 = sphi 0, %s55
      %s77 = sphi 0, %s79
      %s80 = sphi 0, %s77
      %s81 = sphi 0, %s80
      %s97 = sphi 0, %s81
      %s101 = sphi 0, %s101
      %s103 = sphi 0, %s101
      %s104 = sphi 0, %s103
      %s118 = sphi 0, %s104
      %s126 = sphi 0, %s128
      %s129 = sphi 0, %s126
      %s130 = sphi 0, %s129
      %s146 = sphi 0, %s130
    $region4: #{upsample_forward.1} parent=1 // loop_header_branch
      %32 = sbr.rel (%p30) target = $region8
    $region5: #{upsample_forward.1} parent=1 // loop_body
      %s34 = ssub.s32 %s29, 1
      %s35 = ssub.s32 %s29, 2
      %s42 = sadd.s32 1, %s37
      %p43 = scmp.ge.s32.totalorder %s42, 1
      %s44 = scalar_select %p43, 0, %s42
      %s45 = sadd.s32 1, %s36
      %s46 = scalar_select %p43, %s45, %s36
      %p47 = scmp.ge.s32.totalorder %s46, 2
      %s48 = scalar_select %p47, 0, %s46
      %s49 = ssub.s32 %s36, %s48
      %p50 = scmp.eq.s32.totalorder %s49, 0
      %s52 = sadd.s32 %s51, 1
      %s53 = scalar_select %p50, %s51, %s52
      %p56 = pneg %p50
      %p57 = scmp.eq.s32.totalorder %s29, 1
      %p58 = por %p56, %p57
      %p59 = scmp.ne.s32.totalorder %s51, %s54
      %p60 = scmp.eq.s32.totalorder %s29, 0
      %p61 = por %p59, %p60
      %p62 = scmp.ne.s32.totalorder %s51, %s54
      %p63 = scmp.eq.s32.totalorder %s34, 1
      %p64 = por %p62, %p63
      %p65 = scmp.ne.s32.totalorder %s54, %s55
      %p66 = scmp.eq.s32.totalorder %s34, 0
      %p67 = por %p65, %p66
      %p68 = scmp.ne.s32.totalorder %s54, %s55
      %p69 = scmp.eq.s32.totalorder %s35, 1
      %p70 = por %p68, %p69
      %p72 = scmp.ne.s32.totalorder %s55, %s71
      %p73 = scmp.eq.s32.totalorder %s35, 0
      %p74 = por %p72, %p73
      %s75 = ssub.s32 %s37, %s44
      %p76 = scmp.eq.s32.totalorder %s75, 0
      %s78 = sadd.s32 %s77, 1
      %s79 = scalar_select %p76, %s77, %s78
      %p82 = pneg %p76
      %p83 = scmp.eq.s32.totalorder %s29, 1
      %p84 = por %p82, %p83
      %p85 = scmp.ne.s32.totalorder %s77, %s80
      %p86 = scmp.eq.s32.totalorder %s29, 0
      %p87 = por %p85, %p86
      %p88 = scmp.ne.s32.totalorder %s77, %s80
      %p89 = scmp.eq.s32.totalorder %s34, 1
      %p90 = por %p88, %p89
      %p91 = scmp.ne.s32.totalorder %s80, %s81
      %p92 = scmp.eq.s32.totalorder %s34, 0
      %p93 = por %p91, %p92
      %p94 = scmp.ne.s32.totalorder %s80, %s81
      %p95 = scmp.eq.s32.totalorder %s35, 1
      %p96 = por %p94, %p95
      %p98 = scmp.ne.s32.totalorder %s81, %s97
      %p99 = scmp.eq.s32.totalorder %s35, 0
      %p100 = por %p98, %p99
      %s102 = sadd.s32 %s101, 1
      %p105 = scmp.eq.s32.totalorder %s29, 1
      %p106 = scmp.ne.s32.totalorder %s101, %s103
      %p107 = scmp.eq.s32.totalorder %s29, 0
      %p108 = por %p106, %p107
      %p109 = scmp.ne.s32.totalorder %s101, %s103
      %p110 = scmp.eq.s32.totalorder %s34, 1
      %p111 = por %p109, %p110
      %p112 = scmp.ne.s32.totalorder %s103, %s104
      %p113 = scmp.eq.s32.totalorder %s34, 0
      %p114 = por %p112, %p113
      %p115 = scmp.ne.s32.totalorder %s103, %s104
      %p116 = scmp.eq.s32.totalorder %s35, 1
      %p117 = por %p115, %p116
      %p119 = scmp.ne.s32.totalorder %s104, %s118
      %p120 = scmp.eq.s32.totalorder %s35, 0
      %p121 = por %p119, %p120
      %s122 = ssub.s32 %s36, %s48
      %s123 = ssub.s32 %s37, %s44
      %s124 = sor.u32 %s122, %s123
      %p125 = scmp.eq.s32.totalorder %s124, 0
      %s127 = sadd.s32 %s126, 1
      %s128 = scalar_select %p125, %s126, %s127
      %p131 = pneg %p125
      %p132 = scmp.eq.s32.totalorder %s29, 1
      %p133 = por %p131, %p132
      %p134 = scmp.ne.s32.totalorder %s126, %s129
      %p135 = scmp.eq.s32.totalorder %s29, 0
      %p136 = por %p134, %p135
      %p137 = scmp.ne.s32.totalorder %s126, %s129
      %p138 = scmp.eq.s32.totalorder %s34, 1
      %p139 = por %p137, %p138
      %p140 = scmp.ne.s32.totalorder %s129, %s130
      %p141 = scmp.eq.s32.totalorder %s34, 0
      %p142 = por %p140, %p141
      %p143 = scmp.ne.s32.totalorder %s129, %s130
      %p144 = scmp.eq.s32.totalorder %s35, 1
      %p145 = por %p143, %p144
      %p147 = scmp.ne.s32.totalorder %s130, %s146
      %p148 = scmp.eq.s32.totalorder %s35, 0
      %p149 = por %p147, %p148
      %p150 = scmp.le.s32.totalorder 1, %s29
      %p151 = scmp.lt.s32.totalorder %s29, 3
      %p152 = pnand %p150, %p151
      %p153 = pneg %p152
      // Predicated region
      $region9: #{upsample_forward.1} parent=5 // pred_check
        _
      $region10: #{upsample_forward.1} parent=5 // pred_check_branch
        %155 = sbr.rel (%p152) target = $region12
      $region11: #{upsample_forward.1} parent=5 // pred_region
        %s156 = ssub.s32 %s29, 1
        // Predicated region
        $region13: #{upsample_forward.1} parent=11 // pred_check
          %p157 = pneg %p93
        $region14: #{upsample_forward.1} parent=11 // pred_check_branch
          %159 = sbr.rel (%p157) target = $region16
        $region15: #{upsample_forward.1} parent=11 // pred_region
          %161 = vsyncadd [#allocation6], 0
          %s162 = smul.addr %s39, 12
          %s163 = smul.addr %s162, 4
          %s164 = scalar_lea.hbm %s3, %s163
          %s165 = sshll.u32 %s164, 4
          %s166 = int_to_ptr.hbm [resolvable:$true] %s165
          %s167 = sshll.u32 [#allocation5], 4
          %s168 = int_to_ptr.vmem [resolvable:$true] %s167
          %173 = dma.hbm_to_vmem [thread:$0]  %s166, 768, %s168, [#allocation6], 64, 64, 4
        $region16: #{upsample_forward.1} parent=11 // pred_fallthru
          _
        // Predicated region
        $region17: #{upsample_forward.1} parent=11 // pred_check
          %p174 = pneg %p114
        $region18: #{upsample_forward.1} parent=11 // pred_check_branch
          %176 = sbr.rel (%p174) target = $region20
        $region19: #{upsample_forward.1} parent=11 // pred_region
          %178 = vsyncadd [#allocation9], 0
          %s179 = sshll.u32 %s4, 4
          %s180 = int_to_ptr.hbm [resolvable:$true] %s179
          %s181 = sshll.u32 [#allocation8], 4
          %s182 = int_to_ptr.vmem [resolvable:$true] %s181
          %187 = dma.hbm_to_vmem [thread:$0]  %s180, 384, %s182, [#allocation9], 64, 64, 4
        $region20: #{upsample_forward.1} parent=11 // pred_fallthru
          _
      $region12: #{upsample_forward.1} parent=5 // pred_fallthru
        _
      %p188 = scmp.lt.s32.totalorder %s29, 2
      // Predicated region
      $region21: #{upsample_forward.1} parent=5 // pred_check
        %p189 = pneg %p188
      $region22: #{upsample_forward.1} parent=5 // pred_check_branch
        %191 = sbr.rel (%p189) target = $region24
      $region23: #{upsample_forward.1} parent=5 // pred_region
        // Predicated region
        $region25: #{upsample_forward.1} parent=23 // pred_check
          %p192 = pneg %p61
        $region26: #{upsample_forward.1} parent=23 // pred_check_branch
          %194 = sbr.rel (%p192) target = $region28
        $region27: #{upsample_forward.1} parent=23 // pred_region
          %p195 = scmp.lt.s32.totalorder %s36, 1
          %s196 = scalar_select %p195, %s36, 1
          %s197 = smul.addr %s196, 8
          %s198 = smul.addr %s197, 8
          %s199 = scalar_lea.vmem %s2, %s198
        $region28: #{upsample_forward.1} parent=23 // pred_fallthru
          _
      $region24: #{upsample_forward.1} parent=5 // pred_fallthru
        _
      %p200 = scmp.le.s32.totalorder 1, %s29
      %p201 = scmp.lt.s32.totalorder %s29, 3
      %p202 = pnand %p200, %p201
      %p203 = pneg %p202
      // Predicated region
      $region29: #{upsample_forward.1} parent=5 // pred_check
        _
      $region30: #{upsample_forward.1} parent=5 // pred_check_branch
        %205 = sbr.rel (%p202) target = $region32
      $region31: #{upsample_forward.1} parent=5 // pred_region
        %s206 = ssub.s32 %s29, 1
        // Predicated region
        $region33: #{upsample_forward.1} parent=31 // pred_check
          %p207 = pneg %p93
        $region34: #{upsample_forward.1} parent=31 // pred_check_branch
          %209 = sbr.rel (%p207) target = $region36
        $region35: #{upsample_forward.1} parent=31 // pred_region
          %211 = dma.done [#allocation6], 768
        $region36: #{upsample_forward.1} parent=31 // pred_fallthru
          _
        // Predicated region
        $region37: #{upsample_forward.1} parent=31 // pred_check
          %p212 = pneg %p114
        $region38: #{upsample_forward.1} parent=31 // pred_check_branch
          %214 = sbr.rel (%p212) target = $region40
        $region39: #{upsample_forward.1} parent=31 // pred_region
          %216 = dma.done [#allocation9], 384
        $region40: #{upsample_forward.1} parent=31 // pred_fallthru
          _
        %p217 = scmp.lt.s32.totalorder %s38, 1
        %s218 = scalar_select %p217, %s38, 1
        %s219 = smul.addr %s218, 8
        %s220 = smul.addr %s219, 8
        %s221 = scalar_lea.vmem %s2, %s220
        %p222 = pneg %p67
        %p223 = pneg %p64
        %p224 = pneg %p93
        %p225 = pneg %p90
        %p226 = pneg %p114
        %p227 = pneg %p111
        %p228 = pneg %p142
        %p229 = pneg %p139
        %s230 = sand.u32 %s129, 1
        %s231 = scalar_lea.sflag [#allocation7], %s230
        %s232 = sand.u32 %s129, 1
        %s233 = smul.addr %s232, 128
        %s234 = scalar_lea.vmem [#allocation10], %s233
        %p235 = scmp.lt.s32.totalorder %s38, 1
        %s236 = scalar_select %p235, %s38, 1
        %s237 = smul.addr %s236, 8
        %s238 = smul.addr %s237, 8
        %s239 = scalar_lea.vmem %s2, %s238
        %s240 = smul.u32 4, %s39
        %s242 = smul.u32 %s39, 16
        %s243 = ssub.s32 %s242, 1
        %p244 = scmp.lt.s32.totalorder %s243, 0
        %s245 = scalar_select %p244, %s243, 0
        %p246 = scmp.gt.s32.totalorder %s245, 0
        %s247 = scalar_select %p246, %s245, 0
        %s248 = scalar_lea.vmem %s239, %s247
        %v249 = vld [vmem:[%s248] sm:$0xff]
        %v250 = vld [vmem:[%s248 + $0x8] sm:$0xff]
        %s251 = sadd.s32 %s247, 16
        %s252 = scalar_lea.vmem %s239, %s251
        %v253 = vld [vmem:[%s252] sm:$0xff]
        %v254 = vld [vmem:[%s252 + $0x8] sm:$0xff]
        %s255 = sadd.s32 %s247, 32
        %s256 = scalar_lea.vmem %s239, %s255
        %v257 = vld [vmem:[%s256] sm:$0xff]
        %v258 = vld [vmem:[%s256 + $0x8] sm:$0xff]
        %s259 = sadd.s32 %s247, 48
        %s260 = scalar_lea.vmem %s239, %s259
        %v261 = vld [vmem:[%s260] sm:$0xff]
        %v262 = vld [vmem:[%s260 + $0x8] sm:$0xff]
        %s263 = sld [smem:[#allocation3]]
        %v264 = vstv %s263
        %v265 = vmul.f32 %v264, %v249
        %v266 = vmul.f32 %v264, %v250
        %s267 = sld [smem:[#allocation3 + $0x1]]
        %v268 = vstv %s267
        %v269 = vmul.f32 %v268, %v253
        %v270 = vmul.f32 %v268, %v254
        %v271 = vadd.f32 %v265, %v269
        %v272 = vadd.f32 %v266, %v270
        %s273 = sld [smem:[#allocation3 + $0x2]]
        %v274 = vstv %s273
        %v275 = vmul.f32 %v274, %v257
        %v276 = vmul.f32 %v274, %v258
        %v277 = vadd.f32 %v271, %v275
        %v278 = vadd.f32 %v272, %v276
        %s279 = sld [smem:[#allocation3 + $0x3]]
        %v280 = vstv %s279
        %v281 = vmul.f32 %v280, %v261
        %v282 = vmul.f32 %v280, %v262
        %v283 = vadd.f32 %v277, %v281
        %v284 = vadd.f32 %v278, %v282
        %v285 = vpack.c.bf16 %v284, %v283
        %v286 = vld [vmem:[#allocation8] sm:$0xf]
        %v287 = vld [vmem:[#allocation8 + $0x4] sm:$0xf]
        %s288 = sld [smem:[#allocation3 + $0x4]]
        %v289 = vstv %s288
        %v290 = vmul.f32 %v289, %v249
        %v291 = vmul.f32 %v289, %v250
        %s292 = sld [smem:[#allocation3 + $0x5]]
        %v293 = vstv %s292
        %v294 = vmul.f32 %v293, %v253
        %v295 = vmul.f32 %v293, %v254
        %v296 = vadd.f32 %v290, %v294
        %v297 = vadd.f32 %v291, %v295
        %s298 = sld [smem:[#allocation3 + $0x6]]
        %v299 = vstv %s298
        %v300 = vmul.f32 %v299, %v257
        %v301 = vmul.f32 %v299, %v258
        %v302 = vadd.f32 %v296, %v300
        %v303 = vadd.f32 %v297, %v301
        %s304 = sld [smem:[#allocation3 + $0x7]]
        %v305 = vstv %s304
        %v306 = vmul.f32 %v305, %v261
        %v307 = vmul.f32 %v305, %v262
        %v308 = vadd.f32 %v302, %v306
        %v309 = vadd.f32 %v303, %v307
        %v310 = vpack.c.bf16 %v309, %v308
        %s311 = scalar_lea.vmem [#allocation8], 8
        %v312 = vld [vmem:[%s311] sm:$0xf]
        %v313 = vld [vmem:[%s311 + $0x4] sm:$0xf]
        %v316 = vunpack.c.l.b16 %v312
        %v317 = vunpack.c.l.b16 %v313
        %v318 = vpack.c.b16 %v317, %v316
        %vm320 = vcmask 130048
        %v322 = vsel %vm320, %v310, 0
        %324 = vmatpush.bf16.msra.mxu0 0
        %325 = vmatpush.bf16.msra.mxu0 0
        %326 = vmatpush.bf16.msra.mxu0 0
        %327 = vmatpush.bf16.msra.mxu0 0
        %328 = vmatpush.bf16.msra.mxu0 0
        %329 = vmatpush.bf16.msra.mxu0 0
        %330 = vmatpush.bf16.msra.mxu0 0
        %331 = vmatpush.bf16.msra.mxu0 %v318
        %332 = vmatmul.bf16.gmra.mxu0 %v322
        %v333 = vpop.f32.mrf.mxu0
        %v334 = vadd.f32 0.0, %v333
        %v335 = vpop.f32.mrf.mxu0
        %v336 = vadd.f32 0.0, %v335
        %337 = vdwg.mxu0
        %v340 = vunpack.c.l.b16 %v286
        %v341 = vunpack.c.l.b16 %v287
        %v342 = vpack.c.b16 %v341, %v340
        %v345 = vsel %vm320, %v285, 0
        %347 = vmatpush.bf16.msra.mxu0 0
        %348 = vmatpush.bf16.msra.mxu0 0
        %349 = vmatpush.bf16.msra.mxu0 0
        %350 = vmatpush.bf16.msra.mxu0 0
        %351 = vmatpush.bf16.msra.mxu0 0
        %352 = vmatpush.bf16.msra.mxu0 0
        %353 = vmatpush.bf16.msra.mxu0 0
        %354 = vmatpush.bf16.msra.mxu0 %v342
        %355 = vmatmul.bf16.gmra.mxu0 %v345
        %v356 = vpop.f32.mrf.mxu0
        %v357 = vadd.f32 %v334, %v356
        %v358 = vpop.f32.mrf.mxu0
        %v359 = vadd.f32 %v336, %v358
        %360 = vdwg.mxu0
        %s361 = sld [smem:[#allocation3 + $0x8]]
        %v362 = vstv %s361
        %v363 = vmul.f32 %v362, %v249
        %v364 = vmul.f32 %v362, %v250
        %s365 = sld [smem:[#allocation3 + $0x9]]
        %v366 = vstv %s365
        %v367 = vmul.f32 %v366, %v253
        %v368 = vmul.f32 %v366, %v254
        %v369 = vadd.f32 %v363, %v367
        %v370 = vadd.f32 %v364, %v368
        %s371 = sld [smem:[#allocation3 + $0xa]]
        %v372 = vstv %s371
        %v373 = vmul.f32 %v372, %v257
        %v374 = vmul.f32 %v372, %v258
        %v375 = vadd.f32 %v369, %v373
        %v376 = vadd.f32 %v370, %v374
        %s377 = sld [smem:[#allocation3 + $0xb]]
        %v378 = vstv %s377
        %v379 = vmul.f32 %v378, %v261
        %v380 = vmul.f32 %v378, %v262
        %v381 = vadd.f32 %v375, %v379
        %v382 = vadd.f32 %v376, %v380
        %v383 = vpack.c.bf16 %v382, %v381
        %s384 = scalar_lea.vmem [#allocation8], 16
        %v385 = vld [vmem:[%s384] sm:$0xf]
        %v386 = vld [vmem:[%s384 + $0x4] sm:$0xf]
        %v389 = vunpack.c.l.b16 %v385
        %v390 = vunpack.c.l.b16 %v386
        %v391 = vpack.c.b16 %v390, %v389
        %v394 = vsel %vm320, %v383, 0
        %396 = vmatpush.bf16.msra.mxu0 0
        %397 = vmatpush.bf16.msra.mxu0 0
        %398 = vmatpush.bf16.msra.mxu0 0
        %399 = vmatpush.bf16.msra.mxu0 0
        %400 = vmatpush.bf16.msra.mxu0 0
        %401 = vmatpush.bf16.msra.mxu0 0
        %402 = vmatpush.bf16.msra.mxu0 0
        %403 = vmatpush.bf16.msra.mxu0 %v391
        %404 = vmatmul.bf16.gmra.mxu0 %v394
        %v405 = vpop.f32.mrf.mxu0
        %v406 = vadd.f32 0.0, %v405
        %v407 = vpop.f32.mrf.mxu0
        %v408 = vadd.f32 0.0, %v407
        %409 = vdwg.mxu0
        %v410 = vadd.f32 %v357, %v406
        %v411 = vadd.f32 %v359, %v408
        %v412 = vld [vmem:[#allocation5] sm:$0xf]
        %v413 = vld [vmem:[#allocation5 + $0x4] sm:$0xf]
        %v414 = vld [vmem:[#allocation5 + $0x8] sm:$0xf]
        %v415 = vld [vmem:[#allocation5 + $0xc] sm:$0xf]
        %v416 = vpack.c.bf16 %v411, %v410
        %s417 = sld [smem:[#allocation3 + $0xc]]
        %v418 = vstv %s417
        %v419 = vmul.f32 %v418, %v249
        %v420 = vmul.f32 %v418, %v250
        %s421 = sld [smem:[#allocation3 + $0xd]]
        %v422 = vstv %s421
        %v423 = vmul.f32 %v422, %v253
        %v424 = vmul.f32 %v422, %v254
        %v425 = vadd.f32 %v419, %v423
        %v426 = vadd.f32 %v420, %v424
        %s427 = sld [smem:[#allocation3 + $0xe]]
        %v428 = vstv %s427
        %v429 = vmul.f32 %v428, %v257
        %v430 = vmul.f32 %v428, %v258
        %v431 = vadd.f32 %v425, %v429
        %v432 = vadd.f32 %v426, %v430
        %s433 = sld [smem:[#allocation3 + $0xf]]
        %v434 = vstv %s433
        %v435 = vmul.f32 %v434, %v261
        %v436 = vmul.f32 %v434, %v262
        %v437 = vadd.f32 %v431, %v435
        %v438 = vadd.f32 %v432, %v436
        %v439 = vpack.c.bf16 %v438, %v437
        %s440 = sld [smem:[#allocation3 + $0x10]]
        %v441 = vstv %s440
        %v442 = vmul.f32 %v441, %v249
        %v443 = vmul.f32 %v441, %v250
        %s444 = sld [smem:[#allocation3 + $0x11]]
        %v445 = vstv %s444
        %v446 = vmul.f32 %v445, %v253
        %v447 = vmul.f32 %v445, %v254
        %v448 = vadd.f32 %v442, %v446
        %v449 = vadd.f32 %v443, %v447
        %s450 = sld [smem:[#allocation3 + $0x12]]
        %v451 = vstv %s450
        %v452 = vmul.f32 %v451, %v257
        %v453 = vmul.f32 %v451, %v258
        %v454 = vadd.f32 %v448, %v452
        %v455 = vadd.f32 %v449, %v453
        %s456 = sld [smem:[#allocation3 + $0x13]]
        %v457 = vstv %s456
        %v458 = vmul.f32 %v457, %v261
        %v459 = vmul.f32 %v457, %v262
        %v460 = vadd.f32 %v454, %v458
        %v461 = vadd.f32 %v455, %v459
        %v462 = vpack.c.bf16 %v461, %v460
        %v464 = vsel %vm320, %v462, 0
        %466 = vmatpush.bf16.msra.mxu0 0
        %467 = vmatpush.bf16.msra.mxu0 0
        %468 = vmatpush.bf16.msra.mxu0 0
        %469 = vmatpush.bf16.msra.mxu0 0
        %470 = vmatpush.bf16.msra.mxu0 0
        %471 = vmatpush.bf16.msra.mxu0 0
        %472 = vmatpush.bf16.msra.mxu0 0
        %473 = vmatpush.bf16.msra.mxu0 %v318
        %474 = vmatmul.bf16.gmra.mxu0 %v464
        %v475 = vpop.f32.mrf.mxu0
        %v476 = vadd.f32 0.0, %v475
        %v477 = vpop.f32.mrf.mxu0
        %v478 = vadd.f32 0.0, %v477
        %479 = vdwg.mxu0
        %v481 = vsel %vm320, %v439, 0
        %483 = vmatpush.bf16.msra.mxu0 0
        %484 = vmatpush.bf16.msra.mxu0 0
        %485 = vmatpush.bf16.msra.mxu0 0
        %486 = vmatpush.bf16.msra.mxu0 0
        %487 = vmatpush.bf16.msra.mxu0 0
        %488 = vmatpush.bf16.msra.mxu0 0
        %489 = vmatpush.bf16.msra.mxu0 0
        %490 = vmatpush.bf16.msra.mxu0 %v342
        %491 = vmatmul.bf16.gmra.mxu0 %v481
        %v492 = vpop.f32.mrf.mxu0
        %v493 = vadd.f32 %v476, %v492
        %v494 = vpop.f32.mrf.mxu0
        %v495 = vadd.f32 %v478, %v494
        %496 = vdwg.mxu0
        %s497 = sld [smem:[#allocation3 + $0x14]]
        %v498 = vstv %s497
        %v499 = vmul.f32 %v498, %v249
        %v500 = vmul.f32 %v498, %v250
        %s501 = sld [smem:[#allocation3 + $0x15]]
        %v502 = vstv %s501
        %v503 = vmul.f32 %v502, %v253
        %v504 = vmul.f32 %v502, %v254
        %v505 = vadd.f32 %v499, %v503
        %v506 = vadd.f32 %v500, %v504
        %s507 = sld [smem:[#allocation3 + $0x16]]
        %v508 = vstv %s507
        %v509 = vmul.f32 %v508, %v257
        %v510 = vmul.f32 %v508, %v258
        %v511 = vadd.f32 %v505, %v509
        %v512 = vadd.f32 %v506, %v510
        %s513 = sld [smem:[#allocation3 + $0x17]]
        %v514 = vstv %s513
        %v515 = vmul.f32 %v514, %v261
        %v516 = vmul.f32 %v514, %v262
        %v517 = vadd.f32 %v511, %v515
        %v518 = vadd.f32 %v512, %v516
        %v519 = vpack.c.bf16 %v518, %v517
        %v521 = vsel %vm320, %v519, 0
        %523 = vmatpush.bf16.msra.mxu0 0
        %524 = vmatpush.bf16.msra.mxu0 0
        %525 = vmatpush.bf16.msra.mxu0 0
        %526 = vmatpush.bf16.msra.mxu0 0
        %527 = vmatpush.bf16.msra.mxu0 0
        %528 = vmatpush.bf16.msra.mxu0 0
        %529 = vmatpush.bf16.msra.mxu0 0
        %530 = vmatpush.bf16.msra.mxu0 %v391
        %531 = vmatmul.bf16.gmra.mxu0 %v521
        %v532 = vpop.f32.mrf.mxu0
        %v533 = vadd.f32 0.0, %v532
        %v534 = vpop.f32.mrf.mxu0
        %v535 = vadd.f32 0.0, %v534
        %536 = vdwg.mxu0
        %v537 = vadd.f32 %v493, %v533
        %v538 = vadd.f32 %v495, %v535
        %s539 = scalar_lea.vmem [#allocation5], 16
        %v540 = vld [vmem:[%s539] sm:$0xf]
        %v541 = vld [vmem:[%s539 + $0x4] sm:$0xf]
        %v542 = vld [vmem:[%s539 + $0x8] sm:$0xf]
        %v543 = vld [vmem:[%s539 + $0xc] sm:$0xf]
        %v544 = vpack.c.bf16 %v538, %v537
        %v549 = vunpack.c.l.b16 %v540
        %v550 = vunpack.c.l.b16 %v541
        %v551 = vunpack.c.l.b16 %v542
        %v552 = vunpack.c.l.b16 %v543
        %v553 = vpack.c.b16 %v550, %v549
        %v554 = vpack.c.b16 %v552, %v551
        %v556 = vsel %vm320, %v553, 0
        %v559 = vsel %vm320, %v554, 0
        %561 = vmatpush.bf16.msra.mxu0 0
        %562 = vmatpush.bf16.msra.mxu0 0
        %563 = vmatpush.bf16.msra.mxu0 0
        %564 = vmatpush.bf16.msra.mxu0 0
        %565 = vmatpush.bf16.msra.mxu0 0
        %566 = vmatpush.bf16.msra.mxu0 0
        %567 = vmatpush.bf16.msra.mxu0 0
        %568 = vmatpush.bf16.msra.mxu0 %v544
        %569 = vmatmul.bf16.gmra.mxu0 %v556
        %v570 = vpop.f32.mrf.mxu0
        %v571 = vadd.f32 0.0, %v570
        %v572 = vpop.f32.mrf.mxu0
        %v573 = vadd.f32 0.0, %v572
        %574 = vmatmul.bf16.gmra.mxu0 %v559
        %v575 = vpop.f32.mrf.mxu0
        %v576 = vadd.f32 0.0, %v575
        %v577 = vpop.f32.mrf.mxu0
        %v578 = vadd.f32 0.0, %v577
        %579 = vdwg.mxu0
        %v584 = vunpack.c.l.b16 %v412
        %v585 = vunpack.c.l.b16 %v413
        %v586 = vunpack.c.l.b16 %v414
        %v587 = vunpack.c.l.b16 %v415
        %v588 = vpack.c.b16 %v585, %v584
        %v589 = vpack.c.b16 %v587, %v586
        %v591 = vsel %vm320, %v588, 0
        %v594 = vsel %vm320, %v589, 0
        %596 = vmatpush.bf16.msra.mxu0 0
        %597 = vmatpush.bf16.msra.mxu0 0
        %598 = vmatpush.bf16.msra.mxu0 0
        %599 = vmatpush.bf16.msra.mxu0 0
        %600 = vmatpush.bf16.msra.mxu0 0
        %601 = vmatpush.bf16.msra.mxu0 0
        %602 = vmatpush.bf16.msra.mxu0 0
        %603 = vmatpush.bf16.msra.mxu0 %v416
        %604 = vmatmul.bf16.gmra.mxu0 %v591
        %v605 = vpop.f32.mrf.mxu0
        %v606 = vadd.f32 %v571, %v605
        %v607 = vpop.f32.mrf.mxu0
        %v608 = vadd.f32 %v573, %v607
        %609 = vmatmul.bf16.gmra.mxu0 %v594
        %v610 = vpop.f32.mrf.mxu0
        %v611 = vadd.f32 %v576, %v610
        %v612 = vpop.f32.mrf.mxu0
        %v613 = vadd.f32 %v578, %v612
        %614 = vdwg.mxu0
        %s615 = sld [smem:[#allocation3 + $0x18]]
        %v616 = vstv %s615
        %v617 = vmul.f32 %v616, %v249
        %v618 = vmul.f32 %v616, %v250
        %s619 = sld [smem:[#allocation3 + $0x19]]
        %v620 = vstv %s619
        %v621 = vmul.f32 %v620, %v253
        %v622 = vmul.f32 %v620, %v254
        %v623 = vadd.f32 %v617, %v621
        %v624 = vadd.f32 %v618, %v622
        %s625 = sld [smem:[#allocation3 + $0x1a]]
        %v626 = vstv %s625
        %v627 = vmul.f32 %v626, %v257
        %v628 = vmul.f32 %v626, %v258
        %v629 = vadd.f32 %v623, %v627
        %v630 = vadd.f32 %v624, %v628
        %s631 = sld [smem:[#allocation3 + $0x1b]]
        %v632 = vstv %s631
        %v633 = vmul.f32 %v632, %v261
        %v634 = vmul.f32 %v632, %v262
        %v635 = vadd.f32 %v629, %v633
        %v636 = vadd.f32 %v630, %v634
        %v637 = vpack.c.bf16 %v636, %v635
        %s638 = sld [smem:[#allocation3 + $0x1c]]
        %v639 = vstv %s638
        %v640 = vmul.f32 %v639, %v249
        %v641 = vmul.f32 %v639, %v250
        %s642 = sld [smem:[#allocation3 + $0x1d]]
        %v643 = vstv %s642
        %v644 = vmul.f32 %v643, %v253
        %v645 = vmul.f32 %v643, %v254
        %v646 = vadd.f32 %v640, %v644
        %v647 = vadd.f32 %v641, %v645
        %s648 = sld [smem:[#allocation3 + $0x1e]]
        %v649 = vstv %s648
        %v650 = vmul.f32 %v649, %v257
        %v651 = vmul.f32 %v649, %v258
        %v652 = vadd.f32 %v646, %v650
        %v653 = vadd.f32 %v647, %v651
        %s654 = sld [smem:[#allocation3 + $0x1f]]
        %v655 = vstv %s654
        %v656 = vmul.f32 %v655, %v261
        %v657 = vmul.f32 %v655, %v262
        %v658 = vadd.f32 %v652, %v656
        %v659 = vadd.f32 %v653, %v657
        %v660 = vpack.c.bf16 %v659, %v658
        %v662 = vsel %vm320, %v660, 0
        %664 = vmatpush.bf16.msra.mxu0 0
        %665 = vmatpush.bf16.msra.mxu0 0
        %666 = vmatpush.bf16.msra.mxu0 0
        %667 = vmatpush.bf16.msra.mxu0 0
        %668 = vmatpush.bf16.msra.mxu0 0
        %669 = vmatpush.bf16.msra.mxu0 0
        %670 = vmatpush.bf16.msra.mxu0 0
        %671 = vmatpush.bf16.msra.mxu0 %v318
        %672 = vmatmul.bf16.gmra.mxu0 %v662
        %v673 = vpop.f32.mrf.mxu0
        %v674 = vadd.f32 0.0, %v673
        %v675 = vpop.f32.mrf.mxu0
        %v676 = vadd.f32 0.0, %v675
        %677 = vdwg.mxu0
        %v679 = vsel %vm320, %v637, 0
        %681 = vmatpush.bf16.msra.mxu0 0
        %682 = vmatpush.bf16.msra.mxu0 0
        %683 = vmatpush.bf16.msra.mxu0 0
        %684 = vmatpush.bf16.msra.mxu0 0
        %685 = vmatpush.bf16.msra.mxu0 0
        %686 = vmatpush.bf16.msra.mxu0 0
        %687 = vmatpush.bf16.msra.mxu0 0
        %688 = vmatpush.bf16.msra.mxu0 %v342
        %689 = vmatmul.bf16.gmra.mxu0 %v679
        %v690 = vpop.f32.mrf.mxu0
        %v691 = vadd.f32 %v674, %v690
        %v692 = vpop.f32.mrf.mxu0
        %v693 = vadd.f32 %v676, %v692
        %694 = vdwg.mxu0
        %s695 = sld [smem:[#allocation3 + $0x20]]
        %v696 = vstv %s695
        %v697 = vmul.f32 %v696, %v249
        %v698 = vmul.f32 %v696, %v250
        %s699 = sld [smem:[#allocation3 + $0x21]]
        %v700 = vstv %s699
        %v701 = vmul.f32 %v700, %v253
        %v702 = vmul.f32 %v700, %v254
        %v703 = vadd.f32 %v697, %v701
        %v704 = vadd.f32 %v698, %v702
        %s705 = sld [smem:[#allocation3 + $0x22]]
        %v706 = vstv %s705
        %v707 = vmul.f32 %v706, %v257
        %v708 = vmul.f32 %v706, %v258
        %v709 = vadd.f32 %v703, %v707
        %v710 = vadd.f32 %v704, %v708
        %s711 = sld [smem:[#allocation3 + $0x23]]
        %v712 = vstv %s711
        %v713 = vmul.f32 %v712, %v261
        %v714 = vmul.f32 %v712, %v262
        %v715 = vadd.f32 %v709, %v713
        %v716 = vadd.f32 %v710, %v714
        %v717 = vpack.c.bf16 %v716, %v715
        %v719 = vsel %vm320, %v717, 0
        %721 = vmatpush.bf16.msra.mxu0 0
        %722 = vmatpush.bf16.msra.mxu0 0
        %723 = vmatpush.bf16.msra.mxu0 0
        %724 = vmatpush.bf16.msra.mxu0 0
        %725 = vmatpush.bf16.msra.mxu0 0
        %726 = vmatpush.bf16.msra.mxu0 0
        %727 = vmatpush.bf16.msra.mxu0 0
        %728 = vmatpush.bf16.msra.mxu0 %v391
        %729 = vmatmul.bf16.gmra.mxu0 %v719
        %v730 = vpop.f32.mrf.mxu0
        %v731 = vadd.f32 0.0, %v730
        %v732 = vpop.f32.mrf.mxu0
        %v733 = vadd.f32 0.0, %v732
        %734 = vdwg.mxu0
        %v735 = vadd.f32 %v691, %v731
        %v736 = vadd.f32 %v693, %v733
        %s737 = scalar_lea.vmem [#allocation5], 32
        %v738 = vld [vmem:[%s737] sm:$0xf]
        %v739 = vld [vmem:[%s737 + $0x4] sm:$0xf]
        %v740 = vld [vmem:[%s737 + $0x8] sm:$0xf]
        %v741 = vld [vmem:[%s737 + $0xc] sm:$0xf]
        %v742 = vpack.c.bf16 %v736, %v735
        %v747 = vunpack.c.l.b16 %v738
        %v748 = vunpack.c.l.b16 %v739
        %v749 = vunpack.c.l.b16 %v740
        %v750 = vunpack.c.l.b16 %v741
        %v751 = vpack.c.b16 %v748, %v747
        %v752 = vpack.c.b16 %v750, %v749
        %v754 = vsel %vm320, %v751, 0
        %v757 = vsel %vm320, %v752, 0
        %759 = vmatpush.bf16.msra.mxu0 0
        %760 = vmatpush.bf16.msra.mxu0 0
        %761 = vmatpush.bf16.msra.mxu0 0
        %762 = vmatpush.bf16.msra.mxu0 0
        %763 = vmatpush.bf16.msra.mxu0 0
        %764 = vmatpush.bf16.msra.mxu0 0
        %765 = vmatpush.bf16.msra.mxu0 0
        %766 = vmatpush.bf16.msra.mxu0 %v742
        %767 = vmatmul.bf16.gmra.mxu0 %v754
        %v768 = vpop.f32.mrf.mxu0
        %v769 = vadd.f32 0.0, %v768
        %v770 = vpop.f32.mrf.mxu0
        %v771 = vadd.f32 0.0, %v770
        %772 = vmatmul.bf16.gmra.mxu0 %v757
        %v773 = vpop.f32.mrf.mxu0
        %v774 = vadd.f32 0.0, %v773
        %v775 = vpop.f32.mrf.mxu0
        %v776 = vadd.f32 0.0, %v775
        %777 = vdwg.mxu0
        %v778 = vadd.f32 %v606, %v769
        %v779 = vadd.f32 %v608, %v771
        %v780 = vadd.f32 %v611, %v774
        %v781 = vadd.f32 %v613, %v776
        %s782 = sld [smem:[#allocation4]]
        %v783 = vstv %s782
        %v784 = vadd.f32 %v778, %v783
        %v785 = vadd.f32 %v779, %v783
        %v786 = vadd.f32 %v780, %v783
        %v787 = vadd.f32 %v781, %v783
        %vm788 = vcmask 261120
        %789 = vst.msk [vmem:[%s234] sm:$0xff] %vm788, %v784
        %790 = vst.msk [vmem:[%s234 + $0x8] sm:$0xff] %vm788, %v785
        %791 = vst.msk [vmem:[%s234 + $0x10] sm:$0xff] %vm788, %v786
        %792 = vst.msk [vmem:[%s234 + $0x18] sm:$0xff] %vm788, %v787
        %s793 = sld [smem:[#allocation3 + $0x24]]
        %v794 = vstv %s793
        %v795 = vmul.f32 %v794, %v249
        %v796 = vmul.f32 %v794, %v250
        %s797 = sld [smem:[#allocation3 + $0x25]]
        %v798 = vstv %s797
        %v799 = vmul.f32 %v798, %v253
        %v800 = vmul.f32 %v798, %v254
        %v801 = vadd.f32 %v795, %v799
        %v802 = vadd.f32 %v796, %v800
        %s803 = sld [smem:[#allocation3 + $0x26]]
        %v804 = vstv %s803
        %v805 = vmul.f32 %v804, %v257
        %v806 = vmul.f32 %v804, %v258
        %v807 = vadd.f32 %v801, %v805
        %v808 = vadd.f32 %v802, %v806
        %s809 = sld [smem:[#allocation3 + $0x27]]
        %v810 = vstv %s809
        %v811 = vmul.f32 %v810, %v261
        %v812 = vmul.f32 %v810, %v262
        %v813 = vadd.f32 %v807, %v811
        %v814 = vadd.f32 %v808, %v812
        %v815 = vpack.c.bf16 %v814, %v813
        %v816 = vld [vmem:[#allocation8] sm:$0xf]
        %v817 = vld [vmem:[#allocation8 + $0x4] sm:$0xf]
        %s818 = sld [smem:[#allocation3 + $0x28]]
        %v819 = vstv %s818
        %v820 = vmul.f32 %v819, %v249
        %v821 = vmul.f32 %v819, %v250
        %s822 = sld [smem:[#allocation3 + $0x29]]
        %v823 = vstv %s822
        %v824 = vmul.f32 %v823, %v253
        %v825 = vmul.f32 %v823, %v254
        %v826 = vadd.f32 %v820, %v824
        %v827 = vadd.f32 %v821, %v825
        %s828 = sld [smem:[#allocation3 + $0x2a]]
        %v829 = vstv %s828
        %v830 = vmul.f32 %v829, %v257
        %v831 = vmul.f32 %v829, %v258
        %v832 = vadd.f32 %v826, %v830
        %v833 = vadd.f32 %v827, %v831
        %s834 = sld [smem:[#allocation3 + $0x2b]]
        %v835 = vstv %s834
        %v836 = vmul.f32 %v835, %v261
        %v837 = vmul.f32 %v835, %v262
        %v838 = vadd.f32 %v832, %v836
        %v839 = vadd.f32 %v833, %v837
        %v840 = vpack.c.bf16 %v839, %v838
        %v841 = vld [vmem:[%s311] sm:$0xf]
        %v842 = vld [vmem:[%s311 + $0x4] sm:$0xf]
        %v845 = vunpack.c.l.b16 %v841
        %v846 = vunpack.c.l.b16 %v842
        %v847 = vpack.c.b16 %v846, %v845
        %v850 = vsel %vm320, %v840, 0
        %852 = vmatpush.bf16.msra.mxu0 0
        %853 = vmatpush.bf16.msra.mxu0 0
        %854 = vmatpush.bf16.msra.mxu0 0
        %855 = vmatpush.bf16.msra.mxu0 0
        %856 = vmatpush.bf16.msra.mxu0 0
        %857 = vmatpush.bf16.msra.mxu0 0
        %858 = vmatpush.bf16.msra.mxu0 0
        %859 = vmatpush.bf16.msra.mxu0 %v847
        %860 = vmatmul.bf16.gmra.mxu0 %v850
        %v861 = vpop.f32.mrf.mxu0
        %v862 = vadd.f32 0.0, %v861
        %v863 = vpop.f32.mrf.mxu0
        %v864 = vadd.f32 0.0, %v863
        %865 = vdwg.mxu0
        %v868 = vunpack.c.l.b16 %v816
        %v869 = vunpack.c.l.b16 %v817
        %v870 = vpack.c.b16 %v869, %v868
        %v873 = vsel %vm320, %v815, 0
        %875 = vmatpush.bf16.msra.mxu0 0
        %876 = vmatpush.bf16.msra.mxu0 0
        %877 = vmatpush.bf16.msra.mxu0 0
        %878 = vmatpush.bf16.msra.mxu0 0
        %879 = vmatpush.bf16.msra.mxu0 0
        %880 = vmatpush.bf16.msra.mxu0 0
        %881 = vmatpush.bf16.msra.mxu0 0
        %882 = vmatpush.bf16.msra.mxu0 %v870
        %883 = vmatmul.bf16.gmra.mxu0 %v873
        %v884 = vpop.f32.mrf.mxu0
        %v885 = vadd.f32 %v862, %v884
        %v886 = vpop.f32.mrf.mxu0
        %v887 = vadd.f32 %v864, %v886
        %888 = vdwg.mxu0
        %s889 = sld [smem:[#allocation3 + $0x2c]]
        %v890 = vstv %s889
        %v891 = vmul.f32 %v890, %v249
        %v892 = vmul.f32 %v890, %v250
        %s893 = sld [smem:[#allocation3 + $0x2d]]
        %v894 = vstv %s893
        %v895 = vmul.f32 %v894, %v253
        %v896 = vmul.f32 %v894, %v254
        %v897 = vadd.f32 %v891, %v895
        %v898 = vadd.f32 %v892, %v896
        %s899 = sld [smem:[#allocation3 + $0x2e]]
        %v900 = vstv %s899
        %v901 = vmul.f32 %v900, %v257
        %v902 = vmul.f32 %v900, %v258
        %v903 = vadd.f32 %v897, %v901
        %v904 = vadd.f32 %v898, %v902
        %s905 = sld [smem:[#allocation3 + $0x2f]]
        %v906 = vstv %s905
        %v907 = vmul.f32 %v906, %v261
        %v908 = vmul.f32 %v906, %v262
        %v909 = vadd.f32 %v903, %v907
        %v910 = vadd.f32 %v904, %v908
        %v911 = vpack.c.bf16 %v910, %v909
        %v912 = vld [vmem:[%s384] sm:$0xf]
        %v913 = vld [vmem:[%s384 + $0x4] sm:$0xf]
        %v916 = vunpack.c.l.b16 %v912
        %v917 = vunpack.c.l.b16 %v913
        %v918 = vpack.c.b16 %v917, %v916
        %v921 = vsel %vm320, %v911, 0
        %923 = vmatpush.bf16.msra.mxu0 0
        %924 = vmatpush.bf16.msra.mxu0 0
        %925 = vmatpush.bf16.msra.mxu0 0
        %926 = vmatpush.bf16.msra.mxu0 0
        %927 = vmatpush.bf16.msra.mxu0 0
        %928 = vmatpush.bf16.msra.mxu0 0
        %929 = vmatpush.bf16.msra.mxu0 0
        %930 = vmatpush.bf16.msra.mxu0 %v918
        %931 = vmatmul.bf16.gmra.mxu0 %v921
        %v932 = vpop.f32.mrf.mxu0
        %v933 = vadd.f32 0.0, %v932
        %v934 = vpop.f32.mrf.mxu0
        %v935 = vadd.f32 0.0, %v934
        %936 = vdwg.mxu0
        %v937 = vadd.f32 %v885, %v933
        %v938 = vadd.f32 %v887, %v935
        %v939 = vld [vmem:[#allocation5] sm:$0xf]
        %v940 = vld [vmem:[#allocation5 + $0x4] sm:$0xf]
        %v941 = vld [vmem:[#allocation5 + $0x8] sm:$0xf]
        %v942 = vld [vmem:[#allocation5 + $0xc] sm:$0xf]
        %v943 = vpack.c.bf16 %v938, %v937
        %s944 = sld [smem:[#allocation3 + $0x30]]
        %v945 = vstv %s944
        %v946 = vmul.f32 %v945, %v249
        %v947 = vmul.f32 %v945, %v250
        %s948 = sld [smem:[#allocation3 + $0x31]]
        %v949 = vstv %s948
        %v950 = vmul.f32 %v949, %v253
        %v951 = vmul.f32 %v949, %v254
        %v952 = vadd.f32 %v946, %v950
        %v953 = vadd.f32 %v947, %v951
        %s954 = sld [smem:[#allocation3 + $0x32]]
        %v955 = vstv %s954
        %v956 = vmul.f32 %v955, %v257
        %v957 = vmul.f32 %v955, %v258
        %v958 = vadd.f32 %v952, %v956
        %v959 = vadd.f32 %v953, %v957
        %s960 = sld [smem:[#allocation3 + $0x33]]
        %v961 = vstv %s960
        %v962 = vmul.f32 %v961, %v261
        %v963 = vmul.f32 %v961, %v262
        %v964 = vadd.f32 %v958, %v962
        %v965 = vadd.f32 %v959, %v963
        %v966 = vpack.c.bf16 %v965, %v964
        %s967 = sld [smem:[#allocation3 + $0x34]]
        %v968 = vstv %s967
        %v969 = vmul.f32 %v968, %v249
        %v970 = vmul.f32 %v968, %v250
        %s971 = sld [smem:[#allocation3 + $0x35]]
        %v972 = vstv %s971
        %v973 = vmul.f32 %v972, %v253
        %v974 = vmul.f32 %v972, %v254
        %v975 = vadd.f32 %v969, %v973
        %v976 = vadd.f32 %v970, %v974
        %s977 = sld [smem:[#allocation3 + $0x36]]
        %v978 = vstv %s977
        %v979 = vmul.f32 %v978, %v257
        %v980 = vmul.f32 %v978, %v258
        %v981 = vadd.f32 %v975, %v979
        %v982 = vadd.f32 %v976, %v980
        %s983 = sld [smem:[#allocation3 + $0x37]]
        %v984 = vstv %s983
        %v985 = vmul.f32 %v984, %v261
        %v986 = vmul.f32 %v984, %v262
        %v987 = vadd.f32 %v981, %v985
        %v988 = vadd.f32 %v982, %v986
        %v989 = vpack.c.bf16 %v988, %v987
        %v991 = vsel %vm320, %v989, 0
        %993 = vmatpush.bf16.msra.mxu0 0
        %994 = vmatpush.bf16.msra.mxu0 0
        %995 = vmatpush.bf16.msra.mxu0 0
        %996 = vmatpush.bf16.msra.mxu0 0
        %997 = vmatpush.bf16.msra.mxu0 0
        %998 = vmatpush.bf16.msra.mxu0 0
        %999 = vmatpush.bf16.msra.mxu0 0
        %1000 = vmatpush.bf16.msra.mxu0 %v847
        %1001 = vmatmul.bf16.gmra.mxu0 %v991
        %v1002 = vpop.f32.mrf.mxu0
        %v1003 = vadd.f32 0.0, %v1002
        %v1004 = vpop.f32.mrf.mxu0
        %v1005 = vadd.f32 0.0, %v1004
        %1006 = vdwg.mxu0
        %v1008 = vsel %vm320, %v966, 0
        %1010 = vmatpush.bf16.msra.mxu0 0
        %1011 = vmatpush.bf16.msra.mxu0 0
        %1012 = vmatpush.bf16.msra.mxu0 0
        %1013 = vmatpush.bf16.msra.mxu0 0
        %1014 = vmatpush.bf16.msra.mxu0 0
        %1015 = vmatpush.bf16.msra.mxu0 0
        %1016 = vmatpush.bf16.msra.mxu0 0
        %1017 = vmatpush.bf16.msra.mxu0 %v870
        %1018 = vmatmul.bf16.gmra.mxu0 %v1008
        %v1019 = vpop.f32.mrf.mxu0
        %v1020 = vadd.f32 %v1003, %v1019
        %v1021 = vpop.f32.mrf.mxu0
        %v1022 = vadd.f32 %v1005, %v1021
        %1023 = vdwg.mxu0
        %s1024 = sld [smem:[#allocation3 + $0x38]]
        %v1025 = vstv %s1024
        %v1026 = vmul.f32 %v1025, %v249
        %v1027 = vmul.f32 %v1025, %v250
        %s1028 = sld [smem:[#allocation3 + $0x39]]
        %v1029 = vstv %s1028
        %v1030 = vmul.f32 %v1029, %v253
        %v1031 = vmul.f32 %v1029, %v254
        %v1032 = vadd.f32 %v1026, %v1030
        %v1033 = vadd.f32 %v1027, %v1031
        %s1034 = sld [smem:[#allocation3 + $0x3a]]
        %v1035 = vstv %s1034
        %v1036 = vmul.f32 %v1035, %v257
        %v1037 = vmul.f32 %v1035, %v258
        %v1038 = vadd.f32 %v1032, %v1036
        %v1039 = vadd.f32 %v1033, %v1037
        %s1040 = sld [smem:[#allocation3 + $0x3b]]
        %v1041 = vstv %s1040
        %v1042 = vmul.f32 %v1041, %v261
        %v1043 = vmul.f32 %v1041, %v262
        %v1044 = vadd.f32 %v1038, %v1042
        %v1045 = vadd.f32 %v1039, %v1043
        %v1046 = vpack.c.bf16 %v1045, %v1044
        %v1048 = vsel %vm320, %v1046, 0
        %1050 = vmatpush.bf16.msra.mxu0 0
        %1051 = vmatpush.bf16.msra.mxu0 0
        %1052 = vmatpush.bf16.msra.mxu0 0
        %1053 = vmatpush.bf16.msra.mxu0 0
        %1054 = vmatpush.bf16.msra.mxu0 0
        %1055 = vmatpush.bf16.msra.mxu0 0
        %1056 = vmatpush.bf16.msra.mxu0 0
        %1057 = vmatpush.bf16.msra.mxu0 %v918
        %1058 = vmatmul.bf16.gmra.mxu0 %v1048
        %v1059 = vpop.f32.mrf.mxu0
        %v1060 = vadd.f32 0.0, %v1059
        %v1061 = vpop.f32.mrf.mxu0
        %v1062 = vadd.f32 0.0, %v1061
        %1063 = vdwg.mxu0
        %v1064 = vadd.f32 %v1020, %v1060
        %v1065 = vadd.f32 %v1022, %v1062
        %v1066 = vld [vmem:[%s539] sm:$0xf]
        %v1067 = vld [vmem:[%s539 + $0x4] sm:$0xf]
        %v1068 = vld [vmem:[%s539 + $0x8] sm:$0xf]
        %v1069 = vld [vmem:[%s539 + $0xc] sm:$0xf]
        %v1070 = vpack.c.bf16 %v1065, %v1064
        %v1075 = vunpack.c.l.b16 %v1066
        %v1076 = vunpack.c.l.b16 %v1067
        %v1077 = vunpack.c.l.b16 %v1068
        %v1078 = vunpack.c.l.b16 %v1069
        %v1079 = vpack.c.b16 %v1076, %v1075
        %v1080 = vpack.c.b16 %v1078, %v1077
        %v1082 = vsel %vm320, %v1079, 0
        %v1085 = vsel %vm320, %v1080, 0
        %1087 = vmatpush.bf16.msra.mxu0 0
        %1088 = vmatpush.bf16.msra.mxu0 0
        %1089 = vmatpush.bf16.msra.mxu0 0
        %1090 = vmatpush.bf16.msra.mxu0 0
        %1091 = vmatpush.bf16.msra.mxu0 0
        %1092 = vmatpush.bf16.msra.mxu0 0
        %1093 = vmatpush.bf16.msra.mxu0 0
        %1094 = vmatpush.bf16.msra.mxu0 %v1070
        %1095 = vmatmul.bf16.gmra.mxu0 %v1082
        %v1096 = vpop.f32.mrf.mxu0
        %v1097 = vadd.f32 0.0, %v1096
        %v1098 = vpop.f32.mrf.mxu0
        %v1099 = vadd.f32 0.0, %v1098
        %1100 = vmatmul.bf16.gmra.mxu0 %v1085
        %v1101 = vpop.f32.mrf.mxu0
        %v1102 = vadd.f32 0.0, %v1101
        %v1103 = vpop.f32.mrf.mxu0
        %v1104 = vadd.f32 0.0, %v1103
        %1105 = vdwg.mxu0
        %v1110 = vunpack.c.l.b16 %v939
        %v1111 = vunpack.c.l.b16 %v940
        %v1112 = vunpack.c.l.b16 %v941
        %v1113 = vunpack.c.l.b16 %v942
        %v1114 = vpack.c.b16 %v1111, %v1110
        %v1115 = vpack.c.b16 %v1113, %v1112
        %v1117 = vsel %vm320, %v1114, 0
        %v1120 = vsel %vm320, %v1115, 0
        %1122 = vmatpush.bf16.msra.mxu0 0
        %1123 = vmatpush.bf16.msra.mxu0 0
        %1124 = vmatpush.bf16.msra.mxu0 0
        %1125 = vmatpush.bf16.msra.mxu0 0
        %1126 = vmatpush.bf16.msra.mxu0 0
        %1127 = vmatpush.bf16.msra.mxu0 0
        %1128 = vmatpush.bf16.msra.mxu0 0
        %1129 = vmatpush.bf16.msra.mxu0 %v943
        %1130 = vmatmul.bf16.gmra.mxu0 %v1117
        %v1131 = vpop.f32.mrf.mxu0
        %v1132 = vadd.f32 %v1097, %v1131
        %v1133 = vpop.f32.mrf.mxu0
        %v1134 = vadd.f32 %v1099, %v1133
        %1135 = vmatmul.bf16.gmra.mxu0 %v1120
        %v1136 = vpop.f32.mrf.mxu0
        %v1137 = vadd.f32 %v1102, %v1136
        %v1138 = vpop.f32.mrf.mxu0
        %v1139 = vadd.f32 %v1104, %v1138
        %1140 = vdwg.mxu0
        %s1141 = sld [smem:[#allocation3 + $0x3c]]
        %v1142 = vstv %s1141
        %v1143 = vmul.f32 %v1142, %v249
        %v1144 = vmul.f32 %v1142, %v250
        %s1145 = sld [smem:[#allocation3 + $0x3d]]
        %v1146 = vstv %s1145
        %v1147 = vmul.f32 %v1146, %v253
        %v1148 = vmul.f32 %v1146, %v254
        %v1149 = vadd.f32 %v1143, %v1147
        %v1150 = vadd.f32 %v1144, %v1148
        %s1151 = sld [smem:[#allocation3 + $0x3e]]
        %v1152 = vstv %s1151
        %v1153 = vmul.f32 %v1152, %v257
        %v1154 = vmul.f32 %v1152, %v258
        %v1155 = vadd.f32 %v1149, %v1153
        %v1156 = vadd.f32 %v1150, %v1154
        %s1157 = sld [smem:[#allocation3 + $0x3f]]
        %v1158 = vstv %s1157
        %v1159 = vmul.f32 %v1158, %v261
        %v1160 = vmul.f32 %v1158, %v262
        %v1161 = vadd.f32 %v1155, %v1159
        %v1162 = vadd.f32 %v1156, %v1160
        %v1163 = vpack.c.bf16 %v1162, %v1161
        %s1164 = sld [smem:[#allocation3 + $0x40]]
        %v1165 = vstv %s1164
        %v1166 = vmul.f32 %v1165, %v249
        %v1167 = vmul.f32 %v1165, %v250
        %s1168 = sld [smem:[#allocation3 + $0x41]]
        %v1169 = vstv %s1168
        %v1170 = vmul.f32 %v1169, %v253
        %v1171 = vmul.f32 %v1169, %v254
        %v1172 = vadd.f32 %v1166, %v1170
        %v1173 = vadd.f32 %v1167, %v1171
        %s1174 = sld [smem:[#allocation3 + $0x42]]
        %v1175 = vstv %s1174
        %v1176 = vmul.f32 %v1175, %v257
        %v1177 = vmul.f32 %v1175, %v258
        %v1178 = vadd.f32 %v1172, %v1176
        %v1179 = vadd.f32 %v1173, %v1177
        %s1180 = sld [smem:[#allocation3 + $0x43]]
        %v1181 = vstv %s1180
        %v1182 = vmul.f32 %v1181, %v261
        %v1183 = vmul.f32 %v1181, %v262
        %v1184 = vadd.f32 %v1178, %v1182
        %v1185 = vadd.f32 %v1179, %v1183
        %v1186 = vpack.c.bf16 %v1185, %v1184
        %v1188 = vsel %vm320, %v1186, 0
        %1190 = vmatpush.bf16.msra.mxu0 0
        %1191 = vmatpush.bf16.msra.mxu0 0
        %1192 = vmatpush.bf16.msra.mxu0 0
        %1193 = vmatpush.bf16.msra.mxu0 0
        %1194 = vmatpush.bf16.msra.mxu0 0
        %1195 = vmatpush.bf16.msra.mxu0 0
        %1196 = vmatpush.bf16.msra.mxu0 0
        %1197 = vmatpush.bf16.msra.mxu0 %v847
        %1198 = vmatmul.bf16.gmra.mxu0 %v1188
        %v1199 = vpop.f32.mrf.mxu0
        %v1200 = vadd.f32 0.0, %v1199
        %v1201 = vpop.f32.mrf.mxu0
        %v1202 = vadd.f32 0.0, %v1201
        %1203 = vdwg.mxu0
        %v1205 = vsel %vm320, %v1163, 0
        %1207 = vmatpush.bf16.msra.mxu0 0
        %1208 = vmatpush.bf16.msra.mxu0 0
        %1209 = vmatpush.bf16.msra.mxu0 0
        %1210 = vmatpush.bf16.msra.mxu0 0
        %1211 = vmatpush.bf16.msra.mxu0 0
        %1212 = vmatpush.bf16.msra.mxu0 0
        %1213 = vmatpush.bf16.msra.mxu0 0
        %1214 = vmatpush.bf16.msra.mxu0 %v870
        %1215 = vmatmul.bf16.gmra.mxu0 %v1205
        %v1216 = vpop.f32.mrf.mxu0
        %v1217 = vadd.f32 %v1200, %v1216
        %v1218 = vpop.f32.mrf.mxu0
        %v1219 = vadd.f32 %v1202, %v1218
        %1220 = vdwg.mxu0
        %s1221 = sld [smem:[#allocation3 + $0x44]]
        %v1222 = vstv %s1221
        %v1223 = vmul.f32 %v1222, %v249
        %v1224 = vmul.f32 %v1222, %v250
        %s1225 = sld [smem:[#allocation3 + $0x45]]
        %v1226 = vstv %s1225
        %v1227 = vmul.f32 %v1226, %v253
        %v1228 = vmul.f32 %v1226, %v254
        %v1229 = vadd.f32 %v1223, %v1227
        %v1230 = vadd.f32 %v1224, %v1228
        %s1231 = sld [smem:[#allocation3 + $0x46]]
        %v1232 = vstv %s1231
        %v1233 = vmul.f32 %v1232, %v257
        %v1234 = vmul.f32 %v1232, %v258
        %v1235 = vadd.f32 %v1229, %v1233
        %v1236 = vadd.f32 %v1230, %v1234
        %s1237 = sld [smem:[#allocation3 + $0x47]]
        %v1238 = vstv %s1237
        %v1239 = vmul.f32 %v1238, %v261
        %v1240 = vmul.f32 %v1238, %v262
        %v1241 = vadd.f32 %v1235, %v1239
        %v1242 = vadd.f32 %v1236, %v1240
        %v1243 = vpack.c.bf16 %v1242, %v1241
        %v1245 = vsel %vm320, %v1243, 0
        %1247 = vmatpush.bf16.msra.mxu0 0
        %1248 = vmatpush.bf16.msra.mxu0 0
        %1249 = vmatpush.bf16.msra.mxu0 0
        %1250 = vmatpush.bf16.msra.mxu0 0
        %1251 = vmatpush.bf16.msra.mxu0 0
        %1252 = vmatpush.bf16.msra.mxu0 0
        %1253 = vmatpush.bf16.msra.mxu0 0
        %1254 = vmatpush.bf16.msra.mxu0 %v918
        %1255 = vmatmul.bf16.gmra.mxu0 %v1245
        %v1256 = vpop.f32.mrf.mxu0
        %v1257 = vadd.f32 0.0, %v1256
        %v1258 = vpop.f32.mrf.mxu0
        %v1259 = vadd.f32 0.0, %v1258
        %1260 = vdwg.mxu0
        %v1261 = vadd.f32 %v1217, %v1257
        %v1262 = vadd.f32 %v1219, %v1259
        %v1263 = vld [vmem:[%s737] sm:$0xf]
        %v1264 = vld [vmem:[%s737 + $0x4] sm:$0xf]
        %v1265 = vld [vmem:[%s737 + $0x8] sm:$0xf]
        %v1266 = vld [vmem:[%s737 + $0xc] sm:$0xf]
        %v1267 = vpack.c.bf16 %v1262, %v1261
        %v1272 = vunpack.c.l.b16 %v1263
        %v1273 = vunpack.c.l.b16 %v1264
        %v1274 = vunpack.c.l.b16 %v1265
        %v1275 = vunpack.c.l.b16 %v1266
        %v1276 = vpack.c.b16 %v1273, %v1272
        %v1277 = vpack.c.b16 %v1275, %v1274
        %v1279 = vsel %vm320, %v1276, 0
        %v1282 = vsel %vm320, %v1277, 0
        %1284 = vmatpush.bf16.msra.mxu0 0
        %1285 = vmatpush.bf16.msra.mxu0 0
        %1286 = vmatpush.bf16.msra.mxu0 0
        %1287 = vmatpush.bf16.msra.mxu0 0
        %1288 = vmatpush.bf16.msra.mxu0 0
        %1289 = vmatpush.bf16.msra.mxu0 0
        %1290 = vmatpush.bf16.msra.mxu0 0
        %1291 = vmatpush.bf16.msra.mxu0 %v1267
        %1292 = vmatmul.bf16.gmra.mxu0 %v1279
        %v1293 = vpop.f32.mrf.mxu0
        %v1294 = vadd.f32 0.0, %v1293
        %v1295 = vpop.f32.mrf.mxu0
        %v1296 = vadd.f32 0.0, %v1295
        %1297 = vmatmul.bf16.gmra.mxu0 %v1282
        %v1298 = vpop.f32.mrf.mxu0
        %v1299 = vadd.f32 0.0, %v1298
        %v1300 = vpop.f32.mrf.mxu0
        %v1301 = vadd.f32 0.0, %v1300
        %1302 = vdwg.mxu0
        %v1303 = vadd.f32 %v1132, %v1294
        %v1304 = vadd.f32 %v1134, %v1296
        %v1305 = vadd.f32 %v1137, %v1299
        %v1306 = vadd.f32 %v1139, %v1301
        %s1307 = sld [smem:[#allocation4 + $0x1]]
        %v1308 = vstv %s1307
        %v1309 = vadd.f32 %v1303, %v1308
        %v1310 = vadd.f32 %v1304, %v1308
        %v1311 = vadd.f32 %v1305, %v1308
        %v1312 = vadd.f32 %v1306, %v1308
        %s1313 = scalar_lea.vmem %s234, 32 [#allocation10]
        %1314 = vst.msk [vmem:[%s1313] sm:$0xff] %vm788, %v1309
        %1315 = vst.msk [vmem:[%s1313 + $0x8] sm:$0xff] %vm788, %v1310
        %1316 = vst.msk [vmem:[%s1313 + $0x10] sm:$0xff] %vm788, %v1311
        %1317 = vst.msk [vmem:[%s1313 + $0x18] sm:$0xff] %vm788, %v1312
        %s1318 = sld [smem:[#allocation3 + $0x48]]
        %v1319 = vstv %s1318
        %v1320 = vmul.f32 %v1319, %v249
        %v1321 = vmul.f32 %v1319, %v250
        %s1322 = sld [smem:[#allocation3 + $0x49]]
        %v1323 = vstv %s1322
        %v1324 = vmul.f32 %v1323, %v253
        %v1325 = vmul.f32 %v1323, %v254
        %v1326 = vadd.f32 %v1320, %v1324
        %v1327 = vadd.f32 %v1321, %v1325
        %s1328 = sld [smem:[#allocation3 + $0x4a]]
        %v1329 = vstv %s1328
        %v1330 = vmul.f32 %v1329, %v257
        %v1331 = vmul.f32 %v1329, %v258
        %v1332 = vadd.f32 %v1326, %v1330
        %v1333 = vadd.f32 %v1327, %v1331
        %s1334 = sld [smem:[#allocation3 + $0x4b]]
        %v1335 = vstv %s1334
        %v1336 = vmul.f32 %v1335, %v261
        %v1337 = vmul.f32 %v1335, %v262
        %v1338 = vadd.f32 %v1332, %v1336
        %v1339 = vadd.f32 %v1333, %v1337
        %v1340 = vpack.c.bf16 %v1339, %v1338
        %v1341 = vld [vmem:[#allocation8] sm:$0xf]
        %v1342 = vld [vmem:[#allocation8 + $0x4] sm:$0xf]
        %s1343 = sld [smem:[#allocation3 + $0x4c]]
        %v1344 = vstv %s1343
        %v1345 = vmul.f32 %v1344, %v249
        %v1346 = vmul.f32 %v1344, %v250
        %s1347 = sld [smem:[#allocation3 + $0x4d]]
        %v1348 = vstv %s1347
        %v1349 = vmul.f32 %v1348, %v253
        %v1350 = vmul.f32 %v1348, %v254
        %v1351 = vadd.f32 %v1345, %v1349
        %v1352 = vadd.f32 %v1346, %v1350
        %s1353 = sld [smem:[#allocation3 + $0x4e]]
        %v1354 = vstv %s1353
        %v1355 = vmul.f32 %v1354, %v257
        %v1356 = vmul.f32 %v1354, %v258
        %v1357 = vadd.f32 %v1351, %v1355
        %v1358 = vadd.f32 %v1352, %v1356
        %s1359 = sld [smem:[#allocation3 + $0x4f]]
        %v1360 = vstv %s1359
        %v1361 = vmul.f32 %v1360, %v261
        %v1362 = vmul.f32 %v1360, %v262
        %v1363 = vadd.f32 %v1357, %v1361
        %v1364 = vadd.f32 %v1358, %v1362
        %v1365 = vpack.c.bf16 %v1364, %v1363
        %v1366 = vld [vmem:[%s311] sm:$0xf]
        %v1367 = vld [vmem:[%s311 + $0x4] sm:$0xf]
        %v1370 = vunpack.c.l.b16 %v1366
        %v1371 = vunpack.c.l.b16 %v1367
        %v1372 = vpack.c.b16 %v1371, %v1370
        %v1375 = vsel %vm320, %v1365, 0
        %1377 = vmatpush.bf16.msra.mxu0 0
        %1378 = vmatpush.bf16.msra.mxu0 0
        %1379 = vmatpush.bf16.msra.mxu0 0
        %1380 = vmatpush.bf16.msra.mxu0 0
        %1381 = vmatpush.bf16.msra.mxu0 0
        %1382 = vmatpush.bf16.msra.mxu0 0
        %1383 = vmatpush.bf16.msra.mxu0 0
        %1384 = vmatpush.bf16.msra.mxu0 %v1372
        %1385 = vmatmul.bf16.gmra.mxu0 %v1375
        %v1386 = vpop.f32.mrf.mxu0
        %v1387 = vadd.f32 0.0, %v1386
        %v1388 = vpop.f32.mrf.mxu0
        %v1389 = vadd.f32 0.0, %v1388
        %1390 = vdwg.mxu0
        %v1393 = vunpack.c.l.b16 %v1341
        %v1394 = vunpack.c.l.b16 %v1342
        %v1395 = vpack.c.b16 %v1394, %v1393
        %v1398 = vsel %vm320, %v1340, 0
        %1400 = vmatpush.bf16.msra.mxu0 0
        %1401 = vmatpush.bf16.msra.mxu0 0
        %1402 = vmatpush.bf16.msra.mxu0 0
        %1403 = vmatpush.bf16.msra.mxu0 0
        %1404 = vmatpush.bf16.msra.mxu0 0
        %1405 = vmatpush.bf16.msra.mxu0 0
        %1406 = vmatpush.bf16.msra.mxu0 0
        %1407 = vmatpush.bf16.msra.mxu0 %v1395
        %1408 = vmatmul.bf16.gmra.mxu0 %v1398
        %v1409 = vpop.f32.mrf.mxu0
        %v1410 = vadd.f32 %v1387, %v1409
        %v1411 = vpop.f32.mrf.mxu0
        %v1412 = vadd.f32 %v1389, %v1411
        %1413 = vdwg.mxu0
        %s1414 = sld [smem:[#allocation3 + $0x50]]
        %v1415 = vstv %s1414
        %v1416 = vmul.f32 %v1415, %v249
        %v1417 = vmul.f32 %v1415, %v250
        %s1418 = sld [smem:[#allocation3 + $0x51]]
        %v1419 = vstv %s1418
        %v1420 = vmul.f32 %v1419, %v253
        %v1421 = vmul.f32 %v1419, %v254
        %v1422 = vadd.f32 %v1416, %v1420
        %v1423 = vadd.f32 %v1417, %v1421
        %s1424 = sld [smem:[#allocation3 + $0x52]]
        %v1425 = vstv %s1424
        %v1426 = vmul.f32 %v1425, %v257
        %v1427 = vmul.f32 %v1425, %v258
        %v1428 = vadd.f32 %v1422, %v1426
        %v1429 = vadd.f32 %v1423, %v1427
        %s1430 = sld [smem:[#allocation3 + $0x53]]
        %v1431 = vstv %s1430
        %v1432 = vmul.f32 %v1431, %v261
        %v1433 = vmul.f32 %v1431, %v262
        %v1434 = vadd.f32 %v1428, %v1432
        %v1435 = vadd.f32 %v1429, %v1433
        %v1436 = vpack.c.bf16 %v1435, %v1434
        %v1437 = vld [vmem:[%s384] sm:$0xf]
        %v1438 = vld [vmem:[%s384 + $0x4] sm:$0xf]
        %v1441 = vunpack.c.l.b16 %v1437
        %v1442 = vunpack.c.l.b16 %v1438
        %v1443 = vpack.c.b16 %v1442, %v1441
        %v1446 = vsel %vm320, %v1436, 0
        %1448 = vmatpush.bf16.msra.mxu0 0
        %1449 = vmatpush.bf16.msra.mxu0 0
        %1450 = vmatpush.bf16.msra.mxu0 0
        %1451 = vmatpush.bf16.msra.mxu0 0
        %1452 = vmatpush.bf16.msra.mxu0 0
        %1453 = vmatpush.bf16.msra.mxu0 0
        %1454 = vmatpush.bf16.msra.mxu0 0
        %1455 = vmatpush.bf16.msra.mxu0 %v1443
        %1456 = vmatmul.bf16.gmra.mxu0 %v1446
        %v1457 = vpop.f32.mrf.mxu0
        %v1458 = vadd.f32 0.0, %v1457
        %v1459 = vpop.f32.mrf.mxu0
        %v1460 = vadd.f32 0.0, %v1459
        %1461 = vdwg.mxu0
        %v1462 = vadd.f32 %v1410, %v1458
        %v1463 = vadd.f32 %v1412, %v1460
        %v1464 = vld [vmem:[#allocation5] sm:$0xf]
        %v1465 = vld [vmem:[#allocation5 + $0x4] sm:$0xf]
        %v1466 = vld [vmem:[#allocation5 + $0x8] sm:$0xf]
        %v1467 = vld [vmem:[#allocation5 + $0xc] sm:$0xf]
        %v1468 = vpack.c.bf16 %v1463, %v1462
        %s1469 = sld [smem:[#allocation3 + $0x54]]
        %v1470 = vstv %s1469
        %v1471 = vmul.f32 %v1470, %v249
        %v1472 = vmul.f32 %v1470, %v250
        %s1473 = sld [smem:[#allocation3 + $0x55]]
        %v1474 = vstv %s1473
        %v1475 = vmul.f32 %v1474, %v253
        %v1476 = vmul.f32 %v1474, %v254
        %v1477 = vadd.f32 %v1471, %v1475
        %v1478 = vadd.f32 %v1472, %v1476
        %s1479 = sld [smem:[#allocation3 + $0x56]]
        %v1480 = vstv %s1479
        %v1481 = vmul.f32 %v1480, %v257
        %v1482 = vmul.f32 %v1480, %v258
        %v1483 = vadd.f32 %v1477, %v1481
        %v1484 = vadd.f32 %v1478, %v1482
        %s1485 = sld [smem:[#allocation3 + $0x57]]
        %v1486 = vstv %s1485
        %v1487 = vmul.f32 %v1486, %v261
        %v1488 = vmul.f32 %v1486, %v262
        %v1489 = vadd.f32 %v1483, %v1487
        %v1490 = vadd.f32 %v1484, %v1488
        %v1491 = vpack.c.bf16 %v1490, %v1489
        %s1492 = sld [smem:[#allocation3 + $0x58]]
        %v1493 = vstv %s1492
        %v1494 = vmul.f32 %v1493, %v249
        %v1495 = vmul.f32 %v1493, %v250
        %s1496 = sld [smem:[#allocation3 + $0x59]]
        %v1497 = vstv %s1496
        %v1498 = vmul.f32 %v1497, %v253
        %v1499 = vmul.f32 %v1497, %v254
        %v1500 = vadd.f32 %v1494, %v1498
        %v1501 = vadd.f32 %v1495, %v1499
        %s1502 = sld [smem:[#allocation3 + $0x5a]]
        %v1503 = vstv %s1502
        %v1504 = vmul.f32 %v1503, %v257
        %v1505 = vmul.f32 %v1503, %v258
        %v1506 = vadd.f32 %v1500, %v1504
        %v1507 = vadd.f32 %v1501, %v1505
        %s1508 = sld [smem:[#allocation3 + $0x5b]]
        %v1509 = vstv %s1508
        %v1510 = vmul.f32 %v1509, %v261
        %v1511 = vmul.f32 %v1509, %v262
        %v1512 = vadd.f32 %v1506, %v1510
        %v1513 = vadd.f32 %v1507, %v1511
        %v1514 = vpack.c.bf16 %v1513, %v1512
        %v1516 = vsel %vm320, %v1514, 0
        %1518 = vmatpush.bf16.msra.mxu0 0
        %1519 = vmatpush.bf16.msra.mxu0 0
        %1520 = vmatpush.bf16.msra.mxu0 0
        %1521 = vmatpush.bf16.msra.mxu0 0
        %1522 = vmatpush.bf16.msra.mxu0 0
        %1523 = vmatpush.bf16.msra.mxu0 0
        %1524 = vmatpush.bf16.msra.mxu0 0
        %1525 = vmatpush.bf16.msra.mxu0 %v1372
        %1526 = vmatmul.bf16.gmra.mxu0 %v1516
        %v1527 = vpop.f32.mrf.mxu0
        %v1528 = vadd.f32 0.0, %v1527
        %v1529 = vpop.f32.mrf.mxu0
        %v1530 = vadd.f32 0.0, %v1529
        %1531 = vdwg.mxu0
        %v1533 = vsel %vm320, %v1491, 0
        %1535 = vmatpush.bf16.msra.mxu0 0
        %1536 = vmatpush.bf16.msra.mxu0 0
        %1537 = vmatpush.bf16.msra.mxu0 0
        %1538 = vmatpush.bf16.msra.mxu0 0
        %1539 = vmatpush.bf16.msra.mxu0 0
        %1540 = vmatpush.bf16.msra.mxu0 0
        %1541 = vmatpush.bf16.msra.mxu0 0
        %1542 = vmatpush.bf16.msra.mxu0 %v1395
        %1543 = vmatmul.bf16.gmra.mxu0 %v1533
        %v1544 = vpop.f32.mrf.mxu0
        %v1545 = vadd.f32 %v1528, %v1544
        %v1546 = vpop.f32.mrf.mxu0
        %v1547 = vadd.f32 %v1530, %v1546
        %1548 = vdwg.mxu0
        %s1549 = sld [smem:[#allocation3 + $0x5c]]
        %v1550 = vstv %s1549
        %v1551 = vmul.f32 %v1550, %v249
        %v1552 = vmul.f32 %v1550, %v250
        %s1553 = sld [smem:[#allocation3 + $0x5d]]
        %v1554 = vstv %s1553
        %v1555 = vmul.f32 %v1554, %v253
        %v1556 = vmul.f32 %v1554, %v254
        %v1557 = vadd.f32 %v1551, %v1555
        %v1558 = vadd.f32 %v1552, %v1556
        %s1559 = sld [smem:[#allocation3 + $0x5e]]
        %v1560 = vstv %s1559
        %v1561 = vmul.f32 %v1560, %v257
        %v1562 = vmul.f32 %v1560, %v258
        %v1563 = vadd.f32 %v1557, %v1561
        %v1564 = vadd.f32 %v1558, %v1562
        %s1565 = sld [smem:[#allocation3 + $0x5f]]
        %v1566 = vstv %s1565
        %v1567 = vmul.f32 %v1566, %v261
        %v1568 = vmul.f32 %v1566, %v262
        %v1569 = vadd.f32 %v1563, %v1567
        %v1570 = vadd.f32 %v1564, %v1568
        %v1571 = vpack.c.bf16 %v1570, %v1569
        %v1573 = vsel %vm320, %v1571, 0
        %1575 = vmatpush.bf16.msra.mxu0 0
        %1576 = vmatpush.bf16.msra.mxu0 0
        %1577 = vmatpush.bf16.msra.mxu0 0
        %1578 = vmatpush.bf16.msra.mxu0 0
        %1579 = vmatpush.bf16.msra.mxu0 0
        %1580 = vmatpush.bf16.msra.mxu0 0
        %1581 = vmatpush.bf16.msra.mxu0 0
        %1582 = vmatpush.bf16.msra.mxu0 %v1443
        %1583 = vmatmul.bf16.gmra.mxu0 %v1573
        %v1584 = vpop.f32.mrf.mxu0
        %v1585 = vadd.f32 0.0, %v1584
        %v1586 = vpop.f32.mrf.mxu0
        %v1587 = vadd.f32 0.0, %v1586
        %1588 = vdwg.mxu0
        %v1589 = vadd.f32 %v1545, %v1585
        %v1590 = vadd.f32 %v1547, %v1587
        %v1591 = vld [vmem:[%s539] sm:$0xf]
        %v1592 = vld [vmem:[%s539 + $0x4] sm:$0xf]
        %v1593 = vld [vmem:[%s539 + $0x8] sm:$0xf]
        %v1594 = vld [vmem:[%s539 + $0xc] sm:$0xf]
        %v1595 = vpack.c.bf16 %v1590, %v1589
        %v1600 = vunpack.c.l.b16 %v1591
        %v1601 = vunpack.c.l.b16 %v1592
        %v1602 = vunpack.c.l.b16 %v1593
        %v1603 = vunpack.c.l.b16 %v1594
        %v1604 = vpack.c.b16 %v1601, %v1600
        %v1605 = vpack.c.b16 %v1603, %v1602
        %v1607 = vsel %vm320, %v1604, 0
        %v1610 = vsel %vm320, %v1605, 0
        %1612 = vmatpush.bf16.msra.mxu0 0
        %1613 = vmatpush.bf16.msra.mxu0 0
        %1614 = vmatpush.bf16.msra.mxu0 0
        %1615 = vmatpush.bf16.msra.mxu0 0
        %1616 = vmatpush.bf16.msra.mxu0 0
        %1617 = vmatpush.bf16.msra.mxu0 0
        %1618 = vmatpush.bf16.msra.mxu0 0
        %1619 = vmatpush.bf16.msra.mxu0 %v1595
        %1620 = vmatmul.bf16.gmra.mxu0 %v1607
        %v1621 = vpop.f32.mrf.mxu0
        %v1622 = vadd.f32 0.0, %v1621
        %v1623 = vpop.f32.mrf.mxu0
        %v1624 = vadd.f32 0.0, %v1623
        %1625 = vmatmul.bf16.gmra.mxu0 %v1610
        %v1626 = vpop.f32.mrf.mxu0
        %v1627 = vadd.f32 0.0, %v1626
        %v1628 = vpop.f32.mrf.mxu0
        %v1629 = vadd.f32 0.0, %v1628
        %1630 = vdwg.mxu0
        %v1635 = vunpack.c.l.b16 %v1464
        %v1636 = vunpack.c.l.b16 %v1465
        %v1637 = vunpack.c.l.b16 %v1466
        %v1638 = vunpack.c.l.b16 %v1467
        %v1639 = vpack.c.b16 %v1636, %v1635
        %v1640 = vpack.c.b16 %v1638, %v1637
        %v1642 = vsel %vm320, %v1639, 0
        %v1645 = vsel %vm320, %v1640, 0
        %1647 = vmatpush.bf16.msra.mxu0 0
        %1648 = vmatpush.bf16.msra.mxu0 0
        %1649 = vmatpush.bf16.msra.mxu0 0
        %1650 = vmatpush.bf16.msra.mxu0 0
        %1651 = vmatpush.bf16.msra.mxu0 0
        %1652 = vmatpush.bf16.msra.mxu0 0
        %1653 = vmatpush.bf16.msra.mxu0 0
        %1654 = vmatpush.bf16.msra.mxu0 %v1468
        %1655 = vmatmul.bf16.gmra.mxu0 %v1642
        %v1656 = vpop.f32.mrf.mxu0
        %v1657 = vadd.f32 %v1622, %v1656
        %v1658 = vpop.f32.mrf.mxu0
        %v1659 = vadd.f32 %v1624, %v1658
        %1660 = vmatmul.bf16.gmra.mxu0 %v1645
        %v1661 = vpop.f32.mrf.mxu0
        %v1662 = vadd.f32 %v1627, %v1661
        %v1663 = vpop.f32.mrf.mxu0
        %v1664 = vadd.f32 %v1629, %v1663
        %1665 = vdwg.mxu0
        %s1666 = sld [smem:[#allocation3 + $0x60]]
        %v1667 = vstv %s1666
        %v1668 = vmul.f32 %v1667, %v249
        %v1669 = vmul.f32 %v1667, %v250
        %s1670 = sld [smem:[#allocation3 + $0x61]]
        %v1671 = vstv %s1670
        %v1672 = vmul.f32 %v1671, %v253
        %v1673 = vmul.f32 %v1671, %v254
        %v1674 = vadd.f32 %v1668, %v1672
        %v1675 = vadd.f32 %v1669, %v1673
        %s1676 = sld [smem:[#allocation3 + $0x62]]
        %v1677 = vstv %s1676
        %v1678 = vmul.f32 %v1677, %v257
        %v1679 = vmul.f32 %v1677, %v258
        %v1680 = vadd.f32 %v1674, %v1678
        %v1681 = vadd.f32 %v1675, %v1679
        %s1682 = sld [smem:[#allocation3 + $0x63]]
        %v1683 = vstv %s1682
        %v1684 = vmul.f32 %v1683, %v261
        %v1685 = vmul.f32 %v1683, %v262
        %v1686 = vadd.f32 %v1680, %v1684
        %v1687 = vadd.f32 %v1681, %v1685
        %v1688 = vpack.c.bf16 %v1687, %v1686
        %s1689 = sld [smem:[#allocation3 + $0x64]]
        %v1690 = vstv %s1689
        %v1691 = vmul.f32 %v1690, %v249
        %v1692 = vmul.f32 %v1690, %v250
        %s1693 = sld [smem:[#allocation3 + $0x65]]
        %v1694 = vstv %s1693
        %v1695 = vmul.f32 %v1694, %v253
        %v1696 = vmul.f32 %v1694, %v254
        %v1697 = vadd.f32 %v1691, %v1695
        %v1698 = vadd.f32 %v1692, %v1696
        %s1699 = sld [smem:[#allocation3 + $0x66]]
        %v1700 = vstv %s1699
        %v1701 = vmul.f32 %v1700, %v257
        %v1702 = vmul.f32 %v1700, %v258
        %v1703 = vadd.f32 %v1697, %v1701
        %v1704 = vadd.f32 %v1698, %v1702
        %s1705 = sld [smem:[#allocation3 + $0x67]]
        %v1706 = vstv %s1705
        %v1707 = vmul.f32 %v1706, %v261
        %v1708 = vmul.f32 %v1706, %v262
        %v1709 = vadd.f32 %v1703, %v1707
        %v1710 = vadd.f32 %v1704, %v1708
        %v1711 = vpack.c.bf16 %v1710, %v1709
        %v1713 = vsel %vm320, %v1711, 0
        %1715 = vmatpush.bf16.msra.mxu0 0
        %1716 = vmatpush.bf16.msra.mxu0 0
        %1717 = vmatpush.bf16.msra.mxu0 0
        %1718 = vmatpush.bf16.msra.mxu0 0
        %1719 = vmatpush.bf16.msra.mxu0 0
        %1720 = vmatpush.bf16.msra.mxu0 0
        %1721 = vmatpush.bf16.msra.mxu0 0
        %1722 = vmatpush.bf16.msra.mxu0 %v1372
        %1723 = vmatmul.bf16.gmra.mxu0 %v1713
        %v1724 = vpop.f32.mrf.mxu0
        %v1725 = vadd.f32 0.0, %v1724
        %v1726 = vpop.f32.mrf.mxu0
        %v1727 = vadd.f32 0.0, %v1726
        %1728 = vdwg.mxu0
        %v1730 = vsel %vm320, %v1688, 0
        %1732 = vmatpush.bf16.msra.mxu0 0
        %1733 = vmatpush.bf16.msra.mxu0 0
        %1734 = vmatpush.bf16.msra.mxu0 0
        %1735 = vmatpush.bf16.msra.mxu0 0
        %1736 = vmatpush.bf16.msra.mxu0 0
        %1737 = vmatpush.bf16.msra.mxu0 0
        %1738 = vmatpush.bf16.msra.mxu0 0
        %1739 = vmatpush.bf16.msra.mxu0 %v1395
        %1740 = vmatmul.bf16.gmra.mxu0 %v1730
        %v1741 = vpop.f32.mrf.mxu0
        %v1742 = vadd.f32 %v1725, %v1741
        %v1743 = vpop.f32.mrf.mxu0
        %v1744 = vadd.f32 %v1727, %v1743
        %1745 = vdwg.mxu0
        %s1746 = sld [smem:[#allocation3 + $0x68]]
        %v1747 = vstv %s1746
        %v1748 = vmul.f32 %v1747, %v249
        %v1749 = vmul.f32 %v1747, %v250
        %s1750 = sld [smem:[#allocation3 + $0x69]]
        %v1751 = vstv %s1750
        %v1752 = vmul.f32 %v1751, %v253
        %v1753 = vmul.f32 %v1751, %v254
        %v1754 = vadd.f32 %v1748, %v1752
        %v1755 = vadd.f32 %v1749, %v1753
        %s1756 = sld [smem:[#allocation3 + $0x6a]]
        %v1757 = vstv %s1756
        %v1758 = vmul.f32 %v1757, %v257
        %v1759 = vmul.f32 %v1757, %v258
        %v1760 = vadd.f32 %v1754, %v1758
        %v1761 = vadd.f32 %v1755, %v1759
        %s1762 = sld [smem:[#allocation3 + $0x6b]]
        %v1763 = vstv %s1762
        %v1764 = vmul.f32 %v1763, %v261
        %v1765 = vmul.f32 %v1763, %v262
        %v1766 = vadd.f32 %v1760, %v1764
        %v1767 = vadd.f32 %v1761, %v1765
        %v1768 = vpack.c.bf16 %v1767, %v1766
        %v1770 = vsel %vm320, %v1768, 0
        %1772 = vmatpush.bf16.msra.mxu0 0
        %1773 = vmatpush.bf16.msra.mxu0 0
        %1774 = vmatpush.bf16.msra.mxu0 0
        %1775 = vmatpush.bf16.msra.mxu0 0
        %1776 = vmatpush.bf16.msra.mxu0 0
        %1777 = vmatpush.bf16.msra.mxu0 0
        %1778 = vmatpush.bf16.msra.mxu0 0
        %1779 = vmatpush.bf16.msra.mxu0 %v1443
        %1780 = vmatmul.bf16.gmra.mxu0 %v1770
        %v1781 = vpop.f32.mrf.mxu0
        %v1782 = vadd.f32 0.0, %v1781
        %v1783 = vpop.f32.mrf.mxu0
        %v1784 = vadd.f32 0.0, %v1783
        %1785 = vdwg.mxu0
        %v1786 = vadd.f32 %v1742, %v1782
        %v1787 = vadd.f32 %v1744, %v1784
        %v1788 = vld [vmem:[%s737] sm:$0xf]
        %v1789 = vld [vmem:[%s737 + $0x4] sm:$0xf]
        %v1790 = vld [vmem:[%s737 + $0x8] sm:$0xf]
        %v1791 = vld [vmem:[%s737 + $0xc] sm:$0xf]
        %v1792 = vpack.c.bf16 %v1787, %v1786
        %v1797 = vunpack.c.l.b16 %v1788
        %v1798 = vunpack.c.l.b16 %v1789
        %v1799 = vunpack.c.l.b16 %v1790
        %v1800 = vunpack.c.l.b16 %v1791
        %v1801 = vpack.c.b16 %v1798, %v1797
        %v1802 = vpack.c.b16 %v1800, %v1799
        %v1804 = vsel %vm320, %v1801, 0
        %v1807 = vsel %vm320, %v1802, 0
        %1809 = vmatpush.bf16.msra.mxu0 0
        %1810 = vmatpush.bf16.msra.mxu0 0
        %1811 = vmatpush.bf16.msra.mxu0 0
        %1812 = vmatpush.bf16.msra.mxu0 0
        %1813 = vmatpush.bf16.msra.mxu0 0
        %1814 = vmatpush.bf16.msra.mxu0 0
        %1815 = vmatpush.bf16.msra.mxu0 0
        %1816 = vmatpush.bf16.msra.mxu0 %v1792
        %1817 = vmatmul.bf16.gmra.mxu0 %v1804
        %v1818 = vpop.f32.mrf.mxu0
        %v1819 = vadd.f32 0.0, %v1818
        %v1820 = vpop.f32.mrf.mxu0
        %v1821 = vadd.f32 0.0, %v1820
        %1822 = vmatmul.bf16.gmra.mxu0 %v1807
        %v1823 = vpop.f32.mrf.mxu0
        %v1824 = vadd.f32 0.0, %v1823
        %v1825 = vpop.f32.mrf.mxu0
        %v1826 = vadd.f32 0.0, %v1825
        %1827 = vdwg.mxu0
        %v1828 = vadd.f32 %v1657, %v1819
        %v1829 = vadd.f32 %v1659, %v1821
        %v1830 = vadd.f32 %v1662, %v1824
        %v1831 = vadd.f32 %v1664, %v1826
        %s1832 = sld [smem:[#allocation4 + $0x2]]
        %v1833 = vstv %s1832
        %v1834 = vadd.f32 %v1828, %v1833
        %v1835 = vadd.f32 %v1829, %v1833
        %v1836 = vadd.f32 %v1830, %v1833
        %v1837 = vadd.f32 %v1831, %v1833
        %s1838 = scalar_lea.vmem %s234, 64 [#allocation10]
        %1839 = vst.msk [vmem:[%s1838] sm:$0xff] %vm788, %v1834
        %1840 = vst.msk [vmem:[%s1838 + $0x8] sm:$0xff] %vm788, %v1835
        %1841 = vst.msk [vmem:[%s1838 + $0x10] sm:$0xff] %vm788, %v1836
        %1842 = vst.msk [vmem:[%s1838 + $0x18] sm:$0xff] %vm788, %v1837
        %s1843 = sld [smem:[#allocation3 + $0x6c]]
        %v1844 = vstv %s1843
        %v1845 = vmul.f32 %v1844, %v249
        %v1846 = vmul.f32 %v1844, %v250
        %s1847 = sld [smem:[#allocation3 + $0x6d]]
        %v1848 = vstv %s1847
        %v1849 = vmul.f32 %v1848, %v253
        %v1850 = vmul.f32 %v1848, %v254
        %v1851 = vadd.f32 %v1845, %v1849
        %v1852 = vadd.f32 %v1846, %v1850
        %s1853 = sld [smem:[#allocation3 + $0x6e]]
        %v1854 = vstv %s1853
        %v1855 = vmul.f32 %v1854, %v257
        %v1856 = vmul.f32 %v1854, %v258
        %v1857 = vadd.f32 %v1851, %v1855
        %v1858 = vadd.f32 %v1852, %v1856
        %s1859 = sld [smem:[#allocation3 + $0x6f]]
        %v1860 = vstv %s1859
        %v1861 = vmul.f32 %v1860, %v261
        %v1862 = vmul.f32 %v1860, %v262
        %v1863 = vadd.f32 %v1857, %v1861
        %v1864 = vadd.f32 %v1858, %v1862
        %v1865 = vpack.c.bf16 %v1864, %v1863
        %v1866 = vld [vmem:[#allocation8] sm:$0xf]
        %v1867 = vld [vmem:[#allocation8 + $0x4] sm:$0xf]
        %s1868 = sld [smem:[#allocation3 + $0x70]]
        %v1869 = vstv %s1868
        %v1870 = vmul.f32 %v1869, %v249
        %v1871 = vmul.f32 %v1869, %v250
        %s1872 = sld [smem:[#allocation3 + $0x71]]
        %v1873 = vstv %s1872
        %v1874 = vmul.f32 %v1873, %v253
        %v1875 = vmul.f32 %v1873, %v254
        %v1876 = vadd.f32 %v1870, %v1874
        %v1877 = vadd.f32 %v1871, %v1875
        %s1878 = sld [smem:[#allocation3 + $0x72]]
        %v1879 = vstv %s1878
        %v1880 = vmul.f32 %v1879, %v257
        %v1881 = vmul.f32 %v1879, %v258
        %v1882 = vadd.f32 %v1876, %v1880
        %v1883 = vadd.f32 %v1877, %v1881
        %s1884 = sld [smem:[#allocation3 + $0x73]]
        %v1885 = vstv %s1884
        %v1886 = vmul.f32 %v1885, %v261
        %v1887 = vmul.f32 %v1885, %v262
        %v1888 = vadd.f32 %v1882, %v1886
        %v1889 = vadd.f32 %v1883, %v1887
        %v1890 = vpack.c.bf16 %v1889, %v1888
        %v1891 = vld [vmem:[%s311] sm:$0xf]
        %v1892 = vld [vmem:[%s311 + $0x4] sm:$0xf]
        %v1895 = vunpack.c.l.b16 %v1891
        %v1896 = vunpack.c.l.b16 %v1892
        %v1897 = vpack.c.b16 %v1896, %v1895
        %v1900 = vsel %vm320, %v1890, 0
        %1902 = vmatpush.bf16.msra.mxu0 0
        %1903 = vmatpush.bf16.msra.mxu0 0
        %1904 = vmatpush.bf16.msra.mxu0 0
        %1905 = vmatpush.bf16.msra.mxu0 0
        %1906 = vmatpush.bf16.msra.mxu0 0
        %1907 = vmatpush.bf16.msra.mxu0 0
        %1908 = vmatpush.bf16.msra.mxu0 0
        %1909 = vmatpush.bf16.msra.mxu0 %v1897
        %1910 = vmatmul.bf16.gmra.mxu0 %v1900
        %v1911 = vpop.f32.mrf.mxu0
        %v1912 = vadd.f32 0.0, %v1911
        %v1913 = vpop.f32.mrf.mxu0
        %v1914 = vadd.f32 0.0, %v1913
        %1915 = vdwg.mxu0
        %v1918 = vunpack.c.l.b16 %v1866
        %v1919 = vunpack.c.l.b16 %v1867
        %v1920 = vpack.c.b16 %v1919, %v1918
        %v1923 = vsel %vm320, %v1865, 0
        %1925 = vmatpush.bf16.msra.mxu0 0
        %1926 = vmatpush.bf16.msra.mxu0 0
        %1927 = vmatpush.bf16.msra.mxu0 0
        %1928 = vmatpush.bf16.msra.mxu0 0
        %1929 = vmatpush.bf16.msra.mxu0 0
        %1930 = vmatpush.bf16.msra.mxu0 0
        %1931 = vmatpush.bf16.msra.mxu0 0
        %1932 = vmatpush.bf16.msra.mxu0 %v1920
        %1933 = vmatmul.bf16.gmra.mxu0 %v1923
        %v1934 = vpop.f32.mrf.mxu0
        %v1935 = vadd.f32 %v1912, %v1934
        %v1936 = vpop.f32.mrf.mxu0
        %v1937 = vadd.f32 %v1914, %v1936
        %1938 = vdwg.mxu0
        %s1939 = sld [smem:[#allocation3 + $0x74]]
        %v1940 = vstv %s1939
        %v1941 = vmul.f32 %v1940, %v249
        %v1942 = vmul.f32 %v1940, %v250
        %s1943 = sld [smem:[#allocation3 + $0x75]]
        %v1944 = vstv %s1943
        %v1945 = vmul.f32 %v1944, %v253
        %v1946 = vmul.f32 %v1944, %v254
        %v1947 = vadd.f32 %v1941, %v1945
        %v1948 = vadd.f32 %v1942, %v1946
        %s1949 = sld [smem:[#allocation3 + $0x76]]
        %v1950 = vstv %s1949
        %v1951 = vmul.f32 %v1950, %v257
        %v1952 = vmul.f32 %v1950, %v258
        %v1953 = vadd.f32 %v1947, %v1951
        %v1954 = vadd.f32 %v1948, %v1952
        %s1955 = sld [smem:[#allocation3 + $0x77]]
        %v1956 = vstv %s1955
        %v1957 = vmul.f32 %v1956, %v261
        %v1958 = vmul.f32 %v1956, %v262
        %v1959 = vadd.f32 %v1953, %v1957
        %v1960 = vadd.f32 %v1954, %v1958
        %v1961 = vpack.c.bf16 %v1960, %v1959
        %v1962 = vld [vmem:[%s384] sm:$0xf]
        %v1963 = vld [vmem:[%s384 + $0x4] sm:$0xf]
        %v1966 = vunpack.c.l.b16 %v1962
        %v1967 = vunpack.c.l.b16 %v1963
        %v1968 = vpack.c.b16 %v1967, %v1966
        %v1971 = vsel %vm320, %v1961, 0
        %1973 = vmatpush.bf16.msra.mxu0 0
        %1974 = vmatpush.bf16.msra.mxu0 0
        %1975 = vmatpush.bf16.msra.mxu0 0
        %1976 = vmatpush.bf16.msra.mxu0 0
        %1977 = vmatpush.bf16.msra.mxu0 0
        %1978 = vmatpush.bf16.msra.mxu0 0
        %1979 = vmatpush.bf16.msra.mxu0 0
        %1980 = vmatpush.bf16.msra.mxu0 %v1968
        %1981 = vmatmul.bf16.gmra.mxu0 %v1971
        %v1982 = vpop.f32.mrf.mxu0
        %v1983 = vadd.f32 0.0, %v1982
        %v1984 = vpop.f32.mrf.mxu0
        %v1985 = vadd.f32 0.0, %v1984
        %1986 = vdwg.mxu0
        %v1987 = vadd.f32 %v1935, %v1983
        %v1988 = vadd.f32 %v1937, %v1985
        %v1989 = vld [vmem:[#allocation5] sm:$0xf]
        %v1990 = vld [vmem:[#allocation5 + $0x4] sm:$0xf]
        %v1991 = vld [vmem:[#allocation5 + $0x8] sm:$0xf]
        %v1992 = vld [vmem:[#allocation5 + $0xc] sm:$0xf]
        %v1993 = vpack.c.bf16 %v1988, %v1987
        %s1994 = sld [smem:[#allocation3 + $0x78]]
        %v1995 = vstv %s1994
        %v1996 = vmul.f32 %v1995, %v249
        %v1997 = vmul.f32 %v1995, %v250
        %s1998 = sld [smem:[#allocation3 + $0x79]]
        %v1999 = vstv %s1998
        %v2000 = vmul.f32 %v1999, %v253
        %v2001 = vmul.f32 %v1999, %v254
        %v2002 = vadd.f32 %v1996, %v2000
        %v2003 = vadd.f32 %v1997, %v2001
        %s2004 = sld [smem:[#allocation3 + $0x7a]]
        %v2005 = vstv %s2004
        %v2006 = vmul.f32 %v2005, %v257
        %v2007 = vmul.f32 %v2005, %v258
        %v2008 = vadd.f32 %v2002, %v2006
        %v2009 = vadd.f32 %v2003, %v2007
        %s2010 = sld [smem:[#allocation3 + $0x7b]]
        %v2011 = vstv %s2010
        %v2012 = vmul.f32 %v2011, %v261
        %v2013 = vmul.f32 %v2011, %v262
        %v2014 = vadd.f32 %v2008, %v2012
        %v2015 = vadd.f32 %v2009, %v2013
        %v2016 = vpack.c.bf16 %v2015, %v2014
        %s2017 = sld [smem:[#allocation3 + $0x7c]]
        %v2018 = vstv %s2017
        %v2019 = vmul.f32 %v2018, %v249
        %v2020 = vmul.f32 %v2018, %v250
        %s2021 = sld [smem:[#allocation3 + $0x7d]]
        %v2022 = vstv %s2021
        %v2023 = vmul.f32 %v2022, %v253
        %v2024 = vmul.f32 %v2022, %v254
        %v2025 = vadd.f32 %v2019, %v2023
        %v2026 = vadd.f32 %v2020, %v2024
        %s2027 = sld [smem:[#allocation3 + $0x7e]]
        %v2028 = vstv %s2027
        %v2029 = vmul.f32 %v2028, %v257
        %v2030 = vmul.f32 %v2028, %v258
        %v2031 = vadd.f32 %v2025, %v2029
        %v2032 = vadd.f32 %v2026, %v2030
        %s2033 = sld [smem:[#allocation3 + $0x7f]]
        %v2034 = vstv %s2033
        %v2035 = vmul.f32 %v2034, %v261
        %v2036 = vmul.f32 %v2034, %v262
        %v2037 = vadd.f32 %v2031, %v2035
        %v2038 = vadd.f32 %v2032, %v2036
        %v2039 = vpack.c.bf16 %v2038, %v2037
        %v2041 = vsel %vm320, %v2039, 0
        %2043 = vmatpush.bf16.msra.mxu0 0
        %2044 = vmatpush.bf16.msra.mxu0 0
        %2045 = vmatpush.bf16.msra.mxu0 0
        %2046 = vmatpush.bf16.msra.mxu0 0
        %2047 = vmatpush.bf16.msra.mxu0 0
        %2048 = vmatpush.bf16.msra.mxu0 0
        %2049 = vmatpush.bf16.msra.mxu0 0
        %2050 = vmatpush.bf16.msra.mxu0 %v1897
        %2051 = vmatmul.bf16.gmra.mxu0 %v2041
        %v2052 = vpop.f32.mrf.mxu0
        %v2053 = vadd.f32 0.0, %v2052
        %v2054 = vpop.f32.mrf.mxu0
        %v2055 = vadd.f32 0.0, %v2054
        %2056 = vdwg.mxu0
        %v2058 = vsel %vm320, %v2016, 0
        %2060 = vmatpush.bf16.msra.mxu0 0
        %2061 = vmatpush.bf16.msra.mxu0 0
        %2062 = vmatpush.bf16.msra.mxu0 0
        %2063 = vmatpush.bf16.msra.mxu0 0
        %2064 = vmatpush.bf16.msra.mxu0 0
        %2065 = vmatpush.bf16.msra.mxu0 0
        %2066 = vmatpush.bf16.msra.mxu0 0
        %2067 = vmatpush.bf16.msra.mxu0 %v1920
        %2068 = vmatmul.bf16.gmra.mxu0 %v2058
        %v2069 = vpop.f32.mrf.mxu0
        %v2070 = vadd.f32 %v2053, %v2069
        %v2071 = vpop.f32.mrf.mxu0
        %v2072 = vadd.f32 %v2055, %v2071
        %2073 = vdwg.mxu0
        %s2074 = sld [smem:[#allocation3 + $0x80]]
        %v2075 = vstv %s2074
        %v2076 = vmul.f32 %v2075, %v249
        %v2077 = vmul.f32 %v2075, %v250
        %s2078 = sld [smem:[#allocation3 + $0x81]]
        %v2079 = vstv %s2078
        %v2080 = vmul.f32 %v2079, %v253
        %v2081 = vmul.f32 %v2079, %v254
        %v2082 = vadd.f32 %v2076, %v2080
        %v2083 = vadd.f32 %v2077, %v2081
        %s2084 = sld [smem:[#allocation3 + $0x82]]
        %v2085 = vstv %s2084
        %v2086 = vmul.f32 %v2085, %v257
        %v2087 = vmul.f32 %v2085, %v258
        %v2088 = vadd.f32 %v2082, %v2086
        %v2089 = vadd.f32 %v2083, %v2087
        %s2090 = sld [smem:[#allocation3 + $0x83]]
        %v2091 = vstv %s2090
        %v2092 = vmul.f32 %v2091, %v261
        %v2093 = vmul.f32 %v2091, %v262
        %v2094 = vadd.f32 %v2088, %v2092
        %v2095 = vadd.f32 %v2089, %v2093
        %v2096 = vpack.c.bf16 %v2095, %v2094
        %v2098 = vsel %vm320, %v2096, 0
        %2100 = vmatpush.bf16.msra.mxu0 0
        %2101 = vmatpush.bf16.msra.mxu0 0
        %2102 = vmatpush.bf16.msra.mxu0 0
        %2103 = vmatpush.bf16.msra.mxu0 0
        %2104 = vmatpush.bf16.msra.mxu0 0
        %2105 = vmatpush.bf16.msra.mxu0 0
        %2106 = vmatpush.bf16.msra.mxu0 0
        %2107 = vmatpush.bf16.msra.mxu0 %v1968
        %2108 = vmatmul.bf16.gmra.mxu0 %v2098
        %v2109 = vpop.f32.mrf.mxu0
        %v2110 = vadd.f32 0.0, %v2109
        %v2111 = vpop.f32.mrf.mxu0
        %v2112 = vadd.f32 0.0, %v2111
        %2113 = vdwg.mxu0
        %v2114 = vadd.f32 %v2070, %v2110
        %v2115 = vadd.f32 %v2072, %v2112
        %v2116 = vld [vmem:[%s539] sm:$0xf]
        %v2117 = vld [vmem:[%s539 + $0x4] sm:$0xf]
        %v2118 = vld [vmem:[%s539 + $0x8] sm:$0xf]
        %v2119 = vld [vmem:[%s539 + $0xc] sm:$0xf]
        %v2120 = vpack.c.bf16 %v2115, %v2114
        %v2125 = vunpack.c.l.b16 %v2116
        %v2126 = vunpack.c.l.b16 %v2117
        %v2127 = vunpack.c.l.b16 %v2118
        %v2128 = vunpack.c.l.b16 %v2119
        %v2129 = vpack.c.b16 %v2126, %v2125
        %v2130 = vpack.c.b16 %v2128, %v2127
        %v2132 = vsel %vm320, %v2129, 0
        %v2135 = vsel %vm320, %v2130, 0
        %2137 = vmatpush.bf16.msra.mxu0 0
        %2138 = vmatpush.bf16.msra.mxu0 0
        %2139 = vmatpush.bf16.msra.mxu0 0
        %2140 = vmatpush.bf16.msra.mxu0 0
        %2141 = vmatpush.bf16.msra.mxu0 0
        %2142 = vmatpush.bf16.msra.mxu0 0
        %2143 = vmatpush.bf16.msra.mxu0 0
        %2144 = vmatpush.bf16.msra.mxu0 %v2120
        %2145 = vmatmul.bf16.gmra.mxu0 %v2132
        %v2146 = vpop.f32.mrf.mxu0
        %v2147 = vadd.f32 0.0, %v2146
        %v2148 = vpop.f32.mrf.mxu0
        %v2149 = vadd.f32 0.0, %v2148
        %2150 = vmatmul.bf16.gmra.mxu0 %v2135
        %v2151 = vpop.f32.mrf.mxu0
        %v2152 = vadd.f32 0.0, %v2151
        %v2153 = vpop.f32.mrf.mxu0
        %v2154 = vadd.f32 0.0, %v2153
        %2155 = vdwg.mxu0
        %v2160 = vunpack.c.l.b16 %v1989
        %v2161 = vunpack.c.l.b16 %v1990
        %v2162 = vunpack.c.l.b16 %v1991
        %v2163 = vunpack.c.l.b16 %v1992
        %v2164 = vpack.c.b16 %v2161, %v2160
        %v2165 = vpack.c.b16 %v2163, %v2162
        %v2167 = vsel %vm320, %v2164, 0
        %v2170 = vsel %vm320, %v2165, 0
        %2172 = vmatpush.bf16.msra.mxu0 0
        %2173 = vmatpush.bf16.msra.mxu0 0
        %2174 = vmatpush.bf16.msra.mxu0 0
        %2175 = vmatpush.bf16.msra.mxu0 0
        %2176 = vmatpush.bf16.msra.mxu0 0
        %2177 = vmatpush.bf16.msra.mxu0 0
        %2178 = vmatpush.bf16.msra.mxu0 0
        %2179 = vmatpush.bf16.msra.mxu0 %v1993
        %2180 = vmatmul.bf16.gmra.mxu0 %v2167
        %v2181 = vpop.f32.mrf.mxu0
        %v2182 = vadd.f32 %v2147, %v2181
        %v2183 = vpop.f32.mrf.mxu0
        %v2184 = vadd.f32 %v2149, %v2183
        %2185 = vmatmul.bf16.gmra.mxu0 %v2170
        %v2186 = vpop.f32.mrf.mxu0
        %v2187 = vadd.f32 %v2152, %v2186
        %v2188 = vpop.f32.mrf.mxu0
        %v2189 = vadd.f32 %v2154, %v2188
        %2190 = vdwg.mxu0
        %s2191 = sld [smem:[#allocation3 + $0x84]]
        %v2192 = vstv %s2191
        %v2193 = vmul.f32 %v2192, %v249
        %v2194 = vmul.f32 %v2192, %v250
        %s2195 = sld [smem:[#allocation3 + $0x85]]
        %v2196 = vstv %s2195
        %v2197 = vmul.f32 %v2196, %v253
        %v2198 = vmul.f32 %v2196, %v254
        %v2199 = vadd.f32 %v2193, %v2197
        %v2200 = vadd.f32 %v2194, %v2198
        %s2201 = sld [smem:[#allocation3 + $0x86]]
        %v2202 = vstv %s2201
        %v2203 = vmul.f32 %v2202, %v257
        %v2204 = vmul.f32 %v2202, %v258
        %v2205 = vadd.f32 %v2199, %v2203
        %v2206 = vadd.f32 %v2200, %v2204
        %s2207 = sld [smem:[#allocation3 + $0x87]]
        %v2208 = vstv %s2207
        %v2209 = vmul.f32 %v2208, %v261
        %v2210 = vmul.f32 %v2208, %v262
        %v2211 = vadd.f32 %v2205, %v2209
        %v2212 = vadd.f32 %v2206, %v2210
        %v2213 = vpack.c.bf16 %v2212, %v2211
        %s2214 = sld [smem:[#allocation3 + $0x88]]
        %v2215 = vstv %s2214
        %v2216 = vmul.f32 %v2215, %v249
        %v2217 = vmul.f32 %v2215, %v250
        %s2218 = sld [smem:[#allocation3 + $0x89]]
        %v2219 = vstv %s2218
        %v2220 = vmul.f32 %v2219, %v253
        %v2221 = vmul.f32 %v2219, %v254
        %v2222 = vadd.f32 %v2216, %v2220
        %v2223 = vadd.f32 %v2217, %v2221
        %s2224 = sld [smem:[#allocation3 + $0x8a]]
        %v2225 = vstv %s2224
        %v2226 = vmul.f32 %v2225, %v257
        %v2227 = vmul.f32 %v2225, %v258
        %v2228 = vadd.f32 %v2222, %v2226
        %v2229 = vadd.f32 %v2223, %v2227
        %s2230 = sld [smem:[#allocation3 + $0x8b]]
        %v2231 = vstv %s2230
        %v2232 = vmul.f32 %v2231, %v261
        %v2233 = vmul.f32 %v2231, %v262
        %v2234 = vadd.f32 %v2228, %v2232
        %v2235 = vadd.f32 %v2229, %v2233
        %v2236 = vpack.c.bf16 %v2235, %v2234
        %v2238 = vsel %vm320, %v2236, 0
        %2240 = vmatpush.bf16.msra.mxu0 0
        %2241 = vmatpush.bf16.msra.mxu0 0
        %2242 = vmatpush.bf16.msra.mxu0 0
        %2243 = vmatpush.bf16.msra.mxu0 0
        %2244 = vmatpush.bf16.msra.mxu0 0
        %2245 = vmatpush.bf16.msra.mxu0 0
        %2246 = vmatpush.bf16.msra.mxu0 0
        %2247 = vmatpush.bf16.msra.mxu0 %v1897
        %2248 = vmatmul.bf16.gmra.mxu0 %v2238
        %v2249 = vpop.f32.mrf.mxu0
        %v2250 = vadd.f32 0.0, %v2249
        %v2251 = vpop.f32.mrf.mxu0
        %v2252 = vadd.f32 0.0, %v2251
        %2253 = vdwg.mxu0
        %v2255 = vsel %vm320, %v2213, 0
        %2257 = vmatpush.bf16.msra.mxu0 0
        %2258 = vmatpush.bf16.msra.mxu0 0
        %2259 = vmatpush.bf16.msra.mxu0 0
        %2260 = vmatpush.bf16.msra.mxu0 0
        %2261 = vmatpush.bf16.msra.mxu0 0
        %2262 = vmatpush.bf16.msra.mxu0 0
        %2263 = vmatpush.bf16.msra.mxu0 0
        %2264 = vmatpush.bf16.msra.mxu0 %v1920
        %2265 = vmatmul.bf16.gmra.mxu0 %v2255
        %v2266 = vpop.f32.mrf.mxu0
        %v2267 = vadd.f32 %v2250, %v2266
        %v2268 = vpop.f32.mrf.mxu0
        %v2269 = vadd.f32 %v2252, %v2268
        %2270 = vdwg.mxu0
        %s2271 = sld [smem:[#allocation3 + $0x8c]]
        %v2272 = vstv %s2271
        %v2273 = vmul.f32 %v2272, %v249
        %v2274 = vmul.f32 %v2272, %v250
        %s2275 = sld [smem:[#allocation3 + $0x8d]]
        %v2276 = vstv %s2275
        %v2277 = vmul.f32 %v2276, %v253
        %v2278 = vmul.f32 %v2276, %v254
        %v2279 = vadd.f32 %v2273, %v2277
        %v2280 = vadd.f32 %v2274, %v2278
        %s2281 = sld [smem:[#allocation3 + $0x8e]]
        %v2282 = vstv %s2281
        %v2283 = vmul.f32 %v2282, %v257
        %v2284 = vmul.f32 %v2282, %v258
        %v2285 = vadd.f32 %v2279, %v2283
        %v2286 = vadd.f32 %v2280, %v2284
        %s2287 = sld [smem:[#allocation3 + $0x8f]]
        %v2288 = vstv %s2287
        %v2289 = vmul.f32 %v2288, %v261
        %v2290 = vmul.f32 %v2288, %v262
        %v2291 = vadd.f32 %v2285, %v2289
        %v2292 = vadd.f32 %v2286, %v2290
        %v2293 = vpack.c.bf16 %v2292, %v2291
        %v2295 = vsel %vm320, %v2293, 0
        %2297 = vmatpush.bf16.msra.mxu0 0
        %2298 = vmatpush.bf16.msra.mxu0 0
        %2299 = vmatpush.bf16.msra.mxu0 0
        %2300 = vmatpush.bf16.msra.mxu0 0
        %2301 = vmatpush.bf16.msra.mxu0 0
        %2302 = vmatpush.bf16.msra.mxu0 0
        %2303 = vmatpush.bf16.msra.mxu0 0
        %2304 = vmatpush.bf16.msra.mxu0 %v1968
        %2305 = vmatmul.bf16.gmra.mxu0 %v2295
        %v2306 = vpop.f32.mrf.mxu0
        %v2307 = vadd.f32 0.0, %v2306
        %v2308 = vpop.f32.mrf.mxu0
        %v2309 = vadd.f32 0.0, %v2308
        %2310 = vdwg.mxu0
        %v2311 = vadd.f32 %v2267, %v2307
        %v2312 = vadd.f32 %v2269, %v2309
        %v2313 = vld [vmem:[%s737] sm:$0xf]
        %v2314 = vld [vmem:[%s737 + $0x4] sm:$0xf]
        %v2315 = vld [vmem:[%s737 + $0x8] sm:$0xf]
        %v2316 = vld [vmem:[%s737 + $0xc] sm:$0xf]
        %v2317 = vpack.c.bf16 %v2312, %v2311
        %v2322 = vunpack.c.l.b16 %v2313
        %v2323 = vunpack.c.l.b16 %v2314
        %v2324 = vunpack.c.l.b16 %v2315
        %v2325 = vunpack.c.l.b16 %v2316
        %v2326 = vpack.c.b16 %v2323, %v2322
        %v2327 = vpack.c.b16 %v2325, %v2324
        %v2329 = vsel %vm320, %v2326, 0
        %v2332 = vsel %vm320, %v2327, 0
        %2334 = vmatpush.bf16.msra.mxu0 0
        %2335 = vmatpush.bf16.msra.mxu0 0
        %2336 = vmatpush.bf16.msra.mxu0 0
        %2337 = vmatpush.bf16.msra.mxu0 0
        %2338 = vmatpush.bf16.msra.mxu0 0
        %2339 = vmatpush.bf16.msra.mxu0 0
        %2340 = vmatpush.bf16.msra.mxu0 0
        %2341 = vmatpush.bf16.msra.mxu0 %v2317
        %2342 = vmatmul.bf16.gmra.mxu0 %v2329
        %v2343 = vpop.f32.mrf.mxu0
        %v2344 = vadd.f32 0.0, %v2343
        %v2345 = vpop.f32.mrf.mxu0
        %v2346 = vadd.f32 0.0, %v2345
        %2347 = vmatmul.bf16.gmra.mxu0 %v2332
        %v2348 = vpop.f32.mrf.mxu0
        %v2349 = vadd.f32 0.0, %v2348
        %v2350 = vpop.f32.mrf.mxu0
        %v2351 = vadd.f32 0.0, %v2350
        %2352 = vdwg.mxu0
        %v2353 = vadd.f32 %v2182, %v2344
        %v2354 = vadd.f32 %v2184, %v2346
        %v2355 = vadd.f32 %v2187, %v2349
        %v2356 = vadd.f32 %v2189, %v2351
        %s2357 = sld [smem:[#allocation4 + $0x3]]
        %v2358 = vstv %s2357
        %v2359 = vadd.f32 %v2353, %v2358
        %v2360 = vadd.f32 %v2354, %v2358
        %v2361 = vadd.f32 %v2355, %v2358
        %v2362 = vadd.f32 %v2356, %v2358
        %s2363 = scalar_lea.vmem %s234, 96 [#allocation10]
        %2364 = vst.msk [vmem:[%s2363] sm:$0xff] %vm788, %v2359
        %2365 = vst.msk [vmem:[%s2363 + $0x8] sm:$0xff] %vm788, %v2360
        %2366 = vst.msk [vmem:[%s2363 + $0x10] sm:$0xff] %vm788, %v2361
        %2367 = vst.msk [vmem:[%s2363 + $0x18] sm:$0xff] %vm788, %v2362
        %s2368 = sand.u32 %s129, 1
        %s2369 = scalar_lea.sflag [#allocation7], %s2368
        %s2370 = sand.u32 %s129, 1
        %s2371 = smul.addr %s2370, 128
        %s2372 = scalar_lea.vmem [#allocation10], %s2371
        // Predicated region
        $region41: #{upsample_forward.1} parent=31 // pred_check
          %p2373 = pneg %p139
        $region42: #{upsample_forward.1} parent=31 // pred_check_branch
          %2375 = sbr.rel (%p2373) target = $region44
        $region43: #{upsample_forward.1} parent=31 // pred_region
          %s2376 = smul.u32 4, %s39
          %2378 = vsyncadd %s2369, 0
          %s2379 = smul.addr %s38, 16
          %s2380 = sadd.s32 %s2376, %s2379
          %s2381 = smul.addr %s2380, 8
          %s2382 = scalar_lea.hbm %s5, %s2381
          %s2383 = sshll.u32 %s2372, 4
          %s2384 = int_to_ptr.vmem [resolvable:$true] %s2383
          %s2385 = sshll.u32 %s2382, 4
          %s2386 = int_to_ptr.hbm [resolvable:$true] %s2385
          %2391 = dma.vmem_to_hbm [thread:$0]  %s2384, 2048, %s2386, %s2369, 128, 128, 8
        $region44: #{upsample_forward.1} parent=31 // pred_fallthru
          _
      $region32: #{upsample_forward.1} parent=5 // pred_fallthru
        _
      %p2392 = scmp.le.s32.totalorder 2, %s29
      // Predicated region
      $region45: #{upsample_forward.1} parent=5 // pred_check
        %p2393 = pneg %p2392
      $region46: #{upsample_forward.1} parent=5 // pred_check_branch
        %2395 = sbr.rel (%p2393) target = $region48
      $region47: #{upsample_forward.1} parent=5 // pred_region
        %s2396 = ssub.s32 %s29, 2
        // Predicated region
        $region49: #{upsample_forward.1} parent=47 // pred_check
          %p2397 = pneg %p145
        $region50: #{upsample_forward.1} parent=47 // pred_check_branch
          %2399 = sbr.rel (%p2397) target = $region52
        $region51: #{upsample_forward.1} parent=47 // pred_region
          %s2400 = sand.u32 %s130, 1
          %s2401 = scalar_lea.sflag [#allocation7], %s2400
          %s2402 = sand.u32 %s130, 1
          %s2403 = smul.addr %s2402, 128
          %s2404 = scalar_lea.vmem [#allocation10], %s2403
          %2406 = dma.done %s2401, 2048
        $region52: #{upsample_forward.1} parent=47 // pred_fallthru
          _
      $region48: #{upsample_forward.1} parent=5 // pred_fallthru
        _
    $region6: #{upsample_forward.1} parent=1 // loop_footer
      %s33 = sadd.s32 1, %s29
    $region7: #{upsample_forward.1} parent=1 // loop_footer_branch
      %28 = sbr.rel target = $region3
    $region8: #{upsample_forward.1} parent=1 // loop_exit
      _
    %2407 = vsyncpa [#allocation6], 1
    %s2408 = scalar_lea.sflag [#allocation6], 1
    %2409 = vsyncpa %s2408, 1
    %2410 = vsyncpa [#allocation9], 1
    %2411 = vsyncpa [#allocation7], 1
    %s2412 = scalar_lea.sflag [#allocation7], 1
    %2413 = vsyncpa %s2412, 1

</llo_original>
